<compile_context>
chip_gen: v7x
topology: tpu7x:2x2x1
jax: 0.10.0
libtpu: 0.0.40
codegen_flags: <defaults>
</compile_context>

<pallas_src>
import jax
import jax.numpy as jnp
import numpy as np
from jax.experimental import pallas as pl
from jax.experimental.pallas import tpu as pltpu

INPUT_SIZE = 5
HIDDEN = 50      # real hidden size (matches the PyTorch module)
HP = 128         # lane-padded hidden size: one full 128-lane vreg block per gate


def lstm_kernel(x_ref, wih0_ref, b0_ref, wbig_ref, b1_ref, wfc_ref, bfc_ref,
                out_ref, xproj_ref, h01_ref):
    """Skewed 2-layer LSTM recurrence + final Linear, fully inside one kernel.

    x_ref    : (B, T, F)       batch-first input tile
    wih0_ref : (F, 4*HP)  f32  layer-0 input->gates weight, gate-block lane-padded
    b0_ref   : (1, 4*HP)  f32  layer-0 combined bias (b_ih + b_hh), lane-padded
    wbig_ref : (2*HP, 8*HP) bf16 skewed block weight:
                 cols [0:4HP]   = [whh0 ; 0]      (layer-0 recurrent gates, step t+1)
                 cols [4HP:8HP] = [wih1 ; whh1]   (layer-1 gates, step t)
    b1_ref   : (1, 4*HP)  f32  layer-1 combined bias
    wfc_ref  : (1, HP)    f32  fc weight row (padded lanes zero)
    bfc_ref  : (1, 1)     f32  fc bias
    out_ref  : (B, 1)          prediction
    xproj_ref: (T*B, 4*HP) f32 VMEM scratch: hoisted layer-0 input projection
    h01_ref  : (B, 2*HP)  f32  VMEM scratch: lanes [0:HP]=h0, [HP:2HP]=h1
    Gate order follows PyTorch: [i, f, g, o], one 128-lane block per gate.
    Padded lanes stay inert because h/c start at zero INSIDE the kernel and all
    padded weight rows/cols/biases are exactly zero (do not carry state in).
    """
    B, T, F = x_ref.shape
    HP4 = b0_ref.shape[1]
    Hp = HP4 // 4

    # ---- prologue (off the recurrent critical path) -------------------------
    xb = x_ref[...]                                                   # (B, T, F)
    # One-time time-major restack of the tiny (B, T, F) input; negligible
    # against the recurrent chain, and known-clean to lower.
    x_tm = jnp.concatenate([xb[:, t, :] for t in range(T)], axis=0)   # (T*B, F)
    # Hoisted layer-0 input projection + bias for ALL time steps in one matmul,
    # parked in VMEM scratch so it never bloats vreg live ranges in the loop.
    xproj_ref[...] = (jnp.dot(x_tm, wih0_ref[...],
                              preferred_element_type=jnp.float32)
                      + b0_ref[...])                                  # (T*B, 4*HP)

    wbig = wbig_ref[...]                          # (2HP, 8HP) bf16, VMEM-resident
    # Hoisted bias broadcast (JAX does not CSE broadcast_in_dim in the loop).
    b1b = jnp.broadcast_to(b1_ref[...], (B, HP4))

    def gates_to_hc(gates, c):
        # Gate blocks are 128-lane aligned -> free vreg selects, no XLU relayout.
        # All nonlinearity / cell math in f32 (v5e has no bf16 VPU/EUP).
        i = jax.nn.sigmoid(gates[:, 0 * Hp:1 * Hp])
        f = jax.nn.sigmoid(gates[:, 1 * Hp:2 * Hp])
        g = jnp.tanh(gates[:, 2 * Hp:3 * Hp])
        o = jax.nn.sigmoid(gates[:, 3 * Hp:4 * Hp])
        c_new = f * c + i * g
        h_new = o * jnp.tanh(c_new)
        return h_new, c_new

    zeros = jnp.zeros((B, Hp), jnp.float32)

    # ---- t = 0 special case: h0(-1)=h1(-1)=0 -> no recurrent dot needed -----
    h0, c0 = gates_to_hc(xproj_ref[0:B, :], zeros)
    c1 = zeros
    h1 = zeros
    h01_ref[:, :Hp] = h0                      # h0(0)
    h01_ref[:, Hp:] = zeros                   # h1(-1) = 0

    # ---- skewed recurrence: one fused MXU dot per step -----------------------
    # Step t computes layer-1(t) and layer-0(t+1) from the same matmul result.
    for t in range(T):
        lhs = h01_ref[...].astype(jnp.bfloat16)              # (B, 2HP) bf16
        if t < T - 1:
            big = jnp.dot(lhs, wbig,
                          preferred_element_type=jnp.float32)  # (B, 8HP) f32
            g1_pre = big[:, 4 * Hp:]
        else:
            # Last step: only layer-1 gates are needed -> narrower dot.
            big = None
            g1_pre = jnp.dot(lhs, wbig[:, 4 * Hp:],
                             preferred_element_type=jnp.float32)
        # Layer 1, step t.
        h1, c1 = gates_to_hc(g1_pre + b1b, c1)
        if t < T - 1:
            h01_ref[:, Hp:] = h1
            # Layer 0, step t+1: recurrent term comes from the same fused dot.
            g0 = xproj_ref[(t + 1) * B:(t + 2) * B, :] + big[:, :4 * Hp]
            h0, c0 = gates_to_hc(g0, c0)
            h01_ref[:, :Hp] = h0

    # fc(out[:, -1, :]): N=1 matmul replaced by VPU multiply + lane reduction
    # (padded lanes of h1 and wfc are zero, so the reduction is exact).
    out_ref[...] = (jnp.sum(h1 * wfc_ref[...], axis=-1, keepdims=True)
                    + bfc_ref[...])


def lstm_model_forward(x, kparams, b_tile=None):
    """x: (B, T, F) float32, batch-first like the PyTorch module."""
    x = x.astype(jnp.float32)
    B, T, F = x.shape
    if b_tile is None:
        # Shard the batch across grid cells (=> both TensorCores on v7x) only
        # when it is big enough; each grid step costs ~0.35us of fixed overhead.
        b_tile = B // 2 if (B >= 16 and B % 16 == 0) else B
    assert B % b_tile == 0
    wih0, b0, wbig, b1, wfc, bfc = kparams
    HP4 = b0.shape[1]

    return pl.pallas_call(
        lstm_kernel,
        out_shape=jax.ShapeDtypeStruct((B, 1), jnp.float32),
        grid=(B // b_tile,),
        in_specs=[
            pl.BlockSpec((b_tile, T, F), lambda i: (i, 0, 0)),
            pl.BlockSpec(wih0.shape, lambda i: (0, 0)),
            pl.BlockSpec(b0.shape, lambda i: (0, 0)),
            pl.BlockSpec(wbig.shape, lambda i: (0, 0)),
            pl.BlockSpec(b1.shape, lambda i: (0, 0)),
            pl.BlockSpec(wfc.shape, lambda i: (0, 0)),
            pl.BlockSpec(bfc.shape, lambda i: (0, 0)),
        ],
        out_specs=pl.BlockSpec((b_tile, 1), lambda i: (i, 0)),
        scratch_shapes=[
            pltpu.VMEM((T * b_tile, HP4), jnp.float32),        # hoisted x-projection
            pltpu.VMEM((b_tile, 2 * (HP4 // 4)), jnp.float32),  # [h0 | h1] buffer
        ],
        compiler_params=pltpu.CompilerParams(
            dimension_semantics=("parallel",)),
    )(x, wih0, b0, wbig, b1, wfc, bfc)


# -------------------- parameter construction / packing --------------------

def _pad_gate_cols(w_t, h, hp):
    """(in_dim, 4h) -> (in_dim, 4hp): place each gate's h columns at its 128-lane block."""
    out = jnp.zeros((w_t.shape[0], 4 * hp), jnp.float32)
    for g in range(4):
        out = out.at[:, g * hp:g * hp + h].set(w_t[:, g * h:(g + 1) * h])
    return out


def _pad_gate_bias(b, h, hp):
    out = jnp.zeros((1, 4 * hp), jnp.float32)
    for g in range(4):
        out = out.at[0, g * hp:g * hp + h].set(b[g * h:(g + 1) * h])
    return out


def init_params(key, input_size=INPUT_SIZE, hidden=HIDDEN):
    """Deterministic PyTorch-style U(-1/sqrt(H), 1/sqrt(H)) init (PyTorch weight layout)."""
    k = 1.0 / np.sqrt(hidden)
    keys = jax.random.split(key, 10)

    def u(kk, shape):
        return jax.random.uniform(kk, shape, jnp.float32, minval=-k, maxval=k)

    return dict(
        w_ih0=u(keys[0], (4 * hidden, input_size)),
        w_hh0=u(keys[1], (4 * hidden, hidden)),
        b_ih0=u(keys[2], (4 * hidden,)),
        b_hh0=u(keys[3], (4 * hidden,)),
        w_ih1=u(keys[4], (4 * hidden, hidden)),
        w_hh1=u(keys[5], (4 * hidden, hidden)),
        b_ih1=u(keys[6], (4 * hidden,)),
        b_hh1=u(keys[7], (4 * hidden,)),
        w_fc=u(keys[8], (1, hidden)),
        b_fc=u(keys[9], (1,)),
    )


def pack_params(p, hidden=HIDDEN, hp=HP):
    """Pack PyTorch-layout weights into the lane-padded, skewed kernel layout."""
    def pad_rows(w_t):   # (h, 4hp) -> (hp, 4hp), zero padded rows
        return jnp.zeros((hp, 4 * hp), jnp.float32).at[:hidden, :].set(
            _pad_gate_cols(w_t, hidden, hp))

    wih0 = _pad_gate_cols(p["w_ih0"].T, hidden, hp)                          # (F, 4HP)
    b0 = _pad_gate_bias(p["b_ih0"] + p["b_hh0"], hidden, hp)                 # (1, 4HP)
    whh0_p = pad_rows(p["w_hh0"].T)                                          # (HP, 4HP)
    wih1_p = pad_rows(p["w_ih1"].T)                                          # (HP, 4HP)
    whh1_p = pad_rows(p["w_hh1"].T)                                          # (HP, 4HP)

    # Skewed block weight (2HP, 8HP):
    #   rows [0:HP]  consume h0(t);  rows [HP:2HP] consume h1(t-1)
    #   cols [0:4HP]   -> layer-0 recurrent gates for step t+1  ([whh0; 0])
    #   cols [4HP:8HP] -> layer-1 gates for step t               ([wih1; whh1])
    wbig = jnp.zeros((2 * hp, 8 * hp), jnp.float32)
    wbig = wbig.at[:hp, :4 * hp].set(whh0_p)
    wbig = wbig.at[:hp, 4 * hp:].set(wih1_p)
    wbig = wbig.at[hp:, 4 * hp:].set(whh1_p)
    wbig = wbig.astype(jnp.bfloat16)   # halves weight DMA + per-step streaming

    b1 = _pad_gate_bias(p["b_ih1"] + p["b_hh1"], hidden, hp)                 # (1, 4HP)
    wfc = jnp.zeros((1, hp), jnp.float32).at[0, :hidden].set(p["w_fc"][0])   # (1, HP)
    bfc = p["b_fc"].reshape(1, 1)                                            # (1, 1)
    return (wih0, b0, wbig, b1, wfc, bfc)


# -------------------- pure-JAX reference (unpadded f32 weights) --------------------

def reference_forward(x, p):
    H = HIDDEN
    wih0, whh0 = p["w_ih0"].T, p["w_hh0"].T
    wih1, whh1 = p["w_ih1"].T, p["w_hh1"].T
    b0 = (p["b_ih0"] + p["b_hh0"])[None, :]
    b1 = (p["b_ih1"] + p["b_hh1"])[None, :]

    def cell(xt, h, c, wih, whh, b):
        g = xt @ wih + h @ whh + b
        i = jax.nn.sigmoid(g[:, 0 * H:1 * H])
        f = jax.nn.sigmoid(g[:, 1 * H:2 * H])
        gg = jnp.tanh(g[:, 2 * H:3 * H])
        o = jax.nn.sigmoid(g[:, 3 * H:4 * H])
        c_new = f * c + i * gg
        return o * jnp.tanh(c_new), c_new

    B, T, F = x.shape
    h0 = c0 = h1 = c1 = jnp.zeros((B, H), jnp.float32)
    for t in range(T):
        h0, c0 = cell(x[:, t, :], h0, c0, wih0, whh0, b0)
        h1, c1 = cell(h0, h1, c1, wih1, whh1, b1)
    return h1 @ p["w_fc"].T + p["b_fc"][None, :]


if __name__ == "__main__":
    key = jax.random.PRNGKey(0)
    k_x, k_p = jax.random.split(key)

    # batch chosen as a multiple of 8 (f32 sublane count)
    B, T, F = 8, 8, INPUT_SIZE
    x = jax.random.normal(k_x, (B, T, F), jnp.float32)

    torch_params = init_params(k_p)
    kparams = pack_params(torch_params)

    out = lstm_model_forward(x, kparams)
    out = jax.block_until_ready(out)
    assert out.shape == (B, 1)

    ref = reference_forward(x, torch_params)
    # bf16 MXU operands vs f32 reference -> loose-but-meaningful tolerance.
    np.testing.assert_allclose(np.asarray(out), np.asarray(ref), rtol=2e-2, atol=2e-2)

    print("KERNEL_OK")
</pallas_src>

<mosaic_0001>
module attributes {stable_mosaic.version = 11 : i64} {
  func.func @lstm_kernel(%arg0: i32, %arg1: memref<8x8x5xf32, #tpu.memory_space<vmem>>, %arg2: memref<5x512xf32, #tpu.memory_space<vmem>>, %arg3: memref<1x512xf32, #tpu.memory_space<vmem>>, %arg4: memref<256x1024xbf16, #tpu.memory_space<vmem>>, %arg5: memref<1x512xf32, #tpu.memory_space<vmem>>, %arg6: memref<1x128xf32, #tpu.memory_space<vmem>>, %arg7: memref<1x1xf32, #tpu.memory_space<vmem>>, %arg8: memref<8x1xf32, #tpu.memory_space<vmem>>, %arg9: memref<64x512xf32, #tpu.memory_space<vmem>>, %arg10: memref<8x256xf32, #tpu.memory_space<vmem>>) attributes {dimension_semantics = [#tpu.dimension_semantics<parallel>], iteration_bounds = array<i64: 1>, scalar_prefetch = 0 : i64, scratch_operands = 2 : i64, tpu.core_type = #tpu.core_type<tc>, window_params = [{transform_indices = @transform_0, window_bounds = array<i64: 8, 8, 5>}, {pipeline_mode = #tpu.pipeline_mode<synchronous>, transform_indices = @transform_1, window_bounds = array<i64: 5, 512>}, {pipeline_mode = #tpu.pipeline_mode<synchronous>, transform_indices = @transform_2, window_bounds = array<i64: 1, 512>}, {pipeline_mode = #tpu.pipeline_mode<synchronous>, transform_indices = @transform_3, window_bounds = array<i64: 256, 1024>}, {pipeline_mode = #tpu.pipeline_mode<synchronous>, transform_indices = @transform_4, window_bounds = array<i64: 1, 512>}, {pipeline_mode = #tpu.pipeline_mode<synchronous>, transform_indices = @transform_5, window_bounds = array<i64: 1, 128>}, {pipeline_mode = #tpu.pipeline_mode<synchronous>, transform_indices = @transform_6, window_bounds = array<i64: 1, 1>}, {transform_indices = @transform_7, window_bounds = array<i64: 8, 1>}]} {
    %c0 = arith.constant 0 : index
    %c0_0 = arith.constant 0 : index
    %c0_1 = arith.constant 0 : index
    %0 = vector.load %arg1[%c0, %c0_0, %c0_1] : memref<8x8x5xf32, #tpu.memory_space<vmem>>, vector<8x8x5xf32>
    %1 = vector.extract_strided_slice %0 {offsets = [0, 0, 0], sizes = [8, 1, 5], strides = [1, 1, 1]} : vector<8x8x5xf32> to vector<8x1x5xf32>
    %2 = vector.shape_cast %1 : vector<8x1x5xf32> to vector<8x5xf32>
    %3 = vector.extract_strided_slice %0 {offsets = [0, 1, 0], sizes = [8, 1, 5], strides = [1, 1, 1]} : vector<8x8x5xf32> to vector<8x1x5xf32>
    %4 = vector.shape_cast %3 : vector<8x1x5xf32> to vector<8x5xf32>
    %5 = vector.extract_strided_slice %0 {offsets = [0, 2, 0], sizes = [8, 1, 5], strides = [1, 1, 1]} : vector<8x8x5xf32> to vector<8x1x5xf32>
    %6 = vector.shape_cast %5 : vector<8x1x5xf32> to vector<8x5xf32>
    %7 = vector.extract_strided_slice %0 {offsets = [0, 3, 0], sizes = [8, 1, 5], strides = [1, 1, 1]} : vector<8x8x5xf32> to vector<8x1x5xf32>
    %8 = vector.shape_cast %7 : vector<8x1x5xf32> to vector<8x5xf32>
    %9 = vector.extract_strided_slice %0 {offsets = [0, 4, 0], sizes = [8, 1, 5], strides = [1, 1, 1]} : vector<8x8x5xf32> to vector<8x1x5xf32>
    %10 = vector.shape_cast %9 : vector<8x1x5xf32> to vector<8x5xf32>
    %11 = vector.extract_strided_slice %0 {offsets = [0, 5, 0], sizes = [8, 1, 5], strides = [1, 1, 1]} : vector<8x8x5xf32> to vector<8x1x5xf32>
    %12 = vector.shape_cast %11 : vector<8x1x5xf32> to vector<8x5xf32>
    %13 = vector.extract_strided_slice %0 {offsets = [0, 6, 0], sizes = [8, 1, 5], strides = [1, 1, 1]} : vector<8x8x5xf32> to vector<8x1x5xf32>
    %14 = vector.shape_cast %13 : vector<8x1x5xf32> to vector<8x5xf32>
    %15 = vector.extract_strided_slice %0 {offsets = [0, 7, 0], sizes = [8, 1, 5], strides = [1, 1, 1]} : vector<8x8x5xf32> to vector<8x1x5xf32>
    %16 = vector.shape_cast %15 : vector<8x1x5xf32> to vector<8x5xf32>
    %17 = tpu.concatenate %2, %4, %6, %8, %10, %12, %14, %16 in 0 : vector<8x5xf32>, vector<8x5xf32>, vector<8x5xf32>, vector<8x5xf32>, vector<8x5xf32>, vector<8x5xf32>, vector<8x5xf32>, vector<8x5xf32> -> vector<64x5xf32>
    %c0_2 = arith.constant 0 : index
    %c0_3 = arith.constant 0 : index
    %18 = vector.load %arg2[%c0_2, %c0_3] : memref<5x512xf32, #tpu.memory_space<vmem>>, vector<5x512xf32>
    %cst = arith.constant dense<0.000000e+00> : vector<64x512xf32>
    %19 = tpu.matmul %17, %18, %cst {dimension_numbers = #tpu.dot_dimension_numbers<[1], [0], [0], [1], [0, 0, 1, 1], [], []>} : vector<64x5xf32>, vector<5x512xf32>, vector<64x512xf32> -> vector<64x512xf32>
    %c0_4 = arith.constant 0 : index
    %c0_5 = arith.constant 0 : index
    %20 = vector.load %arg3[%c0_4, %c0_5] : memref<1x512xf32, #tpu.memory_space<vmem>>, vector<1x512xf32>
    %21 = vector.broadcast %20 : vector<1x512xf32> to vector<64x512xf32>
    %22 = arith.addf %19, %21 : vector<64x512xf32>
    %c0_6 = arith.constant 0 : index
    %c0_7 = arith.constant 0 : index
    %23 = vector.load %arg9[%c0_6, %c0_7] : memref<64x512xf32, #tpu.memory_space<vmem>>, vector<64x512xf32>
    tpu.vector_store %arg9[%c0_6, %c0_7], %22 {strides = array<i32>} : memref<64x512xf32, #tpu.memory_space<vmem>>, vector<64x512xf32>,
    %c0_8 = arith.constant 0 : index
    %c0_9 = arith.constant 0 : index
    %24 = vector.load %arg4[%c0_8, %c0_9] : memref<256x1024xbf16, #tpu.memory_space<vmem>>, vector<256x1024xbf16>
    %c0_10 = arith.constant 0 : index
    %c0_11 = arith.constant 0 : index
    %25 = vector.load %arg5[%c0_10, %c0_11] : memref<1x512xf32, #tpu.memory_space<vmem>>, vector<1x512xf32>
    %26 = vector.shape_cast %25 : vector<1x512xf32> to vector<1x512xf32>
    %27 = vector.broadcast %26 : vector<1x512xf32> to vector<8x512xf32>
    %cst_12 = arith.constant 0.000000e+00 : f32
    %28 = vector.broadcast %cst_12 : f32 to vector<8x128xf32>
    %c0_13 = arith.constant 0 : index
    %c0_14 = arith.constant 0 : index
    %29 = vector.load %arg9[%c0_13, %c0_14] : memref<64x512xf32, #tpu.memory_space<vmem>>, vector<8x512xf32>
    %30 = vector.extract_strided_slice %29 {offsets = [0, 0], sizes = [8, 128], strides = [1, 1]} : vector<8x512xf32> to vector<8x128xf32>
    %31 = arith.negf %30 : vector<8x128xf32>
    %32 = math.exp %31 : vector<8x128xf32>
    %cst_15 = arith.constant 1.000000e+00 : f32
    %33 = vector.broadcast %cst_15 : f32 to vector<8x128xf32>
    %34 = arith.addf %33, %32 : vector<8x128xf32>
    %35 = arith.divf %33, %34 : vector<8x128xf32>
    %36 = vector.extract_strided_slice %29 {offsets = [0, 128], sizes = [8, 128], strides = [1, 1]} : vector<8x512xf32> to vector<8x128xf32>
    %37 = arith.negf %36 : vector<8x128xf32>
    %38 = math.exp %37 : vector<8x128xf32>
    %cst_16 = arith.constant 1.000000e+00 : f32
    %39 = vector.broadcast %cst_16 : f32 to vector<8x128xf32>
    %40 = arith.addf %39, %38 : vector<8x128xf32>
    %41 = arith.divf %39, %40 : vector<8x128xf32>
    %42 = vector.extract_strided_slice %29 {offsets = [0, 256], sizes = [8, 128], strides = [1, 1]} : vector<8x512xf32> to vector<8x128xf32>
    %43 = math.tanh %42 : vector<8x128xf32>
    %44 = vector.extract_strided_slice %29 {offsets = [0, 384], sizes = [8, 128], strides = [1, 1]} : vector<8x512xf32> to vector<8x128xf32>
    %45 = arith.negf %44 : vector<8x128xf32>
    %46 = math.exp %45 : vector<8x128xf32>
    %cst_17 = arith.constant 1.000000e+00 : f32
    %47 = vector.broadcast %cst_17 : f32 to vector<8x128xf32>
    %48 = arith.addf %47, %46 : vector<8x128xf32>
    %49 = arith.divf %47, %48 : vector<8x128xf32>
    %50 = arith.mulf %41, %28 : vector<8x128xf32>
    %51 = arith.mulf %35, %43 : vector<8x128xf32>
    %52 = arith.addf %50, %51 : vector<8x128xf32>
    %53 = math.tanh %52 : vector<8x128xf32>
    %54 = arith.mulf %49, %53 : vector<8x128xf32>
    %c0_18 = arith.constant 0 : index
    %c0_19 = arith.constant 0 : index
    %55 = vector.load %arg10[%c0_18, %c0_19] : memref<8x256xf32, #tpu.memory_space<vmem>>, vector<8x128xf32>
    tpu.vector_store %arg10[%c0_18, %c0_19], %54 {strides = array<i32>} : memref<8x256xf32, #tpu.memory_space<vmem>>, vector<8x128xf32>,
    %c0_20 = arith.constant 0 : index
    %c128 = arith.constant 128 : index
    %56 = vector.load %arg10[%c0_20, %c128] : memref<8x256xf32, #tpu.memory_space<vmem>>, vector<8x128xf32>
    tpu.vector_store %arg10[%c0_20, %c128], %28 {strides = array<i32>} : memref<8x256xf32, #tpu.memory_space<vmem>>, vector<8x128xf32>,
    %c0_21 = arith.constant 0 : index
    %c0_22 = arith.constant 0 : index
    %57 = vector.load %arg10[%c0_21, %c0_22] : memref<8x256xf32, #tpu.memory_space<vmem>>, vector<8x256xf32>
    %58 = arith.truncf %57 : vector<8x256xf32> to vector<8x256xbf16>
    %cst_23 = arith.constant dense<0.000000e+00> : vector<8x1024xf32>
    %59 = tpu.matmul %58, %24, %cst_23 {dimension_numbers = #tpu.dot_dimension_numbers<[1], [0], [0], [1], [0, 0, 1, 1], [], []>} : vector<8x256xbf16>, vector<256x1024xbf16>, vector<8x1024xf32> -> vector<8x1024xf32>
    %60 = vector.extract_strided_slice %59 {offsets = [0, 512], sizes = [8, 512], strides = [1, 1]} : vector<8x1024xf32> to vector<8x512xf32>
    %61 = arith.addf %60, %27 : vector<8x512xf32>
    %62 = vector.extract_strided_slice %61 {offsets = [0, 0], sizes = [8, 128], strides = [1, 1]} : vector<8x512xf32> to vector<8x128xf32>
    %63 = arith.negf %62 : vector<8x128xf32>
    %64 = math.exp %63 : vector<8x128xf32>
    %cst_24 = arith.constant 1.000000e+00 : f32
    %65 = vector.broadcast %cst_24 : f32 to vector<8x128xf32>
    %66 = arith.addf %65, %64 : vector<8x128xf32>
    %67 = arith.divf %65, %66 : vector<8x128xf32>
    %68 = vector.extract_strided_slice %61 {offsets = [0, 128], sizes = [8, 128], strides = [1, 1]} : vector<8x512xf32> to vector<8x128xf32>
    %69 = arith.negf %68 : vector<8x128xf32>
    %70 = math.exp %69 : vector<8x128xf32>
    %cst_25 = arith.constant 1.000000e+00 : f32
    %71 = vector.broadcast %cst_25 : f32 to vector<8x128xf32>
    %72 = arith.addf %71, %70 : vector<8x128xf32>
    %73 = arith.divf %71, %72 : vector<8x128xf32>
    %74 = vector.extract_strided_slice %61 {offsets = [0, 256], sizes = [8, 128], strides = [1, 1]} : vector<8x512xf32> to vector<8x128xf32>
    %75 = math.tanh %74 : vector<8x128xf32>
    %76 = vector.extract_strided_slice %61 {offsets = [0, 384], sizes = [8, 128], strides = [1, 1]} : vector<8x512xf32> to vector<8x128xf32>
    %77 = arith.negf %76 : vector<8x128xf32>
    %78 = math.exp %77 : vector<8x128xf32>
    %cst_26 = arith.constant 1.000000e+00 : f32
    %79 = vector.broadcast %cst_26 : f32 to vector<8x128xf32>
    %80 = arith.addf %79, %78 : vector<8x128xf32>
    %81 = arith.divf %79, %80 : vector<8x128xf32>
    %82 = arith.mulf %73, %28 : vector<8x128xf32>
    %83 = arith.mulf %67, %75 : vector<8x128xf32>
    %84 = arith.addf %82, %83 : vector<8x128xf32>
    %85 = math.tanh %84 : vector<8x128xf32>
    %86 = arith.mulf %81, %85 : vector<8x128xf32>
    %c0_27 = arith.constant 0 : index
    %c128_28 = arith.constant 128 : index
    %87 = vector.load %arg10[%c0_27, %c128_28] : memref<8x256xf32, #tpu.memory_space<vmem>>, vector<8x128xf32>
    tpu.vector_store %arg10[%c0_27, %c128_28], %86 {strides = array<i32>} : memref<8x256xf32, #tpu.memory_space<vmem>>, vector<8x128xf32>,
    %c8 = arith.constant 8 : index
    %c0_29 = arith.constant 0 : index
    %88 = vector.load %arg9[%c8, %c0_29] : memref<64x512xf32, #tpu.memory_space<vmem>>, vector<8x512xf32>
    %89 = vector.extract_strided_slice %59 {offsets = [0, 0], sizes = [8, 512], strides = [1, 1]} : vector<8x1024xf32> to vector<8x512xf32>
    %90 = arith.addf %88, %89 : vector<8x512xf32>
    %91 = vector.extract_strided_slice %90 {offsets = [0, 0], sizes = [8, 128], strides = [1, 1]} : vector<8x512xf32> to vector<8x128xf32>
    %92 = arith.negf %91 : vector<8x128xf32>
    %93 = math.exp %92 : vector<8x128xf32>
    %cst_30 = arith.constant 1.000000e+00 : f32
    %94 = vector.broadcast %cst_30 : f32 to vector<8x128xf32>
    %95 = arith.addf %94, %93 : vector<8x128xf32>
    %96 = arith.divf %94, %95 : vector<8x128xf32>
    %97 = vector.extract_strided_slice %90 {offsets = [0, 128], sizes = [8, 128], strides = [1, 1]} : vector<8x512xf32> to vector<8x128xf32>
    %98 = arith.negf %97 : vector<8x128xf32>
    %99 = math.exp %98 : vector<8x128xf32>
    %cst_31 = arith.constant 1.000000e+00 : f32
    %100 = vector.broadcast %cst_31 : f32 to vector<8x128xf32>
    %101 = arith.addf %100, %99 : vector<8x128xf32>
    %102 = arith.divf %100, %101 : vector<8x128xf32>
    %103 = vector.extract_strided_slice %90 {offsets = [0, 256], sizes = [8, 128], strides = [1, 1]} : vector<8x512xf32> to vector<8x128xf32>
    %104 = math.tanh %103 : vector<8x128xf32>
    %105 = vector.extract_strided_slice %90 {offsets = [0, 384], sizes = [8, 128], strides = [1, 1]} : vector<8x512xf32> to vector<8x128xf32>
    %106 = arith.negf %105 : vector<8x128xf32>
    %107 = math.exp %106 : vector<8x128xf32>
    %cst_32 = arith.constant 1.000000e+00 : f32
    %108 = vector.broadcast %cst_32 : f32 to vector<8x128xf32>
    %109 = arith.addf %108, %107 : vector<8x128xf32>
    %110 = arith.divf %108, %109 : vector<8x128xf32>
    %111 = arith.mulf %102, %52 : vector<8x128xf32>
    %112 = arith.mulf %96, %104 : vector<8x128xf32>
    %113 = arith.addf %111, %112 : vector<8x128xf32>
    %114 = math.tanh %113 : vector<8x128xf32>
    %115 = arith.mulf %110, %114 : vector<8x128xf32>
    %c0_33 = arith.constant 0 : index
    %c0_34 = arith.constant 0 : index
    %116 = vector.load %arg10[%c0_33, %c0_34] : memref<8x256xf32, #tpu.memory_space<vmem>>, vector<8x128xf32>
    tpu.vector_store %arg10[%c0_33, %c0_34], %115 {strides = array<i32>} : memref<8x256xf32, #tpu.memory_space<vmem>>, vector<8x128xf32>,
    %c0_35 = arith.constant 0 : index
    %c0_36 = arith.constant 0 : index
    %117 = vector.load %arg10[%c0_35, %c0_36] : memref<8x256xf32, #tpu.memory_space<vmem>>, vector<8x256xf32>
    %118 = arith.truncf %117 : vector<8x256xf32> to vector<8x256xbf16>
    %cst_37 = arith.constant dense<0.000000e+00> : vector<8x1024xf32>
    %119 = tpu.matmul %118, %24, %cst_37 {dimension_numbers = #tpu.dot_dimension_numbers<[1], [0], [0], [1], [0, 0, 1, 1], [], []>} : vector<8x256xbf16>, vector<256x1024xbf16>, vector<8x1024xf32> -> vector<8x1024xf32>
    %120 = vector.extract_strided_slice %119 {offsets = [0, 512], sizes = [8, 512], strides = [1, 1]} : vector<8x1024xf32> to vector<8x512xf32>
    %121 = arith.addf %120, %27 : vector<8x512xf32>
    %122 = vector.extract_strided_slice %121 {offsets = [0, 0], sizes = [8, 128], strides = [1, 1]} : vector<8x512xf32> to vector<8x128xf32>
    %123 = arith.negf %122 : vector<8x128xf32>
    %124 = math.exp %123 : vector<8x128xf32>
    %cst_38 = arith.constant 1.000000e+00 : f32
    %125 = vector.broadcast %cst_38 : f32 to vector<8x128xf32>
    %126 = arith.addf %125, %124 : vector<8x128xf32>
    %127 = arith.divf %125, %126 : vector<8x128xf32>
    %128 = vector.extract_strided_slice %121 {offsets = [0, 128], sizes = [8, 128], strides = [1, 1]} : vector<8x512xf32> to vector<8x128xf32>
    %129 = arith.negf %128 : vector<8x128xf32>
    %130 = math.exp %129 : vector<8x128xf32>
    %cst_39 = arith.constant 1.000000e+00 : f32
    %131 = vector.broadcast %cst_39 : f32 to vector<8x128xf32>
    %132 = arith.addf %131, %130 : vector<8x128xf32>
    %133 = arith.divf %131, %132 : vector<8x128xf32>
    %134 = vector.extract_strided_slice %121 {offsets = [0, 256], sizes = [8, 128], strides = [1, 1]} : vector<8x512xf32> to vector<8x128xf32>
    %135 = math.tanh %134 : vector<8x128xf32>
    %136 = vector.extract_strided_slice %121 {offsets = [0, 384], sizes = [8, 128], strides = [1, 1]} : vector<8x512xf32> to vector<8x128xf32>
    %137 = arith.negf %136 : vector<8x128xf32>
    %138 = math.exp %137 : vector<8x128xf32>
    %cst_40 = arith.constant 1.000000e+00 : f32
    %139 = vector.broadcast %cst_40 : f32 to vector<8x128xf32>
    %140 = arith.addf %139, %138 : vector<8x128xf32>
    %141 = arith.divf %139, %140 : vector<8x128xf32>
    %142 = arith.mulf %133, %84 : vector<8x128xf32>
    %143 = arith.mulf %127, %135 : vector<8x128xf32>
    %144 = arith.addf %142, %143 : vector<8x128xf32>
    %145 = math.tanh %144 : vector<8x128xf32>
    %146 = arith.mulf %141, %145 : vector<8x128xf32>
    %c0_41 = arith.constant 0 : index
    %c128_42 = arith.constant 128 : index
    %147 = vector.load %arg10[%c0_41, %c128_42] : memref<8x256xf32, #tpu.memory_space<vmem>>, vector<8x128xf32>
    tpu.vector_store %arg10[%c0_41, %c128_42], %146 {strides = array<i32>} : memref<8x256xf32, #tpu.memory_space<vmem>>, vector<8x128xf32>,
    %c16 = arith.constant 16 : index
    %c0_43 = arith.constant 0 : index
    %148 = vector.load %arg9[%c16, %c0_43] : memref<64x512xf32, #tpu.memory_space<vmem>>, vector<8x512xf32>
    %149 = vector.extract_strided_slice %119 {offsets = [0, 0], sizes = [8, 512], strides = [1, 1]} : vector<8x1024xf32> to vector<8x512xf32>
    %150 = arith.addf %148, %149 : vector<8x512xf32>
    %151 = vector.extract_strided_slice %150 {offsets = [0, 0], sizes = [8, 128], strides = [1, 1]} : vector<8x512xf32> to vector<8x128xf32>
    %152 = arith.negf %151 : vector<8x128xf32>
    %153 = math.exp %152 : vector<8x128xf32>
    %cst_44 = arith.constant 1.000000e+00 : f32
    %154 = vector.broadcast %cst_44 : f32 to vector<8x128xf32>
    %155 = arith.addf %154, %153 : vector<8x128xf32>
    %156 = arith.divf %154, %155 : vector<8x128xf32>
    %157 = vector.extract_strided_slice %150 {offsets = [0, 128], sizes = [8, 128], strides = [1, 1]} : vector<8x512xf32> to vector<8x128xf32>
    %158 = arith.negf %157 : vector<8x128xf32>
    %159 = math.exp %158 : vector<8x128xf32>
    %cst_45 = arith.constant 1.000000e+00 : f32
    %160 = vector.broadcast %cst_45 : f32 to vector<8x128xf32>
    %161 = arith.addf %160, %159 : vector<8x128xf32>
    %162 = arith.divf %160, %161 : vector<8x128xf32>
    %163 = vector.extract_strided_slice %150 {offsets = [0, 256], sizes = [8, 128], strides = [1, 1]} : vector<8x512xf32> to vector<8x128xf32>
    %164 = math.tanh %163 : vector<8x128xf32>
    %165 = vector.extract_strided_slice %150 {offsets = [0, 384], sizes = [8, 128], strides = [1, 1]} : vector<8x512xf32> to vector<8x128xf32>
    %166 = arith.negf %165 : vector<8x128xf32>
    %167 = math.exp %166 : vector<8x128xf32>
    %cst_46 = arith.constant 1.000000e+00 : f32
    %168 = vector.broadcast %cst_46 : f32 to vector<8x128xf32>
    %169 = arith.addf %168, %167 : vector<8x128xf32>
    %170 = arith.divf %168, %169 : vector<8x128xf32>
    %171 = arith.mulf %162, %113 : vector<8x128xf32>
    %172 = arith.mulf %156, %164 : vector<8x128xf32>
    %173 = arith.addf %171, %172 : vector<8x128xf32>
    %174 = math.tanh %173 : vector<8x128xf32>
    %175 = arith.mulf %170, %174 : vector<8x128xf32>
    %c0_47 = arith.constant 0 : index
    %c0_48 = arith.constant 0 : index
    %176 = vector.load %arg10[%c0_47, %c0_48] : memref<8x256xf32, #tpu.memory_space<vmem>>, vector<8x128xf32>
    tpu.vector_store %arg10[%c0_47, %c0_48], %175 {strides = array<i32>} : memref<8x256xf32, #tpu.memory_space<vmem>>, vector<8x128xf32>,
    %c0_49 = arith.constant 0 : index
    %c0_50 = arith.constant 0 : index
    %177 = vector.load %arg10[%c0_49, %c0_50] : memref<8x256xf32, #tpu.memory_space<vmem>>, vector<8x256xf32>
    %178 = arith.truncf %177 : vector<8x256xf32> to vector<8x256xbf16>
    %cst_51 = arith.constant dense<0.000000e+00> : vector<8x1024xf32>
    %179 = tpu.matmul %178, %24, %cst_51 {dimension_numbers = #tpu.dot_dimension_numbers<[1], [0], [0], [1], [0, 0, 1, 1], [], []>} : vector<8x256xbf16>, vector<256x1024xbf16>, vector<8x1024xf32> -> vector<8x1024xf32>
    %180 = vector.extract_strided_slice %179 {offsets = [0, 512], sizes = [8, 512], strides = [1, 1]} : vector<8x1024xf32> to vector<8x512xf32>
    %181 = arith.addf %180, %27 : vector<8x512xf32>
    %182 = vector.extract_strided_slice %181 {offsets = [0, 0], sizes = [8, 128], strides = [1, 1]} : vector<8x512xf32> to vector<8x128xf32>
    %183 = arith.negf %182 : vector<8x128xf32>
    %184 = math.exp %183 : vector<8x128xf32>
    %cst_52 = arith.constant 1.000000e+00 : f32
    %185 = vector.broadcast %cst_52 : f32 to vector<8x128xf32>
    %186 = arith.addf %185, %184 : vector<8x128xf32>
    %187 = arith.divf %185, %186 : vector<8x128xf32>
    %188 = vector.extract_strided_slice %181 {offsets = [0, 128], sizes = [8, 128], strides = [1, 1]} : vector<8x512xf32> to vector<8x128xf32>
    %189 = arith.negf %188 : vector<8x128xf32>
    %190 = math.exp %189 : vector<8x128xf32>
    %cst_53 = arith.constant 1.000000e+00 : f32
    %191 = vector.broadcast %cst_53 : f32 to vector<8x128xf32>
    %192 = arith.addf %191, %190 : vector<8x128xf32>
    %193 = arith.divf %191, %192 : vector<8x128xf32>
    %194 = vector.extract_strided_slice %181 {offsets = [0, 256], sizes = [8, 128], strides = [1, 1]} : vector<8x512xf32> to vector<8x128xf32>
    %195 = math.tanh %194 : vector<8x128xf32>
    %196 = vector.extract_strided_slice %181 {offsets = [0, 384], sizes = [8, 128], strides = [1, 1]} : vector<8x512xf32> to vector<8x128xf32>
    %197 = arith.negf %196 : vector<8x128xf32>
    %198 = math.exp %197 : vector<8x128xf32>
    %cst_54 = arith.constant 1.000000e+00 : f32
    %199 = vector.broadcast %cst_54 : f32 to vector<8x128xf32>
    %200 = arith.addf %199, %198 : vector<8x128xf32>
    %201 = arith.divf %199, %200 : vector<8x128xf32>
    %202 = arith.mulf %193, %144 : vector<8x128xf32>
    %203 = arith.mulf %187, %195 : vector<8x128xf32>
    %204 = arith.addf %202, %203 : vector<8x128xf32>
    %205 = math.tanh %204 : vector<8x128xf32>
    %206 = arith.mulf %201, %205 : vector<8x128xf32>
    %c0_55 = arith.constant 0 : index
    %c128_56 = arith.constant 128 : index
    %207 = vector.load %arg10[%c0_55, %c128_56] : memref<8x256xf32, #tpu.memory_space<vmem>>, vector<8x128xf32>
    tpu.vector_store %arg10[%c0_55, %c128_56], %206 {strides = array<i32>} : memref<8x256xf32, #tpu.memory_space<vmem>>, vector<8x128xf32>,
    %c24 = arith.constant 24 : index
    %c0_57 = arith.constant 0 : index
    %208 = vector.load %arg9[%c24, %c0_57] : memref<64x512xf32, #tpu.memory_space<vmem>>, vector<8x512xf32>
    %209 = vector.extract_strided_slice %179 {offsets = [0, 0], sizes = [8, 512], strides = [1, 1]} : vector<8x1024xf32> to vector<8x512xf32>
    %210 = arith.addf %208, %209 : vector<8x512xf32>
    %211 = vector.extract_strided_slice %210 {offsets = [0, 0], sizes = [8, 128], strides = [1, 1]} : vector<8x512xf32> to vector<8x128xf32>
    %212 = arith.negf %211 : vector<8x128xf32>
    %213 = math.exp %212 : vector<8x128xf32>
    %cst_58 = arith.constant 1.000000e+00 : f32
    %214 = vector.broadcast %cst_58 : f32 to vector<8x128xf32>
    %215 = arith.addf %214, %213 : vector<8x128xf32>
    %216 = arith.divf %214, %215 : vector<8x128xf32>
    %217 = vector.extract_strided_slice %210 {offsets = [0, 128], sizes = [8, 128], strides = [1, 1]} : vector<8x512xf32> to vector<8x128xf32>
    %218 = arith.negf %217 : vector<8x128xf32>
    %219 = math.exp %218 : vector<8x128xf32>
    %cst_59 = arith.constant 1.000000e+00 : f32
    %220 = vector.broadcast %cst_59 : f32 to vector<8x128xf32>
    %221 = arith.addf %220, %219 : vector<8x128xf32>
    %222 = arith.divf %220, %221 : vector<8x128xf32>
    %223 = vector.extract_strided_slice %210 {offsets = [0, 256], sizes = [8, 128], strides = [1, 1]} : vector<8x512xf32> to vector<8x128xf32>
    %224 = math.tanh %223 : vector<8x128xf32>
    %225 = vector.extract_strided_slice %210 {offsets = [0, 384], sizes = [8, 128], strides = [1, 1]} : vector<8x512xf32> to vector<8x128xf32>
    %226 = arith.negf %225 : vector<8x128xf32>
    %227 = math.exp %226 : vector<8x128xf32>
    %cst_60 = arith.constant 1.000000e+00 : f32
    %228 = vector.broadcast %cst_60 : f32 to vector<8x128xf32>
    %229 = arith.addf %228, %227 : vector<8x128xf32>
    %230 = arith.divf %228, %229 : vector<8x128xf32>
    %231 = arith.mulf %222, %173 : vector<8x128xf32>
    %232 = arith.mulf %216, %224 : vector<8x128xf32>
    %233 = arith.addf %231, %232 : vector<8x128xf32>
    %234 = math.tanh %233 : vector<8x128xf32>
    %235 = arith.mulf %230, %234 : vector<8x128xf32>
    %c0_61 = arith.constant 0 : index
    %c0_62 = arith.constant 0 : index
    %236 = vector.load %arg10[%c0_61, %c0_62] : memref<8x256xf32, #tpu.memory_space<vmem>>, vector<8x128xf32>
    tpu.vector_store %arg10[%c0_61, %c0_62], %235 {strides = array<i32>} : memref<8x256xf32, #tpu.memory_space<vmem>>, vector<8x128xf32>,
    %c0_63 = arith.constant 0 : index
    %c0_64 = arith.constant 0 : index
    %237 = vector.load %arg10[%c0_63, %c0_64] : memref<8x256xf32, #tpu.memory_space<vmem>>, vector<8x256xf32>
    %238 = arith.truncf %237 : vector<8x256xf32> to vector<8x256xbf16>
    %cst_65 = arith.constant dense<0.000000e+00> : vector<8x1024xf32>
    %239 = tpu.matmul %238, %24, %cst_65 {dimension_numbers = #tpu.dot_dimension_numbers<[1], [0], [0], [1], [0, 0, 1, 1], [], []>} : vector<8x256xbf16>, vector<256x1024xbf16>, vector<8x1024xf32> -> vector<8x1024xf32>
    %240 = vector.extract_strided_slice %239 {offsets = [0, 512], sizes = [8, 512], strides = [1, 1]} : vector<8x1024xf32> to vector<8x512xf32>
    %241 = arith.addf %240, %27 : vector<8x512xf32>
    %242 = vector.extract_strided_slice %241 {offsets = [0, 0], sizes = [8, 128], strides = [1, 1]} : vector<8x512xf32> to vector<8x128xf32>
    %243 = arith.negf %242 : vector<8x128xf32>
    %244 = math.exp %243 : vector<8x128xf32>
    %cst_66 = arith.constant 1.000000e+00 : f32
    %245 = vector.broadcast %cst_66 : f32 to vector<8x128xf32>
    %246 = arith.addf %245, %244 : vector<8x128xf32>
    %247 = arith.divf %245, %246 : vector<8x128xf32>
    %248 = vector.extract_strided_slice %241 {offsets = [0, 128], sizes = [8, 128], strides = [1, 1]} : vector<8x512xf32> to vector<8x128xf32>
    %249 = arith.negf %248 : vector<8x128xf32>
    %250 = math.exp %249 : vector<8x128xf32>
    %cst_67 = arith.constant 1.000000e+00 : f32
    %251 = vector.broadcast %cst_67 : f32 to vector<8x128xf32>
    %252 = arith.addf %251, %250 : vector<8x128xf32>
    %253 = arith.divf %251, %252 : vector<8x128xf32>
    %254 = vector.extract_strided_slice %241 {offsets = [0, 256], sizes = [8, 128], strides = [1, 1]} : vector<8x512xf32> to vector<8x128xf32>
    %255 = math.tanh %254 : vector<8x128xf32>
    %256 = vector.extract_strided_slice %241 {offsets = [0, 384], sizes = [8, 128], strides = [1, 1]} : vector<8x512xf32> to vector<8x128xf32>
    %257 = arith.negf %256 : vector<8x128xf32>
    %258 = math.exp %257 : vector<8x128xf32>
    %cst_68 = arith.constant 1.000000e+00 : f32
    %259 = vector.broadcast %cst_68 : f32 to vector<8x128xf32>
    %260 = arith.addf %259, %258 : vector<8x128xf32>
    %261 = arith.divf %259, %260 : vector<8x128xf32>
    %262 = arith.mulf %253, %204 : vector<8x128xf32>
    %263 = arith.mulf %247, %255 : vector<8x128xf32>
    %264 = arith.addf %262, %263 : vector<8x128xf32>
    %265 = math.tanh %264 : vector<8x128xf32>
    %266 = arith.mulf %261, %265 : vector<8x128xf32>
    %c0_69 = arith.constant 0 : index
    %c128_70 = arith.constant 128 : index
    %267 = vector.load %arg10[%c0_69, %c128_70] : memref<8x256xf32, #tpu.memory_space<vmem>>, vector<8x128xf32>
    tpu.vector_store %arg10[%c0_69, %c128_70], %266 {strides = array<i32>} : memref<8x256xf32, #tpu.memory_space<vmem>>, vector<8x128xf32>,
    %c32 = arith.constant 32 : index
    %c0_71 = arith.constant 0 : index
    %268 = vector.load %arg9[%c32, %c0_71] : memref<64x512xf32, #tpu.memory_space<vmem>>, vector<8x512xf32>
    %269 = vector.extract_strided_slice %239 {offsets = [0, 0], sizes = [8, 512], strides = [1, 1]} : vector<8x1024xf32> to vector<8x512xf32>
    %270 = arith.addf %268, %269 : vector<8x512xf32>
    %271 = vector.extract_strided_slice %270 {offsets = [0, 0], sizes = [8, 128], strides = [1, 1]} : vector<8x512xf32> to vector<8x128xf32>
    %272 = arith.negf %271 : vector<8x128xf32>
    %273 = math.exp %272 : vector<8x128xf32>
    %cst_72 = arith.constant 1.000000e+00 : f32
    %274 = vector.broadcast %cst_72 : f32 to vector<8x128xf32>
    %275 = arith.addf %274, %273 : vector<8x128xf32>
    %276 = arith.divf %274, %275 : vector<8x128xf32>
    %277 = vector.extract_strided_slice %270 {offsets = [0, 128], sizes = [8, 128], strides = [1, 1]} : vector<8x512xf32> to vector<8x128xf32>
    %278 = arith.negf %277 : vector<8x128xf32>
    %279 = math.exp %278 : vector<8x128xf32>
    %cst_73 = arith.constant 1.000000e+00 : f32
    %280 = vector.broadcast %cst_73 : f32 to vector<8x128xf32>
    %281 = arith.addf %280, %279 : vector<8x128xf32>
    %282 = arith.divf %280, %281 : vector<8x128xf32>
    %283 = vector.extract_strided_slice %270 {offsets = [0, 256], sizes = [8, 128], strides = [1, 1]} : vector<8x512xf32> to vector<8x128xf32>
    %284 = math.tanh %283 : vector<8x128xf32>
    %285 = vector.extract_strided_slice %270 {offsets = [0, 384], sizes = [8, 128], strides = [1, 1]} : vector<8x512xf32> to vector<8x128xf32>
    %286 = arith.negf %285 : vector<8x128xf32>
    %287 = math.exp %286 : vector<8x128xf32>
    %cst_74 = arith.constant 1.000000e+00 : f32
    %288 = vector.broadcast %cst_74 : f32 to vector<8x128xf32>
    %289 = arith.addf %288, %287 : vector<8x128xf32>
    %290 = arith.divf %288, %289 : vector<8x128xf32>
    %291 = arith.mulf %282, %233 : vector<8x128xf32>
    %292 = arith.mulf %276, %284 : vector<8x128xf32>
    %293 = arith.addf %291, %292 : vector<8x128xf32>
    %294 = math.tanh %293 : vector<8x128xf32>
    %295 = arith.mulf %290, %294 : vector<8x128xf32>
    %c0_75 = arith.constant 0 : index
    %c0_76 = arith.constant 0 : index
    %296 = vector.load %arg10[%c0_75, %c0_76] : memref<8x256xf32, #tpu.memory_space<vmem>>, vector<8x128xf32>
    tpu.vector_store %arg10[%c0_75, %c0_76], %295 {strides = array<i32>} : memref<8x256xf32, #tpu.memory_space<vmem>>, vector<8x128xf32>,
    %c0_77 = arith.constant 0 : index
    %c0_78 = arith.constant 0 : index
    %297 = vector.load %arg10[%c0_77, %c0_78] : memref<8x256xf32, #tpu.memory_space<vmem>>, vector<8x256xf32>
    %298 = arith.truncf %297 : vector<8x256xf32> to vector<8x256xbf16>
    %cst_79 = arith.constant dense<0.000000e+00> : vector<8x1024xf32>
    %299 = tpu.matmul %298, %24, %cst_79 {dimension_numbers = #tpu.dot_dimension_numbers<[1], [0], [0], [1], [0, 0, 1, 1], [], []>} : vector<8x256xbf16>, vector<256x1024xbf16>, vector<8x1024xf32> -> vector<8x1024xf32>
    %300 = vector.extract_strided_slice %299 {offsets = [0, 512], sizes = [8, 512], strides = [1, 1]} : vector<8x1024xf32> to vector<8x512xf32>
    %301 = arith.addf %300, %27 : vector<8x512xf32>
    %302 = vector.extract_strided_slice %301 {offsets = [0, 0], sizes = [8, 128], strides = [1, 1]} : vector<8x512xf32> to vector<8x128xf32>
    %303 = arith.negf %302 : vector<8x128xf32>
    %304 = math.exp %303 : vector<8x128xf32>
    %cst_80 = arith.constant 1.000000e+00 : f32
    %305 = vector.broadcast %cst_80 : f32 to vector<8x128xf32>
    %306 = arith.addf %305, %304 : vector<8x128xf32>
    %307 = arith.divf %305, %306 : vector<8x128xf32>
    %308 = vector.extract_strided_slice %301 {offsets = [0, 128], sizes = [8, 128], strides = [1, 1]} : vector<8x512xf32> to vector<8x128xf32>
    %309 = arith.negf %308 : vector<8x128xf32>
    %310 = math.exp %309 : vector<8x128xf32>
    %cst_81 = arith.constant 1.000000e+00 : f32
    %311 = vector.broadcast %cst_81 : f32 to vector<8x128xf32>
    %312 = arith.addf %311, %310 : vector<8x128xf32>
    %313 = arith.divf %311, %312 : vector<8x128xf32>
    %314 = vector.extract_strided_slice %301 {offsets = [0, 256], sizes = [8, 128], strides = [1, 1]} : vector<8x512xf32> to vector<8x128xf32>
    %315 = math.tanh %314 : vector<8x128xf32>
    %316 = vector.extract_strided_slice %301 {offsets = [0, 384], sizes = [8, 128], strides = [1, 1]} : vector<8x512xf32> to vector<8x128xf32>
    %317 = arith.negf %316 : vector<8x128xf32>
    %318 = math.exp %317 : vector<8x128xf32>
    %cst_82 = arith.constant 1.000000e+00 : f32
    %319 = vector.broadcast %cst_82 : f32 to vector<8x128xf32>
    %320 = arith.addf %319, %318 : vector<8x128xf32>
    %321 = arith.divf %319, %320 : vector<8x128xf32>
    %322 = arith.mulf %313, %264 : vector<8x128xf32>
    %323 = arith.mulf %307, %315 : vector<8x128xf32>
    %324 = arith.addf %322, %323 : vector<8x128xf32>
    %325 = math.tanh %324 : vector<8x128xf32>
    %326 = arith.mulf %321, %325 : vector<8x128xf32>
    %c0_83 = arith.constant 0 : index
    %c128_84 = arith.constant 128 : index
    %327 = vector.load %arg10[%c0_83, %c128_84] : memref<8x256xf32, #tpu.memory_space<vmem>>, vector<8x128xf32>
    tpu.vector_store %arg10[%c0_83, %c128_84], %326 {strides = array<i32>} : memref<8x256xf32, #tpu.memory_space<vmem>>, vector<8x128xf32>,
    %c40 = arith.constant 40 : index
    %c0_85 = arith.constant 0 : index
    %328 = vector.load %arg9[%c40, %c0_85] : memref<64x512xf32, #tpu.memory_space<vmem>>, vector<8x512xf32>
    %329 = vector.extract_strided_slice %299 {offsets = [0, 0], sizes = [8, 512], strides = [1, 1]} : vector<8x1024xf32> to vector<8x512xf32>
    %330 = arith.addf %328, %329 : vector<8x512xf32>
    %331 = vector.extract_strided_slice %330 {offsets = [0, 0], sizes = [8, 128], strides = [1, 1]} : vector<8x512xf32> to vector<8x128xf32>
    %332 = arith.negf %331 : vector<8x128xf32>
    %333 = math.exp %332 : vector<8x128xf32>
    %cst_86 = arith.constant 1.000000e+00 : f32
    %334 = vector.broadcast %cst_86 : f32 to vector<8x128xf32>
    %335 = arith.addf %334, %333 : vector<8x128xf32>
    %336 = arith.divf %334, %335 : vector<8x128xf32>
    %337 = vector.extract_strided_slice %330 {offsets = [0, 128], sizes = [8, 128], strides = [1, 1]} : vector<8x512xf32> to vector<8x128xf32>
    %338 = arith.negf %337 : vector<8x128xf32>
    %339 = math.exp %338 : vector<8x128xf32>
    %cst_87 = arith.constant 1.000000e+00 : f32
    %340 = vector.broadcast %cst_87 : f32 to vector<8x128xf32>
    %341 = arith.addf %340, %339 : vector<8x128xf32>
    %342 = arith.divf %340, %341 : vector<8x128xf32>
    %343 = vector.extract_strided_slice %330 {offsets = [0, 256], sizes = [8, 128], strides = [1, 1]} : vector<8x512xf32> to vector<8x128xf32>
    %344 = math.tanh %343 : vector<8x128xf32>
    %345 = vector.extract_strided_slice %330 {offsets = [0, 384], sizes = [8, 128], strides = [1, 1]} : vector<8x512xf32> to vector<8x128xf32>
    %346 = arith.negf %345 : vector<8x128xf32>
    %347 = math.exp %346 : vector<8x128xf32>
    %cst_88 = arith.constant 1.000000e+00 : f32
    %348 = vector.broadcast %cst_88 : f32 to vector<8x128xf32>
    %349 = arith.addf %348, %347 : vector<8x128xf32>
    %350 = arith.divf %348, %349 : vector<8x128xf32>
    %351 = arith.mulf %342, %293 : vector<8x128xf32>
    %352 = arith.mulf %336, %344 : vector<8x128xf32>
    %353 = arith.addf %351, %352 : vector<8x128xf32>
    %354 = math.tanh %353 : vector<8x128xf32>
    %355 = arith.mulf %350, %354 : vector<8x128xf32>
    %c0_89 = arith.constant 0 : index
    %c0_90 = arith.constant 0 : index
    %356 = vector.load %arg10[%c0_89, %c0_90] : memref<8x256xf32, #tpu.memory_space<vmem>>, vector<8x128xf32>
    tpu.vector_store %arg10[%c0_89, %c0_90], %355 {strides = array<i32>} : memref<8x256xf32, #tpu.memory_space<vmem>>, vector<8x128xf32>,
    %c0_91 = arith.constant 0 : index
    %c0_92 = arith.constant 0 : index
    %357 = vector.load %arg10[%c0_91, %c0_92] : memref<8x256xf32, #tpu.memory_space<vmem>>, vector<8x256xf32>
    %358 = arith.truncf %357 : vector<8x256xf32> to vector<8x256xbf16>
    %cst_93 = arith.constant dense<0.000000e+00> : vector<8x1024xf32>
    %359 = tpu.matmul %358, %24, %cst_93 {dimension_numbers = #tpu.dot_dimension_numbers<[1], [0], [0], [1], [0, 0, 1, 1], [], []>} : vector<8x256xbf16>, vector<256x1024xbf16>, vector<8x1024xf32> -> vector<8x1024xf32>
    %360 = vector.extract_strided_slice %359 {offsets = [0, 512], sizes = [8, 512], strides = [1, 1]} : vector<8x1024xf32> to vector<8x512xf32>
    %361 = arith.addf %360, %27 : vector<8x512xf32>
    %362 = vector.extract_strided_slice %361 {offsets = [0, 0], sizes = [8, 128], strides = [1, 1]} : vector<8x512xf32> to vector<8x128xf32>
    %363 = arith.negf %362 : vector<8x128xf32>
    %364 = math.exp %363 : vector<8x128xf32>
    %cst_94 = arith.constant 1.000000e+00 : f32
    %365 = vector.broadcast %cst_94 : f32 to vector<8x128xf32>
    %366 = arith.addf %365, %364 : vector<8x128xf32>
    %367 = arith.divf %365, %366 : vector<8x128xf32>
    %368 = vector.extract_strided_slice %361 {offsets = [0, 128], sizes = [8, 128], strides = [1, 1]} : vector<8x512xf32> to vector<8x128xf32>
    %369 = arith.negf %368 : vector<8x128xf32>
    %370 = math.exp %369 : vector<8x128xf32>
    %cst_95 = arith.constant 1.000000e+00 : f32
    %371 = vector.broadcast %cst_95 : f32 to vector<8x128xf32>
    %372 = arith.addf %371, %370 : vector<8x128xf32>
    %373 = arith.divf %371, %372 : vector<8x128xf32>
    %374 = vector.extract_strided_slice %361 {offsets = [0, 256], sizes = [8, 128], strides = [1, 1]} : vector<8x512xf32> to vector<8x128xf32>
    %375 = math.tanh %374 : vector<8x128xf32>
    %376 = vector.extract_strided_slice %361 {offsets = [0, 384], sizes = [8, 128], strides = [1, 1]} : vector<8x512xf32> to vector<8x128xf32>
    %377 = arith.negf %376 : vector<8x128xf32>
    %378 = math.exp %377 : vector<8x128xf32>
    %cst_96 = arith.constant 1.000000e+00 : f32
    %379 = vector.broadcast %cst_96 : f32 to vector<8x128xf32>
    %380 = arith.addf %379, %378 : vector<8x128xf32>
    %381 = arith.divf %379, %380 : vector<8x128xf32>
    %382 = arith.mulf %373, %324 : vector<8x128xf32>
    %383 = arith.mulf %367, %375 : vector<8x128xf32>
    %384 = arith.addf %382, %383 : vector<8x128xf32>
    %385 = math.tanh %384 : vector<8x128xf32>
    %386 = arith.mulf %381, %385 : vector<8x128xf32>
    %c0_97 = arith.constant 0 : index
    %c128_98 = arith.constant 128 : index
    %387 = vector.load %arg10[%c0_97, %c128_98] : memref<8x256xf32, #tpu.memory_space<vmem>>, vector<8x128xf32>
    tpu.vector_store %arg10[%c0_97, %c128_98], %386 {strides = array<i32>} : memref<8x256xf32, #tpu.memory_space<vmem>>, vector<8x128xf32>,
    %c48 = arith.constant 48 : index
    %c0_99 = arith.constant 0 : index
    %388 = vector.load %arg9[%c48, %c0_99] : memref<64x512xf32, #tpu.memory_space<vmem>>, vector<8x512xf32>
    %389 = vector.extract_strided_slice %359 {offsets = [0, 0], sizes = [8, 512], strides = [1, 1]} : vector<8x1024xf32> to vector<8x512xf32>
    %390 = arith.addf %388, %389 : vector<8x512xf32>
    %391 = vector.extract_strided_slice %390 {offsets = [0, 0], sizes = [8, 128], strides = [1, 1]} : vector<8x512xf32> to vector<8x128xf32>
    %392 = arith.negf %391 : vector<8x128xf32>
    %393 = math.exp %392 : vector<8x128xf32>
    %cst_100 = arith.constant 1.000000e+00 : f32
    %394 = vector.broadcast %cst_100 : f32 to vector<8x128xf32>
    %395 = arith.addf %394, %393 : vector<8x128xf32>
    %396 = arith.divf %394, %395 : vector<8x128xf32>
    %397 = vector.extract_strided_slice %390 {offsets = [0, 128], sizes = [8, 128], strides = [1, 1]} : vector<8x512xf32> to vector<8x128xf32>
    %398 = arith.negf %397 : vector<8x128xf32>
    %399 = math.exp %398 : vector<8x128xf32>
    %cst_101 = arith.constant 1.000000e+00 : f32
    %400 = vector.broadcast %cst_101 : f32 to vector<8x128xf32>
    %401 = arith.addf %400, %399 : vector<8x128xf32>
    %402 = arith.divf %400, %401 : vector<8x128xf32>
    %403 = vector.extract_strided_slice %390 {offsets = [0, 256], sizes = [8, 128], strides = [1, 1]} : vector<8x512xf32> to vector<8x128xf32>
    %404 = math.tanh %403 : vector<8x128xf32>
    %405 = vector.extract_strided_slice %390 {offsets = [0, 384], sizes = [8, 128], strides = [1, 1]} : vector<8x512xf32> to vector<8x128xf32>
    %406 = arith.negf %405 : vector<8x128xf32>
    %407 = math.exp %406 : vector<8x128xf32>
    %cst_102 = arith.constant 1.000000e+00 : f32
    %408 = vector.broadcast %cst_102 : f32 to vector<8x128xf32>
    %409 = arith.addf %408, %407 : vector<8x128xf32>
    %410 = arith.divf %408, %409 : vector<8x128xf32>
    %411 = arith.mulf %402, %353 : vector<8x128xf32>
    %412 = arith.mulf %396, %404 : vector<8x128xf32>
    %413 = arith.addf %411, %412 : vector<8x128xf32>
    %414 = math.tanh %413 : vector<8x128xf32>
    %415 = arith.mulf %410, %414 : vector<8x128xf32>
    %c0_103 = arith.constant 0 : index
    %c0_104 = arith.constant 0 : index
    %416 = vector.load %arg10[%c0_103, %c0_104] : memref<8x256xf32, #tpu.memory_space<vmem>>, vector<8x128xf32>
    tpu.vector_store %arg10[%c0_103, %c0_104], %415 {strides = array<i32>} : memref<8x256xf32, #tpu.memory_space<vmem>>, vector<8x128xf32>,
    %c0_105 = arith.constant 0 : index
    %c0_106 = arith.constant 0 : index
    %417 = vector.load %arg10[%c0_105, %c0_106] : memref<8x256xf32, #tpu.memory_space<vmem>>, vector<8x256xf32>
    %418 = arith.truncf %417 : vector<8x256xf32> to vector<8x256xbf16>
    %cst_107 = arith.constant dense<0.000000e+00> : vector<8x1024xf32>
    %419 = tpu.matmul %418, %24, %cst_107 {dimension_numbers = #tpu.dot_dimension_numbers<[1], [0], [0], [1], [0, 0, 1, 1], [], []>} : vector<8x256xbf16>, vector<256x1024xbf16>, vector<8x1024xf32> -> vector<8x1024xf32>
    %420 = vector.extract_strided_slice %419 {offsets = [0, 512], sizes = [8, 512], strides = [1, 1]} : vector<8x1024xf32> to vector<8x512xf32>
    %421 = arith.addf %420, %27 : vector<8x512xf32>
    %422 = vector.extract_strided_slice %421 {offsets = [0, 0], sizes = [8, 128], strides = [1, 1]} : vector<8x512xf32> to vector<8x128xf32>
    %423 = arith.negf %422 : vector<8x128xf32>
    %424 = math.exp %423 : vector<8x128xf32>
    %cst_108 = arith.constant 1.000000e+00 : f32
    %425 = vector.broadcast %cst_108 : f32 to vector<8x128xf32>
    %426 = arith.addf %425, %424 : vector<8x128xf32>
    %427 = arith.divf %425, %426 : vector<8x128xf32>
    %428 = vector.extract_strided_slice %421 {offsets = [0, 128], sizes = [8, 128], strides = [1, 1]} : vector<8x512xf32> to vector<8x128xf32>
    %429 = arith.negf %428 : vector<8x128xf32>
    %430 = math.exp %429 : vector<8x128xf32>
    %cst_109 = arith.constant 1.000000e+00 : f32
    %431 = vector.broadcast %cst_109 : f32 to vector<8x128xf32>
    %432 = arith.addf %431, %430 : vector<8x128xf32>
    %433 = arith.divf %431, %432 : vector<8x128xf32>
    %434 = vector.extract_strided_slice %421 {offsets = [0, 256], sizes = [8, 128], strides = [1, 1]} : vector<8x512xf32> to vector<8x128xf32>
    %435 = math.tanh %434 : vector<8x128xf32>
    %436 = vector.extract_strided_slice %421 {offsets = [0, 384], sizes = [8, 128], strides = [1, 1]} : vector<8x512xf32> to vector<8x128xf32>
    %437 = arith.negf %436 : vector<8x128xf32>
    %438 = math.exp %437 : vector<8x128xf32>
    %cst_110 = arith.constant 1.000000e+00 : f32
    %439 = vector.broadcast %cst_110 : f32 to vector<8x128xf32>
    %440 = arith.addf %439, %438 : vector<8x128xf32>
    %441 = arith.divf %439, %440 : vector<8x128xf32>
    %442 = arith.mulf %433, %384 : vector<8x128xf32>
    %443 = arith.mulf %427, %435 : vector<8x128xf32>
    %444 = arith.addf %442, %443 : vector<8x128xf32>
    %445 = math.tanh %444 : vector<8x128xf32>
    %446 = arith.mulf %441, %445 : vector<8x128xf32>
    %c0_111 = arith.constant 0 : index
    %c128_112 = arith.constant 128 : index
    %447 = vector.load %arg10[%c0_111, %c128_112] : memref<8x256xf32, #tpu.memory_space<vmem>>, vector<8x128xf32>
    tpu.vector_store %arg10[%c0_111, %c128_112], %446 {strides = array<i32>} : memref<8x256xf32, #tpu.memory_space<vmem>>, vector<8x128xf32>,
    %c56 = arith.constant 56 : index
    %c0_113 = arith.constant 0 : index
    %448 = vector.load %arg9[%c56, %c0_113] : memref<64x512xf32, #tpu.memory_space<vmem>>, vector<8x512xf32>
    %449 = vector.extract_strided_slice %419 {offsets = [0, 0], sizes = [8, 512], strides = [1, 1]} : vector<8x1024xf32> to vector<8x512xf32>
    %450 = arith.addf %448, %449 : vector<8x512xf32>
    %451 = vector.extract_strided_slice %450 {offsets = [0, 0], sizes = [8, 128], strides = [1, 1]} : vector<8x512xf32> to vector<8x128xf32>
    %452 = arith.negf %451 : vector<8x128xf32>
    %453 = math.exp %452 : vector<8x128xf32>
    %cst_114 = arith.constant 1.000000e+00 : f32
    %454 = vector.broadcast %cst_114 : f32 to vector<8x128xf32>
    %455 = arith.addf %454, %453 : vector<8x128xf32>
    %456 = arith.divf %454, %455 : vector<8x128xf32>
    %457 = vector.extract_strided_slice %450 {offsets = [0, 128], sizes = [8, 128], strides = [1, 1]} : vector<8x512xf32> to vector<8x128xf32>
    %458 = arith.negf %457 : vector<8x128xf32>
    %459 = math.exp %458 : vector<8x128xf32>
    %cst_115 = arith.constant 1.000000e+00 : f32
    %460 = vector.broadcast %cst_115 : f32 to vector<8x128xf32>
    %461 = arith.addf %460, %459 : vector<8x128xf32>
    %462 = arith.divf %460, %461 : vector<8x128xf32>
    %463 = vector.extract_strided_slice %450 {offsets = [0, 256], sizes = [8, 128], strides = [1, 1]} : vector<8x512xf32> to vector<8x128xf32>
    %464 = math.tanh %463 : vector<8x128xf32>
    %465 = vector.extract_strided_slice %450 {offsets = [0, 384], sizes = [8, 128], strides = [1, 1]} : vector<8x512xf32> to vector<8x128xf32>
    %466 = arith.negf %465 : vector<8x128xf32>
    %467 = math.exp %466 : vector<8x128xf32>
    %cst_116 = arith.constant 1.000000e+00 : f32
    %468 = vector.broadcast %cst_116 : f32 to vector<8x128xf32>
    %469 = arith.addf %468, %467 : vector<8x128xf32>
    %470 = arith.divf %468, %469 : vector<8x128xf32>
    %471 = arith.mulf %462, %413 : vector<8x128xf32>
    %472 = arith.mulf %456, %464 : vector<8x128xf32>
    %473 = arith.addf %471, %472 : vector<8x128xf32>
    %474 = math.tanh %473 : vector<8x128xf32>
    %475 = arith.mulf %470, %474 : vector<8x128xf32>
    %c0_117 = arith.constant 0 : index
    %c0_118 = arith.constant 0 : index
    %476 = vector.load %arg10[%c0_117, %c0_118] : memref<8x256xf32, #tpu.memory_space<vmem>>, vector<8x128xf32>
    tpu.vector_store %arg10[%c0_117, %c0_118], %475 {strides = array<i32>} : memref<8x256xf32, #tpu.memory_space<vmem>>, vector<8x128xf32>,
    %c0_119 = arith.constant 0 : index
    %c0_120 = arith.constant 0 : index
    %477 = vector.load %arg10[%c0_119, %c0_120] : memref<8x256xf32, #tpu.memory_space<vmem>>, vector<8x256xf32>
    %478 = arith.truncf %477 : vector<8x256xf32> to vector<8x256xbf16>
    %479 = vector.extract_strided_slice %24 {offsets = [0, 512], sizes = [256, 512], strides = [1, 1]} : vector<256x1024xbf16> to vector<256x512xbf16>
    %cst_121 = arith.constant dense<0.000000e+00> : vector<8x512xf32>
    %480 = tpu.matmul %478, %479, %cst_121 {dimension_numbers = #tpu.dot_dimension_numbers<[1], [0], [0], [1], [0, 0, 1, 1], [], []>} : vector<8x256xbf16>, vector<256x512xbf16>, vector<8x512xf32> -> vector<8x512xf32>
    %481 = arith.addf %480, %27 : vector<8x512xf32>
    %482 = vector.extract_strided_slice %481 {offsets = [0, 0], sizes = [8, 128], strides = [1, 1]} : vector<8x512xf32> to vector<8x128xf32>
    %483 = arith.negf %482 : vector<8x128xf32>
    %484 = math.exp %483 : vector<8x128xf32>
    %cst_122 = arith.constant 1.000000e+00 : f32
    %485 = vector.broadcast %cst_122 : f32 to vector<8x128xf32>
    %486 = arith.addf %485, %484 : vector<8x128xf32>
    %487 = arith.divf %485, %486 : vector<8x128xf32>
    %488 = vector.extract_strided_slice %481 {offsets = [0, 128], sizes = [8, 128], strides = [1, 1]} : vector<8x512xf32> to vector<8x128xf32>
    %489 = arith.negf %488 : vector<8x128xf32>
    %490 = math.exp %489 : vector<8x128xf32>
    %cst_123 = arith.constant 1.000000e+00 : f32
    %491 = vector.broadcast %cst_123 : f32 to vector<8x128xf32>
    %492 = arith.addf %491, %490 : vector<8x128xf32>
    %493 = arith.divf %491, %492 : vector<8x128xf32>
    %494 = vector.extract_strided_slice %481 {offsets = [0, 256], sizes = [8, 128], strides = [1, 1]} : vector<8x512xf32> to vector<8x128xf32>
    %495 = math.tanh %494 : vector<8x128xf32>
    %496 = vector.extract_strided_slice %481 {offsets = [0, 384], sizes = [8, 128], strides = [1, 1]} : vector<8x512xf32> to vector<8x128xf32>
    %497 = arith.negf %496 : vector<8x128xf32>
    %498 = math.exp %497 : vector<8x128xf32>
    %cst_124 = arith.constant 1.000000e+00 : f32
    %499 = vector.broadcast %cst_124 : f32 to vector<8x128xf32>
    %500 = arith.addf %499, %498 : vector<8x128xf32>
    %501 = arith.divf %499, %500 : vector<8x128xf32>
    %502 = arith.mulf %493, %444 : vector<8x128xf32>
    %503 = arith.mulf %487, %495 : vector<8x128xf32>
    %504 = arith.addf %502, %503 : vector<8x128xf32>
    %505 = math.tanh %504 : vector<8x128xf32>
    %506 = arith.mulf %501, %505 : vector<8x128xf32>
    %c0_125 = arith.constant 0 : index
    %c0_126 = arith.constant 0 : index
    %507 = vector.load %arg6[%c0_125, %c0_126] : memref<1x128xf32, #tpu.memory_space<vmem>>, vector<1x128xf32>
    %508 = vector.broadcast %507 : vector<1x128xf32> to vector<8x128xf32>
    %509 = arith.mulf %506, %508 : vector<8x128xf32>
    %cst_127 = arith.constant dense<0.000000e+00> : vector<8xf32>
    %510 = vector.multi_reduction <add>, %509, %cst_127 [1] : vector<8x128xf32> to vector<8xf32>
    %511 = vector.shape_cast %510 : vector<8xf32> to vector<8x1xf32>
    %c0_128 = arith.constant 0 : index
    %c0_129 = arith.constant 0 : index
    %512 = vector.load %arg7[%c0_128, %c0_129] : memref<1x1xf32, #tpu.memory_space<vmem>>, vector<1x1xf32>
    %513 = vector.broadcast %512 : vector<1x1xf32> to vector<8x1xf32>
    %514 = arith.addf %511, %513 : vector<8x1xf32>
    %c0_130 = arith.constant 0 : index
    %c0_131 = arith.constant 0 : index
    %515 = vector.load %arg8[%c0_130, %c0_131] : memref<8x1xf32, #tpu.memory_space<vmem>>, vector<8x1xf32>
    tpu.vector_store %arg8[%c0_130, %c0_131], %514 {strides = array<i32>} : memref<8x1xf32, #tpu.memory_space<vmem>>, vector<8x1xf32>,
    return
  }
  func.func @transform_0(%arg0: i32) -> (i32, i32, i32) {
    %c0_i32 = arith.constant 0 : i32
    %c0_i32_0 = arith.constant 0 : i32
    %c0_i32_1 = arith.constant 0 : i32
    return %arg0, %c0_i32, %c0_i32_0 : i32, i32, i32
  }
  func.func @transform_1(%arg0: i32) -> (i32, i32) {
    %c0_i32 = arith.constant 0 : i32
    %c0_i32_0 = arith.constant 0 : i32
    %c0_i32_1 = arith.constant 0 : i32
    return %c0_i32, %c0_i32_0 : i32, i32
  }
  func.func @transform_2(%arg0: i32) -> (i32, i32) {
    %c0_i32 = arith.constant 0 : i32
    %c0_i32_0 = arith.constant 0 : i32
    %c0_i32_1 = arith.constant 0 : i32
    return %c0_i32, %c0_i32_0 : i32, i32
  }
  func.func @transform_3(%arg0: i32) -> (i32, i32) {
    %c0_i32 = arith.constant 0 : i32
    %c0_i32_0 = arith.constant 0 : i32
    %c0_i32_1 = arith.constant 0 : i32
    return %c0_i32, %c0_i32_0 : i32, i32
  }
  func.func @transform_4(%arg0: i32) -> (i32, i32) {
    %c0_i32 = arith.constant 0 : i32
    %c0_i32_0 = arith.constant 0 : i32
    %c0_i32_1 = arith.constant 0 : i32
    return %c0_i32, %c0_i32_0 : i32, i32
  }
  func.func @transform_5(%arg0: i32) -> (i32, i32) {
    %c0_i32 = arith.constant 0 : i32
    %c0_i32_0 = arith.constant 0 : i32
    %c0_i32_1 = arith.constant 0 : i32
    return %c0_i32, %c0_i32_0 : i32, i32
  }
  func.func @transform_6(%arg0: i32) -> (i32, i32) {
    %c0_i32 = arith.constant 0 : i32
    %c0_i32_0 = arith.constant 0 : i32
    %c0_i32_1 = arith.constant 0 : i32
    return %c0_i32, %c0_i32_0 : i32, i32
  }
  func.func @transform_7(%arg0: i32) -> (i32, i32) {
    %c0_i32 = arith.constant 0 : i32
    %c0_i32_0 = arith.constant 0 : i32
    return %arg0, %c0_i32 : i32, i32
  }
}

</mosaic_0001>

<llo_original>
// kernel: tpu_custom_call.1
$region0: #{tpu_custom_call.1}
  #allocation0 [shape = 'u32[]', space=smem, size = 0x4, offset = 0x4, fixed_abs, tag = 'smem constant byte address 0x4 - core index']
  #allocation1 [shape = 'u32[144,128]{1,0:T(1,128)}', space=vmem, size = 0x12000, scoped, tag = 'internal scratch']
  #allocation2 [shape = 'f32[64,512]{1,0:T(8,128)}', space=vmem, size = 0x20000, scoped, tag = 'scratch operand']
  #allocation3 [shape = 'f32[8,256]{1,0:T(8,128)}', space=vmem, size = 0x2000, scoped, tag = 'scratch operand']
  #allocation4 [shape = 'f32[1,1]{1,0:T(1,128)S(1)}', space=vmem, size = 0x200, scoped, tag = 'scoped memory for tpu_custom_call.1']
  %s0 = inlined_call_operand.vmem [shape: f32[8,8,5], index: 0, kind: input, shape index: {}]
  %s1 = inlined_call_operand.vmem [shape: f32[5,512], index: 1, kind: input, shape index: {}]
  %s2 = inlined_call_operand.vmem [shape: f32[1,512], index: 2, kind: input, shape index: {}]
  %s3 = inlined_call_operand.hbm [shape: bf16[256,1024], index: 3, kind: input, shape index: {}]
  %s4 = inlined_call_operand.vmem [shape: f32[1,512], index: 4, kind: input, shape index: {}]
  %s5 = inlined_call_operand.vmem [shape: f32[1,128], index: 5, kind: input, shape index: {}]
  %s6 = inlined_call_operand.<no memory space> [shape: f32[1,1], index: 6, kind: input, shape index: {}]
  %s7 = inlined_call_operand.vmem [shape: f32[8,1], index: 7, kind: output, shape index: {}]
  %s8 = sld [smem:[#allocation0]]
  $region42: #{tpu_custom_call.1} parent=0
    _
  %s10 = ssub.s32 1, %s8
  %s11 = scalar_select 0, %s10, %s8
  %v12 = vstv %s6
  %13 = vst [vmem:[#allocation4] sm:$0x1] %v12
  $region1: #{tpu_custom_call.1} parent=0
    #allocation5 [shape = 'u8[524288]{0}', space=vmem, size = 0x80000, scoped, tag = 'input window, operand 3, single buffered']
    #allocation6 [shape = 's32[1]{0}', space=sflag, size = 0x4, scoped, tag = 'scoped memory for tpu_custom_call.1']
    %14 = vsyncpa [#allocation6], 0
    // Predicated region
    $region2: #{tpu_custom_call.1} parent=1 // pred_check
      _
    $region3: #{tpu_custom_call.1} parent=1 // pred_check_branch
      %16 = sbr.rel (0) target = $region5
    $region4: #{tpu_custom_call.1} parent=1 // pred_region
      _
    $region5: #{tpu_custom_call.1} parent=1 // pred_fallthru
      _
    // Predicated region
    $region6: #{tpu_custom_call.1} parent=1 // pred_check
      _
    $region7: #{tpu_custom_call.1} parent=1 // pred_check_branch
      %18 = sbr.rel (0) target = $region9
    $region8: #{tpu_custom_call.1} parent=1 // pred_region
      _
    $region9: #{tpu_custom_call.1} parent=1 // pred_fallthru
      _
    // Predicated region
    $region10: #{tpu_custom_call.1} parent=1 // pred_check
      _
    $region11: #{tpu_custom_call.1} parent=1 // pred_check_branch
      %20 = sbr.rel (0) target = $region13
    $region12: #{tpu_custom_call.1} parent=1 // pred_region
      _
    $region13: #{tpu_custom_call.1} parent=1 // pred_fallthru
      _
    // Predicated region
    $region14: #{tpu_custom_call.1} parent=1 // pred_check
      _
    $region15: #{tpu_custom_call.1} parent=1 // pred_check_branch
      %22 = sbr.rel (0) target = $region17
    $region16: #{tpu_custom_call.1} parent=1 // pred_region
      %s24 = ssub.s32 16384, 16384
      %25 = vsyncadd [#allocation6], %s24
      %s26 = sshll.u32 [#allocation5], 4
      %s27 = int_to_ptr.vmem [resolvable:$true] %s26
      %32 = dma.hbm_to_vmem [thread:$0]  %s3, 16384, %s27, [#allocation6], 512, 512, 32
    $region17: #{tpu_custom_call.1} parent=1 // pred_fallthru
      _
    // Predicated region
    $region18: #{tpu_custom_call.1} parent=1 // pred_check
      _
    $region19: #{tpu_custom_call.1} parent=1 // pred_check_branch
      %34 = sbr.rel (0) target = $region21
    $region20: #{tpu_custom_call.1} parent=1 // pred_region
      _
    $region21: #{tpu_custom_call.1} parent=1 // pred_fallthru
      _
    // Predicated region
    $region22: #{tpu_custom_call.1} parent=1 // pred_check
      _
    $region23: #{tpu_custom_call.1} parent=1 // pred_check_branch
      %36 = sbr.rel (0) target = $region25
    $region24: #{tpu_custom_call.1} parent=1 // pred_region
      _
    $region25: #{tpu_custom_call.1} parent=1 // pred_fallthru
      _
    // Predicated region
    $region26: #{tpu_custom_call.1} parent=1 // pred_check
      _
    $region27: #{tpu_custom_call.1} parent=1 // pred_check_branch
      %38 = sbr.rel (0) target = $region29
    $region28: #{tpu_custom_call.1} parent=1 // pred_region
      _
    $region29: #{tpu_custom_call.1} parent=1 // pred_fallthru
      _
    // Predicated region
    $region30: #{tpu_custom_call.1} parent=1 // pred_check
      _
    $region31: #{tpu_custom_call.1} parent=1 // pred_check_branch
      %40 = sbr.rel (0) target = $region33
    $region32: #{tpu_custom_call.1} parent=1 // pred_region
      %41 = dma.done [#allocation6], 16384
    $region33: #{tpu_custom_call.1} parent=1 // pred_fallthru
      _
    %v42 = vld [vmem:[%s0] sm:$0xff]
    %v43 = vld [vmem:[%s0 + $0x8] sm:$0xff]
    %v44 = vld [vmem:[%s0 + $0x10] sm:$0xff]
    %v45 = vld [vmem:[%s0 + $0x18] sm:$0xff]
    %v46 = vld [vmem:[%s0 + $0x20] sm:$0xff]
    %v47 = vld [vmem:[%s0 + $0x28] sm:$0xff]
    %v48 = vld [vmem:[%s0 + $0x30] sm:$0xff]
    %v49 = vld [vmem:[%s0 + $0x38] sm:$0xff]
    %v58 = vrot.slane %v43, 7
    %vm59 = vcmask 1041409
    %v60 = vsel %vm59, %v58, %v42
    %v61 = vrot.slane %v44, 6
    %vm62 = vcmask 1042434
    %v63 = vsel %vm62, %v61, %v60
    %v64 = vrot.slane %v45, 5
    %vm65 = vcmask 1043459
    %v66 = vsel %vm65, %v64, %v63
    %v67 = vrot.slane %v46, 4
    %vm68 = vcmask 1044484
    %v69 = vsel %vm68, %v67, %v66
    %v70 = vrot.slane %v47, 3
    %vm71 = vcmask 1045509
    %v72 = vsel %vm71, %v70, %v69
    %v73 = vrot.slane %v48, 2
    %vm74 = vcmask 1046534
    %v75 = vsel %vm74, %v73, %v72
    %v76 = vrot.slane %v49, 1
    %vm77 = vcmask 1047559
    %v78 = vsel %vm77, %v76, %v75
    %v79 = vrot.slane %v42, 1
    %v80 = vsel %vm59, %v43, %v79
    %v81 = vrot.slane %v44, 7
    %v82 = vsel %vm62, %v81, %v80
    %v83 = vrot.slane %v45, 6
    %v84 = vsel %vm65, %v83, %v82
    %v85 = vrot.slane %v46, 5
    %v86 = vsel %vm68, %v85, %v84
    %v87 = vrot.slane %v47, 4
    %v88 = vsel %vm71, %v87, %v86
    %v89 = vrot.slane %v48, 3
    %v90 = vsel %vm74, %v89, %v88
    %v91 = vrot.slane %v49, 2
    %v92 = vsel %vm77, %v91, %v90
    %v93 = vrot.slane %v42, 2
    %v94 = vrot.slane %v43, 1
    %v95 = vsel %vm59, %v94, %v93
    %v96 = vsel %vm62, %v44, %v95
    %v97 = vrot.slane %v45, 7
    %v98 = vsel %vm65, %v97, %v96
    %v99 = vrot.slane %v46, 6
    %v100 = vsel %vm68, %v99, %v98
    %v101 = vrot.slane %v47, 5
    %v102 = vsel %vm71, %v101, %v100
    %v103 = vrot.slane %v48, 4
    %v104 = vsel %vm74, %v103, %v102
    %v105 = vrot.slane %v49, 3
    %v106 = vsel %vm77, %v105, %v104
    %v107 = vrot.slane %v42, 3
    %v108 = vrot.slane %v43, 2
    %v109 = vsel %vm59, %v108, %v107
    %v110 = vrot.slane %v44, 1
    %v111 = vsel %vm62, %v110, %v109
    %v112 = vsel %vm65, %v45, %v111
    %v113 = vrot.slane %v46, 7
    %v114 = vsel %vm68, %v113, %v112
    %v115 = vrot.slane %v47, 6
    %v116 = vsel %vm71, %v115, %v114
    %v117 = vrot.slane %v48, 5
    %v118 = vsel %vm74, %v117, %v116
    %v119 = vrot.slane %v49, 4
    %v120 = vsel %vm77, %v119, %v118
    %v121 = vrot.slane %v42, 4
    %v122 = vrot.slane %v43, 3
    %v123 = vsel %vm59, %v122, %v121
    %v124 = vrot.slane %v44, 2
    %v125 = vsel %vm62, %v124, %v123
    %v126 = vrot.slane %v45, 1
    %v127 = vsel %vm65, %v126, %v125
    %v128 = vsel %vm68, %v46, %v127
    %v129 = vrot.slane %v47, 7
    %v130 = vsel %vm71, %v129, %v128
    %v131 = vrot.slane %v48, 6
    %v132 = vsel %vm74, %v131, %v130
    %v133 = vrot.slane %v49, 5
    %v134 = vsel %vm77, %v133, %v132
    %v135 = vrot.slane %v42, 5
    %v136 = vrot.slane %v43, 4
    %v137 = vsel %vm59, %v136, %v135
    %v138 = vrot.slane %v44, 3
    %v139 = vsel %vm62, %v138, %v137
    %v140 = vrot.slane %v45, 2
    %v141 = vsel %vm65, %v140, %v139
    %v142 = vrot.slane %v46, 1
    %v143 = vsel %vm68, %v142, %v141
    %v144 = vsel %vm71, %v47, %v143
    %v145 = vrot.slane %v48, 7
    %v146 = vsel %vm74, %v145, %v144
    %v147 = vrot.slane %v49, 6
    %v148 = vsel %vm77, %v147, %v146
    %v149 = vrot.slane %v42, 6
    %v150 = vrot.slane %v43, 5
    %v151 = vsel %vm59, %v150, %v149
    %v152 = vrot.slane %v44, 4
    %v153 = vsel %vm62, %v152, %v151
    %v154 = vrot.slane %v45, 3
    %v155 = vsel %vm65, %v154, %v153
    %v156 = vrot.slane %v46, 2
    %v157 = vsel %vm68, %v156, %v155
    %v158 = vrot.slane %v47, 1
    %v159 = vsel %vm71, %v158, %v157
    %v160 = vsel %vm74, %v48, %v159
    %v161 = vrot.slane %v49, 7
    %v162 = vsel %vm77, %v161, %v160
    %v163 = vrot.slane %v42, 7
    %v164 = vrot.slane %v43, 6
    %v165 = vsel %vm59, %v164, %v163
    %v166 = vrot.slane %v44, 5
    %v167 = vsel %vm62, %v166, %v165
    %v168 = vrot.slane %v45, 4
    %v169 = vsel %vm65, %v168, %v167
    %v170 = vrot.slane %v46, 3
    %v171 = vsel %vm68, %v170, %v169
    %v172 = vrot.slane %v47, 2
    %v173 = vsel %vm71, %v172, %v171
    %v174 = vrot.slane %v48, 1
    %v175 = vsel %vm74, %v174, %v173
    %v176 = vsel %vm77, %v49, %v175
    %v177 = vld [vmem:[%s1] sm:$0x1f]
    %v178 = vld [vmem:[%s1 + $0x8] sm:$0x1f]
    %v179 = vld [vmem:[%s1 + $0x10] sm:$0x1f]
    %v180 = vld [vmem:[%s1 + $0x18] sm:$0x1f]
    %v181 = vld [vmem:[%s2] sm:$0xf]
    %v183 = vlaneseq
    %v184 = vshrl.u32 %v183, 7
    %v185 = vsub.s32 0, %v184
    %v186 = vrot.slane %v181, %v185
    %v187 = vlaneseq
    %v188 = vshrl.u32 %v187, 7
    %v189 = vsub.s32 1, %v188
    %v190 = vrot.slane %v181, %v189
    %v191 = vlaneseq
    %v192 = vshrl.u32 %v191, 7
    %v193 = vsub.s32 2, %v192
    %v194 = vrot.slane %v181, %v193
    %v195 = vlaneseq
    %v196 = vshrl.u32 %v195, 7
    %v197 = vsub.s32 3, %v196
    %v198 = vrot.slane %v181, %v197
    %vm203 = vcmask 39936
    %v204 = vsel %vm203, %v78, 0
    %v206 = vsel %vm203, %v92, 0
    %v208 = vsel %vm203, %v106, 0
    %v210 = vsel %vm203, %v120, 0
    %v212 = vsel %vm203, %v134, 0
    %v214 = vsel %vm203, %v148, 0
    %v216 = vsel %vm203, %v162, 0
    %v218 = vsel %vm203, %v176, 0
    %vm220 = vcmask 1044480
    %v222 = vsel %vm220, %v177, 0
    %v225 = vsel %vm220, %v178, 0
    %v228 = vsel %vm220, %v179, 0
    %v231 = vsel %vm220, %v180, 0
    %233 = vmatprep.subr.mxu0 %v225
    %234 = vmatpush1.msra.mxu0 %v222
    %235 = vmatprep.subr.mxu0 0.0
    %236 = vmatpush1.msra.mxu0 0.0
    %237 = vmatprep.subr.mxu0 0.0
    %238 = vmatpush1.msra.mxu0 0.0
    %239 = vmatprep.subr.mxu0 0.0
    %240 = vmatpush1.msra.mxu0 0.0
    %241 = vmatprep.subr.mxu0 0.0
    %242 = vmatpush1.msra.mxu0 0.0
    %243 = vmatprep.subr.mxu0 0.0
    %244 = vmatpush1.msra.mxu0 0.0
    %245 = vmatprep.subr.mxu0 0.0
    %246 = vmatpush1.msra.mxu0 0.0
    %247 = vmatprep.subr.mxu0 0.0
    %248 = vmatpush1.msra.mxu0 0.0
    %249 = vmatprep.subr.mxu0 0.0
    %250 = vmatpush1.msra.mxu0 0.0
    %251 = vmatprep.subr.mxu0 0.0
    %252 = vmatpush1.msra.mxu0 0.0
    %253 = vmatprep.subr.mxu0 0.0
    %254 = vmatpush1.msra.mxu0 0.0
    %255 = vmatprep.subr.mxu0 0.0
    %256 = vmatpush1.msra.mxu0 0.0
    %257 = vmatprep.subr.mxu0 0.0
    %258 = vmatpush1.msra.mxu0 0.0
    %259 = vmatprep.subr.mxu0 0.0
    %260 = vmatpush1.msra.mxu0 0.0
    %261 = vmatprep.subr.mxu0 0.0
    %262 = vmatpush1.msra.mxu0 0.0
    %263 = vmatprep.subr.mxu0 0.0
    %264 = vmatpush1.msra.mxu0 0.0
    %265 = vmatprep.subr.mxu0 0.0
    %266 = vmatpush1.msra.mxu0 0.0
    %267 = vmatprep.subr.mxu0 0.0
    %268 = vmatpush1.msra.mxu0 0.0
    %269 = vmatprep.subr.mxu0 0.0
    %270 = vmatpush1.msra.mxu0 0.0
    %271 = vmatprep.subr.mxu0 0.0
    %272 = vmatpush1.msra.mxu0 0.0
    %273 = vmatprep.subr.mxu0 0.0
    %274 = vmatpush1.msra.mxu0 0.0
    %275 = vmatprep.subr.mxu0 0.0
    %276 = vmatpush1.msra.mxu0 0.0
    %277 = vmatprep.subr.mxu0 0.0
    %278 = vmatpush1.msra.mxu0 0.0
    %279 = vmatprep.subr.mxu0 0.0
    %280 = vmatpush1.msra.mxu0 0.0
    %281 = vmatprep.subr.mxu0 0.0
    %282 = vmatpush1.msra.mxu0 0.0
    %283 = vmatprep.subr.mxu0 0.0
    %284 = vmatpush1.msra.mxu0 0.0
    %285 = vmatprep.subr.mxu0 0.0
    %286 = vmatpush1.msra.mxu0 0.0
    %287 = vmatprep.subr.mxu0 0.0
    %288 = vmatpush1.msra.mxu0 0.0
    %289 = vmatprep.subr.mxu0 0.0
    %290 = vmatpush1.msra.mxu0 0.0
    %291 = vmatprep.subr.mxu0 0.0
    %292 = vmatpush1.msra.mxu0 0.0
    %293 = vmatprep.subr.mxu0 0.0
    %294 = vmatpush1.msra.mxu0 0.0
    %295 = vmatprep.subr.mxu0 0.0
    %296 = vmatpush1.msra.mxu0 0.0
    %297 = vmatprep.mubr.f32.mxu0 0.0
    %298 = vmatmul.mubr.f32.gmra.mrb[0].mxu0 %v204
    %v299 = vpop.f32.mrb[0].mxu0
    %v300 = vadd.f32 %v186, %v299
    %v301 = vpop.f32.mrb[0].mxu0
    %v302 = vadd.f32 %v190, %v301
    %303 = vmatprep.mubr.f32.mxu0 0.0
    %304 = vmatmul.mubr.f32.gmra.mrb[0].mxu0 %v206
    %v305 = vpop.f32.mrb[0].mxu0
    %v306 = vadd.f32 %v186, %v305
    %v307 = vpop.f32.mrb[0].mxu0
    %v308 = vadd.f32 %v190, %v307
    %309 = vmatprep.mubr.f32.mxu0 0.0
    %310 = vmatmul.mubr.f32.gmra.mrb[0].mxu0 %v208
    %v311 = vpop.f32.mrb[0].mxu0
    %v312 = vadd.f32 %v186, %v311
    %v313 = vpop.f32.mrb[0].mxu0
    %v314 = vadd.f32 %v190, %v313
    %315 = vmatprep.mubr.f32.mxu0 0.0
    %316 = vmatmul.mubr.f32.gmra.mrb[0].mxu0 %v210
    %v317 = vpop.f32.mrb[0].mxu0
    %v318 = vadd.f32 %v186, %v317
    %v319 = vpop.f32.mrb[0].mxu0
    %v320 = vadd.f32 %v190, %v319
    %321 = vmatprep.mubr.f32.mxu0 0.0
    %322 = vmatmul.mubr.f32.gmra.mrb[0].mxu0 %v212
    %v323 = vpop.f32.mrb[0].mxu0
    %v324 = vadd.f32 %v186, %v323
    %v325 = vpop.f32.mrb[0].mxu0
    %v326 = vadd.f32 %v190, %v325
    %327 = vmatprep.mubr.f32.mxu0 0.0
    %328 = vmatmul.mubr.f32.gmra.mrb[0].mxu0 %v214
    %v329 = vpop.f32.mrb[0].mxu0
    %v330 = vadd.f32 %v186, %v329
    %v331 = vpop.f32.mrb[0].mxu0
    %v332 = vadd.f32 %v190, %v331
    %333 = vmatprep.mubr.f32.mxu0 0.0
    %334 = vmatmul.mubr.f32.gmra.mrb[0].mxu0 %v216
    %v335 = vpop.f32.mrb[0].mxu0
    %v336 = vadd.f32 %v186, %v335
    %v337 = vpop.f32.mrb[0].mxu0
    %v338 = vadd.f32 %v190, %v337
    %339 = vmatprep.mubr.f32.mxu0 0.0
    %340 = vmatmul.mubr.f32.gmra.mrb[0].mxu0 %v218
    %v341 = vpop.f32.mrb[0].mxu0
    %v342 = vadd.f32 %v186, %v341
    %v343 = vpop.f32.mrb[0].mxu0
    %v344 = vadd.f32 %v190, %v343
    %345 = vdwg.mxu0
    %346 = vmatprep.subr.mxu0 %v231
    %347 = vmatpush1.msra.mxu0 %v228
    %348 = vmatprep.subr.mxu0 0.0
    %349 = vmatpush1.msra.mxu0 0.0
    %350 = vmatprep.subr.mxu0 0.0
    %351 = vmatpush1.msra.mxu0 0.0
    %352 = vmatprep.subr.mxu0 0.0
    %353 = vmatpush1.msra.mxu0 0.0
    %354 = vmatprep.subr.mxu0 0.0
    %355 = vmatpush1.msra.mxu0 0.0
    %356 = vmatprep.subr.mxu0 0.0
    %357 = vmatpush1.msra.mxu0 0.0
    %358 = vmatprep.subr.mxu0 0.0
    %359 = vmatpush1.msra.mxu0 0.0
    %360 = vmatprep.subr.mxu0 0.0
    %361 = vmatpush1.msra.mxu0 0.0
    %362 = vmatprep.subr.mxu0 0.0
    %363 = vmatpush1.msra.mxu0 0.0
    %364 = vmatprep.subr.mxu0 0.0
    %365 = vmatpush1.msra.mxu0 0.0
    %366 = vmatprep.subr.mxu0 0.0
    %367 = vmatpush1.msra.mxu0 0.0
    %368 = vmatprep.subr.mxu0 0.0
    %369 = vmatpush1.msra.mxu0 0.0
    %370 = vmatprep.subr.mxu0 0.0
    %371 = vmatpush1.msra.mxu0 0.0
    %372 = vmatprep.subr.mxu0 0.0
    %373 = vmatpush1.msra.mxu0 0.0
    %374 = vmatprep.subr.mxu0 0.0
    %375 = vmatpush1.msra.mxu0 0.0
    %376 = vmatprep.subr.mxu0 0.0
    %377 = vmatpush1.msra.mxu0 0.0
    %378 = vmatprep.subr.mxu0 0.0
    %379 = vmatpush1.msra.mxu0 0.0
    %380 = vmatprep.subr.mxu0 0.0
    %381 = vmatpush1.msra.mxu0 0.0
    %382 = vmatprep.subr.mxu0 0.0
    %383 = vmatpush1.msra.mxu0 0.0
    %384 = vmatprep.subr.mxu0 0.0
    %385 = vmatpush1.msra.mxu0 0.0
    %386 = vmatprep.subr.mxu0 0.0
    %387 = vmatpush1.msra.mxu0 0.0
    %388 = vmatprep.subr.mxu0 0.0
    %389 = vmatpush1.msra.mxu0 0.0
    %390 = vmatprep.subr.mxu0 0.0
    %391 = vmatpush1.msra.mxu0 0.0
    %392 = vmatprep.subr.mxu0 0.0
    %393 = vmatpush1.msra.mxu0 0.0
    %394 = vmatprep.subr.mxu0 0.0
    %395 = vmatpush1.msra.mxu0 0.0
    %396 = vmatprep.subr.mxu0 0.0
    %397 = vmatpush1.msra.mxu0 0.0
    %398 = vmatprep.subr.mxu0 0.0
    %399 = vmatpush1.msra.mxu0 0.0
    %400 = vmatprep.subr.mxu0 0.0
    %401 = vmatpush1.msra.mxu0 0.0
    %402 = vmatprep.subr.mxu0 0.0
    %403 = vmatpush1.msra.mxu0 0.0
    %404 = vmatprep.subr.mxu0 0.0
    %405 = vmatpush1.msra.mxu0 0.0
    %406 = vmatprep.subr.mxu0 0.0
    %407 = vmatpush1.msra.mxu0 0.0
    %408 = vmatprep.subr.mxu0 0.0
    %409 = vmatpush1.msra.mxu0 0.0
    %410 = vmatprep.mubr.f32.mxu0 0.0
    %411 = vmatmul.mubr.f32.gmra.mrb[0].mxu0 %v204
    %v412 = vpop.f32.mrb[0].mxu0
    %v413 = vadd.f32 %v194, %v412
    %v414 = vpop.f32.mrb[0].mxu0
    %v415 = vadd.f32 %v198, %v414
    %416 = vmatprep.mubr.f32.mxu0 0.0
    %417 = vmatmul.mubr.f32.gmra.mrb[0].mxu0 %v206
    %v418 = vpop.f32.mrb[0].mxu0
    %v419 = vadd.f32 %v194, %v418
    %v420 = vpop.f32.mrb[0].mxu0
    %v421 = vadd.f32 %v198, %v420
    %422 = vmatprep.mubr.f32.mxu0 0.0
    %423 = vmatmul.mubr.f32.gmra.mrb[0].mxu0 %v208
    %v424 = vpop.f32.mrb[0].mxu0
    %v425 = vadd.f32 %v194, %v424
    %v426 = vpop.f32.mrb[0].mxu0
    %v427 = vadd.f32 %v198, %v426
    %428 = vmatprep.mubr.f32.mxu0 0.0
    %429 = vmatmul.mubr.f32.gmra.mrb[0].mxu0 %v210
    %v430 = vpop.f32.mrb[0].mxu0
    %v431 = vadd.f32 %v194, %v430
    %v432 = vpop.f32.mrb[0].mxu0
    %v433 = vadd.f32 %v198, %v432
    %434 = vmatprep.mubr.f32.mxu0 0.0
    %435 = vmatmul.mubr.f32.gmra.mrb[0].mxu0 %v212
    %v436 = vpop.f32.mrb[0].mxu0
    %v437 = vadd.f32 %v194, %v436
    %v438 = vpop.f32.mrb[0].mxu0
    %v439 = vadd.f32 %v198, %v438
    %440 = vmatprep.mubr.f32.mxu0 0.0
    %441 = vmatmul.mubr.f32.gmra.mrb[0].mxu0 %v214
    %v442 = vpop.f32.mrb[0].mxu0
    %v443 = vadd.f32 %v194, %v442
    %v444 = vpop.f32.mrb[0].mxu0
    %v445 = vadd.f32 %v198, %v444
    %446 = vmatprep.mubr.f32.mxu0 0.0
    %447 = vmatmul.mubr.f32.gmra.mrb[0].mxu0 %v216
    %v448 = vpop.f32.mrb[0].mxu0
    %v449 = vadd.f32 %v194, %v448
    %v450 = vpop.f32.mrb[0].mxu0
    %v451 = vadd.f32 %v198, %v450
    %452 = vmatprep.mubr.f32.mxu0 0.0
    %453 = vmatmul.mubr.f32.gmra.mrb[0].mxu0 %v218
    %v454 = vpop.f32.mrb[0].mxu0
    %v455 = vadd.f32 %v194, %v454
    %v456 = vpop.f32.mrb[0].mxu0
    %v457 = vadd.f32 %v198, %v456
    %458 = vdwg.mxu0
    %459 = vst [vmem:[#allocation2] sm:$0xff] %v300
    %460 = vst [vmem:[#allocation2 + $0x8] sm:$0xff] %v302
    %461 = vst [vmem:[#allocation2 + $0x10] sm:$0xff] %v413
    %462 = vst [vmem:[#allocation2 + $0x18] sm:$0xff] %v415
    %463 = vst [vmem:[#allocation2 + $0x20] sm:$0xff] %v306
    %464 = vst [vmem:[#allocation2 + $0x28] sm:$0xff] %v308
    %465 = vst [vmem:[#allocation2 + $0x30] sm:$0xff] %v419
    %466 = vst [vmem:[#allocation2 + $0x38] sm:$0xff] %v421
    %467 = vst [vmem:[#allocation2 + $0x40] sm:$0xff] %v312
    %468 = vst [vmem:[#allocation2 + $0x48] sm:$0xff] %v314
    %469 = vst [vmem:[#allocation2 + $0x50] sm:$0xff] %v425
    %470 = vst [vmem:[#allocation2 + $0x58] sm:$0xff] %v427
    %471 = vst [vmem:[#allocation2 + $0x60] sm:$0xff] %v318
    %472 = vst [vmem:[#allocation2 + $0x68] sm:$0xff] %v320
    %473 = vst [vmem:[#allocation2 + $0x70] sm:$0xff] %v431
    %474 = vst [vmem:[#allocation2 + $0x78] sm:$0xff] %v433
    %475 = vst [vmem:[#allocation2 + $0x80] sm:$0xff] %v324
    %476 = vst [vmem:[#allocation2 + $0x88] sm:$0xff] %v326
    %477 = vst [vmem:[#allocation2 + $0x90] sm:$0xff] %v437
    %478 = vst [vmem:[#allocation2 + $0x98] sm:$0xff] %v439
    %479 = vst [vmem:[#allocation2 + $0xa0] sm:$0xff] %v330
    %480 = vst [vmem:[#allocation2 + $0xa8] sm:$0xff] %v332
    %481 = vst [vmem:[#allocation2 + $0xb0] sm:$0xff] %v443
    %482 = vst [vmem:[#allocation2 + $0xb8] sm:$0xff] %v445
    %483 = vst [vmem:[#allocation2 + $0xc0] sm:$0xff] %v336
    %484 = vst [vmem:[#allocation2 + $0xc8] sm:$0xff] %v338
    %485 = vst [vmem:[#allocation2 + $0xd0] sm:$0xff] %v449
    %486 = vst [vmem:[#allocation2 + $0xd8] sm:$0xff] %v451
    %487 = vst [vmem:[#allocation2 + $0xe0] sm:$0xff] %v342
    %488 = vst [vmem:[#allocation2 + $0xe8] sm:$0xff] %v344
    %489 = vst [vmem:[#allocation2 + $0xf0] sm:$0xff] %v455
    %490 = vst [vmem:[#allocation2 + $0xf8] sm:$0xff] %v457
    %v491 = vld [vmem:[#allocation5] sm:$0xff]
    %v492 = vld [vmem:[#allocation5 + $0x8] sm:$0xff]
    %v493 = vld [vmem:[#allocation5 + $0x10] sm:$0xff]
    %v494 = vld [vmem:[#allocation5 + $0x18] sm:$0xff]
    %v495 = vld [vmem:[#allocation5 + $0x20] sm:$0xff]
    %v496 = vld [vmem:[#allocation5 + $0x28] sm:$0xff]
    %v497 = vld [vmem:[#allocation5 + $0x30] sm:$0xff]
    %v498 = vld [vmem:[#allocation5 + $0x38] sm:$0xff]
    %v499 = vld [vmem:[#allocation5 + $0x40] sm:$0xff]
    %v500 = vld [vmem:[#allocation5 + $0x48] sm:$0xff]
    %v501 = vld [vmem:[#allocation5 + $0x50] sm:$0xff]
    %v502 = vld [vmem:[#allocation5 + $0x58] sm:$0xff]
    %v503 = vld [vmem:[#allocation5 + $0x60] sm:$0xff]
    %v504 = vld [vmem:[#allocation5 + $0x68] sm:$0xff]
    %v505 = vld [vmem:[#allocation5 + $0x70] sm:$0xff]
    %v506 = vld [vmem:[#allocation5 + $0x78] sm:$0xff]
    %v507 = vld [vmem:[#allocation5 + $0x80] sm:$0xff]
    %v508 = vld [vmem:[#allocation5 + $0x88] sm:$0xff]
    %v509 = vld [vmem:[#allocation5 + $0x90] sm:$0xff]
    %v510 = vld [vmem:[#allocation5 + $0x98] sm:$0xff]
    %v511 = vld [vmem:[#allocation5 + $0xa0] sm:$0xff]
    %v512 = vld [vmem:[#allocation5 + $0xa8] sm:$0xff]
    %v513 = vld [vmem:[#allocation5 + $0xb0] sm:$0xff]
    %v514 = vld [vmem:[#allocation5 + $0xb8] sm:$0xff]
    %v515 = vld [vmem:[#allocation5 + $0xc0] sm:$0xff]
    %v516 = vld [vmem:[#allocation5 + $0xc8] sm:$0xff]
    %v517 = vld [vmem:[#allocation5 + $0xd0] sm:$0xff]
    %v518 = vld [vmem:[#allocation5 + $0xd8] sm:$0xff]
    %v519 = vld [vmem:[#allocation5 + $0xe0] sm:$0xff]
    %v520 = vld [vmem:[#allocation5 + $0xe8] sm:$0xff]
    %v521 = vld [vmem:[#allocation5 + $0xf0] sm:$0xff]
    %v522 = vld [vmem:[#allocation5 + $0xf8] sm:$0xff]
    %v523 = vld [vmem:[#allocation5 + $0x100] sm:$0xff]
    %v524 = vld [vmem:[#allocation5 + $0x108] sm:$0xff]
    %v525 = vld [vmem:[#allocation5 + $0x110] sm:$0xff]
    %v526 = vld [vmem:[#allocation5 + $0x118] sm:$0xff]
    %v527 = vld [vmem:[#allocation5 + $0x120] sm:$0xff]
    %v528 = vld [vmem:[#allocation5 + $0x128] sm:$0xff]
    %v529 = vld [vmem:[#allocation5 + $0x130] sm:$0xff]
    %v530 = vld [vmem:[#allocation5 + $0x138] sm:$0xff]
    %v531 = vld [vmem:[#allocation5 + $0x140] sm:$0xff]
    %v532 = vld [vmem:[#allocation5 + $0x148] sm:$0xff]
    %v533 = vld [vmem:[#allocation5 + $0x150] sm:$0xff]
    %v534 = vld [vmem:[#allocation5 + $0x158] sm:$0xff]
    %v535 = vld [vmem:[#allocation5 + $0x160] sm:$0xff]
    %v536 = vld [vmem:[#allocation5 + $0x168] sm:$0xff]
    %v537 = vld [vmem:[#allocation5 + $0x170] sm:$0xff]
    %v538 = vld [vmem:[#allocation5 + $0x178] sm:$0xff]
    %v539 = vld [vmem:[#allocation5 + $0x180] sm:$0xff]
    %v540 = vld [vmem:[#allocation5 + $0x188] sm:$0xff]
    %v541 = vld [vmem:[#allocation5 + $0x190] sm:$0xff]
    %v542 = vld [vmem:[#allocation5 + $0x198] sm:$0xff]
    %v543 = vld [vmem:[#allocation5 + $0x1a0] sm:$0xff]
    %v544 = vld [vmem:[#allocation5 + $0x1a8] sm:$0xff]
    %v545 = vld [vmem:[#allocation5 + $0x1b0] sm:$0xff]
    %v546 = vld [vmem:[#allocation5 + $0x1b8] sm:$0xff]
    %v547 = vld [vmem:[#allocation5 + $0x1c0] sm:$0xff]
    %v548 = vld [vmem:[#allocation5 + $0x1c8] sm:$0xff]
    %v549 = vld [vmem:[#allocation5 + $0x1d0] sm:$0xff]
    %v550 = vld [vmem:[#allocation5 + $0x1d8] sm:$0xff]
    %v551 = vld [vmem:[#allocation5 + $0x1e0] sm:$0xff]
    %v552 = vld [vmem:[#allocation5 + $0x1e8] sm:$0xff]
    %v553 = vld [vmem:[#allocation5 + $0x1f0] sm:$0xff]
    %v554 = vld [vmem:[#allocation5 + $0x1f8] sm:$0xff]
    %v555 = vld [vmem:[#allocation5 + $0x200] sm:$0xff]
    %v556 = vld [vmem:[#allocation5 + $0x208] sm:$0xff]
    %v557 = vld [vmem:[#allocation5 + $0x210] sm:$0xff]
    %v558 = vld [vmem:[#allocation5 + $0x218] sm:$0xff]
    %v559 = vld [vmem:[#allocation5 + $0x220] sm:$0xff]
    %v560 = vld [vmem:[#allocation5 + $0x228] sm:$0xff]
    %v561 = vld [vmem:[#allocation5 + $0x230] sm:$0xff]
    %v562 = vld [vmem:[#allocation5 + $0x238] sm:$0xff]
    %v563 = vld [vmem:[#allocation5 + $0x240] sm:$0xff]
    %v564 = vld [vmem:[#allocation5 + $0x248] sm:$0xff]
    %v565 = vld [vmem:[#allocation5 + $0x250] sm:$0xff]
    %v566 = vld [vmem:[#allocation5 + $0x258] sm:$0xff]
    %v567 = vld [vmem:[#allocation5 + $0x260] sm:$0xff]
    %v568 = vld [vmem:[#allocation5 + $0x268] sm:$0xff]
    %v569 = vld [vmem:[#allocation5 + $0x270] sm:$0xff]
    %v570 = vld [vmem:[#allocation5 + $0x278] sm:$0xff]
    %v571 = vld [vmem:[#allocation5 + $0x280] sm:$0xff]
    %v572 = vld [vmem:[#allocation5 + $0x288] sm:$0xff]
    %v573 = vld [vmem:[#allocation5 + $0x290] sm:$0xff]
    %v574 = vld [vmem:[#allocation5 + $0x298] sm:$0xff]
    %v575 = vld [vmem:[#allocation5 + $0x2a0] sm:$0xff]
    %v576 = vld [vmem:[#allocation5 + $0x2a8] sm:$0xff]
    %v577 = vld [vmem:[#allocation5 + $0x2b0] sm:$0xff]
    %v578 = vld [vmem:[#allocation5 + $0x2b8] sm:$0xff]
    %v579 = vld [vmem:[#allocation5 + $0x2c0] sm:$0xff]
    %v580 = vld [vmem:[#allocation5 + $0x2c8] sm:$0xff]
    %v581 = vld [vmem:[#allocation5 + $0x2d0] sm:$0xff]
    %v582 = vld [vmem:[#allocation5 + $0x2d8] sm:$0xff]
    %v583 = vld [vmem:[#allocation5 + $0x2e0] sm:$0xff]
    %v584 = vld [vmem:[#allocation5 + $0x2e8] sm:$0xff]
    %v585 = vld [vmem:[#allocation5 + $0x2f0] sm:$0xff]
    %v586 = vld [vmem:[#allocation5 + $0x2f8] sm:$0xff]
    %v587 = vld [vmem:[#allocation5 + $0x300] sm:$0xff]
    %v588 = vld [vmem:[#allocation5 + $0x308] sm:$0xff]
    %v589 = vld [vmem:[#allocation5 + $0x310] sm:$0xff]
    %v590 = vld [vmem:[#allocation5 + $0x318] sm:$0xff]
    %v591 = vld [vmem:[#allocation5 + $0x320] sm:$0xff]
    %v592 = vld [vmem:[#allocation5 + $0x328] sm:$0xff]
    %v593 = vld [vmem:[#allocation5 + $0x330] sm:$0xff]
    %v594 = vld [vmem:[#allocation5 + $0x338] sm:$0xff]
    %v595 = vld [vmem:[#allocation5 + $0x340] sm:$0xff]
    %v596 = vld [vmem:[#allocation5 + $0x348] sm:$0xff]
    %v597 = vld [vmem:[#allocation5 + $0x350] sm:$0xff]
    %v598 = vld [vmem:[#allocation5 + $0x358] sm:$0xff]
    %v599 = vld [vmem:[#allocation5 + $0x360] sm:$0xff]
    %v600 = vld [vmem:[#allocation5 + $0x368] sm:$0xff]
    %v601 = vld [vmem:[#allocation5 + $0x370] sm:$0xff]
    %v602 = vld [vmem:[#allocation5 + $0x378] sm:$0xff]
    %v603 = vld [vmem:[#allocation5 + $0x380] sm:$0xff]
    %v604 = vld [vmem:[#allocation5 + $0x388] sm:$0xff]
    %v605 = vld [vmem:[#allocation5 + $0x390] sm:$0xff]
    %v606 = vld [vmem:[#allocation5 + $0x398] sm:$0xff]
    %v607 = vld [vmem:[#allocation5 + $0x3a0] sm:$0xff]
    %v608 = vld [vmem:[#allocation5 + $0x3a8] sm:$0xff]
    %v609 = vld [vmem:[#allocation5 + $0x3b0] sm:$0xff]
    %v610 = vld [vmem:[#allocation5 + $0x3b8] sm:$0xff]
    %v611 = vld [vmem:[#allocation5 + $0x3c0] sm:$0xff]
    %v612 = vld [vmem:[#allocation5 + $0x3c8] sm:$0xff]
    %v613 = vld [vmem:[#allocation5 + $0x3d0] sm:$0xff]
    %v614 = vld [vmem:[#allocation5 + $0x3d8] sm:$0xff]
    %v615 = vld [vmem:[#allocation5 + $0x3e0] sm:$0xff]
    %v616 = vld [vmem:[#allocation5 + $0x3e8] sm:$0xff]
    %v617 = vld [vmem:[#allocation5 + $0x3f0] sm:$0xff]
    %v618 = vld [vmem:[#allocation5 + $0x3f8] sm:$0xff]
    %v619 = vld [vmem:[%s4] sm:$0xf]
    %v621 = vlaneseq
    %v622 = vshrl.u32 %v621, 7
    %v623 = vsub.s32 0, %v622
    %v624 = vrot.slane %v619, %v623
    %v625 = vlaneseq
    %v626 = vshrl.u32 %v625, 7
    %v627 = vsub.s32 1, %v626
    %v628 = vrot.slane %v619, %v627
    %v629 = vlaneseq
    %v630 = vshrl.u32 %v629, 7
    %v631 = vsub.s32 2, %v630
    %v632 = vrot.slane %v619, %v631
    %v633 = vlaneseq
    %v634 = vshrl.u32 %v633, 7
    %v635 = vsub.s32 3, %v634
    %v636 = vrot.slane %v619, %v635
    %v641 = vld [vmem:[#allocation2] sm:$0xff]
    %v642 = vld [vmem:[#allocation2 + $0x8] sm:$0xff]
    %v643 = vld [vmem:[#allocation2 + $0x10] sm:$0xff]
    %v644 = vld [vmem:[#allocation2 + $0x18] sm:$0xff]
    %v645 = vxor.u32 %v641, 2147483648
    %v646 = vmul.f32 %v645, 1.442695
    %v647 = vpow.pop %v646
    %v648 = vadd.f32 %v647, 1.0
    %v649 = vrcp.pop %v648
    %v650 = vmul.f32 1.0, %v649
    %v651 = vxor.u32 %v642, 2147483648
    %v652 = vmul.f32 %v651, 1.442695
    %v653 = vpow.pop %v652
    %v654 = vadd.f32 %v653, 1.0
    %v655 = vrcp.pop %v654
    %v656 = vmul.f32 1.0, %v655
    %v657 = vtanh.pop %v643
    %v658 = vxor.u32 %v644, 2147483648
    %v659 = vmul.f32 %v658, 1.442695
    %v660 = vpow.pop %v659
    %v661 = vadd.f32 %v660, 1.0
    %v662 = vrcp.pop %v661
    %v663 = vmul.f32 1.0, %v662
    %v664 = vmul.f32 %v656, 0.0
    %v665 = vmul.f32 %v650, %v657
    %v666 = vadd.f32 %v664, %v665
    %v667 = vtanh.pop %v666
    %v668 = vmul.f32 %v663, %v667
    %669 = vst [vmem:[#allocation3] sm:$0xff] %v668
    %670 = vst [vmem:[#allocation3 + $0x8] sm:$0xff] 0.0
    %v671 = vld [vmem:[#allocation3] sm:$0xff]
    %v672 = vld [vmem:[#allocation3 + $0x8] sm:$0xff]
    %v673 = vpack.c.bf16 %v671, %v671
    %v674 = vpack.c.bf16 %v672, %v672
    %v803 = vunpack.c.l.b16 %v491
    %v804 = vunpack.c.h.b16 %v491
    %v805 = vunpack.c.l.b16 %v492
    %v806 = vunpack.c.h.b16 %v492
    %v807 = vunpack.c.l.b16 %v493
    %v808 = vunpack.c.h.b16 %v493
    %v809 = vunpack.c.l.b16 %v494
    %v810 = vunpack.c.h.b16 %v494
    %v811 = vunpack.c.l.b16 %v495
    %v812 = vunpack.c.h.b16 %v495
    %v813 = vunpack.c.l.b16 %v496
    %v814 = vunpack.c.h.b16 %v496
    %v815 = vunpack.c.l.b16 %v497
    %v816 = vunpack.c.h.b16 %v497
    %v817 = vunpack.c.l.b16 %v498
    %v818 = vunpack.c.h.b16 %v498
    %v819 = vunpack.c.l.b16 %v499
    %v820 = vunpack.c.h.b16 %v499
    %v821 = vunpack.c.l.b16 %v500
    %v822 = vunpack.c.h.b16 %v500
    %v823 = vunpack.c.l.b16 %v501
    %v824 = vunpack.c.h.b16 %v501
    %v825 = vunpack.c.l.b16 %v502
    %v826 = vunpack.c.h.b16 %v502
    %v827 = vunpack.c.l.b16 %v503
    %v828 = vunpack.c.h.b16 %v503
    %v829 = vunpack.c.l.b16 %v504
    %v830 = vunpack.c.h.b16 %v504
    %v831 = vunpack.c.l.b16 %v505
    %v832 = vunpack.c.h.b16 %v505
    %v833 = vunpack.c.l.b16 %v506
    %v834 = vunpack.c.h.b16 %v506
    %v835 = vunpack.c.l.b16 %v507
    %v836 = vunpack.c.h.b16 %v507
    %v837 = vunpack.c.l.b16 %v508
    %v838 = vunpack.c.h.b16 %v508
    %v839 = vunpack.c.l.b16 %v509
    %v840 = vunpack.c.h.b16 %v509
    %v841 = vunpack.c.l.b16 %v510
    %v842 = vunpack.c.h.b16 %v510
    %v843 = vunpack.c.l.b16 %v511
    %v844 = vunpack.c.h.b16 %v511
    %v845 = vunpack.c.l.b16 %v512
    %v846 = vunpack.c.h.b16 %v512
    %v847 = vunpack.c.l.b16 %v513
    %v848 = vunpack.c.h.b16 %v513
    %v849 = vunpack.c.l.b16 %v514
    %v850 = vunpack.c.h.b16 %v514
    %v851 = vunpack.c.l.b16 %v515
    %v852 = vunpack.c.h.b16 %v515
    %v853 = vunpack.c.l.b16 %v516
    %v854 = vunpack.c.h.b16 %v516
    %v855 = vunpack.c.l.b16 %v517
    %v856 = vunpack.c.h.b16 %v517
    %v857 = vunpack.c.l.b16 %v518
    %v858 = vunpack.c.h.b16 %v518
    %v859 = vunpack.c.l.b16 %v519
    %v860 = vunpack.c.h.b16 %v519
    %v861 = vunpack.c.l.b16 %v520
    %v862 = vunpack.c.h.b16 %v520
    %v863 = vunpack.c.l.b16 %v521
    %v864 = vunpack.c.h.b16 %v521
    %v865 = vunpack.c.l.b16 %v522
    %v866 = vunpack.c.h.b16 %v522
    %v867 = vunpack.c.l.b16 %v523
    %v868 = vunpack.c.h.b16 %v523
    %v869 = vunpack.c.l.b16 %v524
    %v870 = vunpack.c.h.b16 %v524
    %v871 = vunpack.c.l.b16 %v525
    %v872 = vunpack.c.h.b16 %v525
    %v873 = vunpack.c.l.b16 %v526
    %v874 = vunpack.c.h.b16 %v526
    %v875 = vunpack.c.l.b16 %v527
    %v876 = vunpack.c.h.b16 %v527
    %v877 = vunpack.c.l.b16 %v528
    %v878 = vunpack.c.h.b16 %v528
    %v879 = vunpack.c.l.b16 %v529
    %v880 = vunpack.c.h.b16 %v529
    %v881 = vunpack.c.l.b16 %v530
    %v882 = vunpack.c.h.b16 %v530
    %v883 = vunpack.c.l.b16 %v531
    %v884 = vunpack.c.h.b16 %v531
    %v885 = vunpack.c.l.b16 %v532
    %v886 = vunpack.c.h.b16 %v532
    %v887 = vunpack.c.l.b16 %v533
    %v888 = vunpack.c.h.b16 %v533
    %v889 = vunpack.c.l.b16 %v534
    %v890 = vunpack.c.h.b16 %v534
    %v891 = vunpack.c.l.b16 %v535
    %v892 = vunpack.c.h.b16 %v535
    %v893 = vunpack.c.l.b16 %v536
    %v894 = vunpack.c.h.b16 %v536
    %v895 = vunpack.c.l.b16 %v537
    %v896 = vunpack.c.h.b16 %v537
    %v897 = vunpack.c.l.b16 %v538
    %v898 = vunpack.c.h.b16 %v538
    %v899 = vunpack.c.l.b16 %v539
    %v900 = vunpack.c.h.b16 %v539
    %v901 = vunpack.c.l.b16 %v540
    %v902 = vunpack.c.h.b16 %v540
    %v903 = vunpack.c.l.b16 %v541
    %v904 = vunpack.c.h.b16 %v541
    %v905 = vunpack.c.l.b16 %v542
    %v906 = vunpack.c.h.b16 %v542
    %v907 = vunpack.c.l.b16 %v543
    %v908 = vunpack.c.h.b16 %v543
    %v909 = vunpack.c.l.b16 %v544
    %v910 = vunpack.c.h.b16 %v544
    %v911 = vunpack.c.l.b16 %v545
    %v912 = vunpack.c.h.b16 %v545
    %v913 = vunpack.c.l.b16 %v546
    %v914 = vunpack.c.h.b16 %v546
    %v915 = vunpack.c.l.b16 %v547
    %v916 = vunpack.c.h.b16 %v547
    %v917 = vunpack.c.l.b16 %v548
    %v918 = vunpack.c.h.b16 %v548
    %v919 = vunpack.c.l.b16 %v549
    %v920 = vunpack.c.h.b16 %v549
    %v921 = vunpack.c.l.b16 %v550
    %v922 = vunpack.c.h.b16 %v550
    %v923 = vunpack.c.l.b16 %v551
    %v924 = vunpack.c.h.b16 %v551
    %v925 = vunpack.c.l.b16 %v552
    %v926 = vunpack.c.h.b16 %v552
    %v927 = vunpack.c.l.b16 %v553
    %v928 = vunpack.c.h.b16 %v553
    %v929 = vunpack.c.l.b16 %v554
    %v930 = vunpack.c.h.b16 %v554
    %v931 = vunpack.c.l.b16 %v555
    %v932 = vunpack.c.h.b16 %v555
    %v933 = vunpack.c.l.b16 %v556
    %v934 = vunpack.c.h.b16 %v556
    %v935 = vunpack.c.l.b16 %v557
    %v936 = vunpack.c.h.b16 %v557
    %v937 = vunpack.c.l.b16 %v558
    %v938 = vunpack.c.h.b16 %v558
    %v939 = vunpack.c.l.b16 %v559
    %v940 = vunpack.c.h.b16 %v559
    %v941 = vunpack.c.l.b16 %v560
    %v942 = vunpack.c.h.b16 %v560
    %v943 = vunpack.c.l.b16 %v561
    %v944 = vunpack.c.h.b16 %v561
    %v945 = vunpack.c.l.b16 %v562
    %v946 = vunpack.c.h.b16 %v562
    %v947 = vunpack.c.l.b16 %v563
    %v948 = vunpack.c.h.b16 %v563
    %v949 = vunpack.c.l.b16 %v564
    %v950 = vunpack.c.h.b16 %v564
    %v951 = vunpack.c.l.b16 %v565
    %v952 = vunpack.c.h.b16 %v565
    %v953 = vunpack.c.l.b16 %v566
    %v954 = vunpack.c.h.b16 %v566
    %v955 = vunpack.c.l.b16 %v567
    %v956 = vunpack.c.h.b16 %v567
    %v957 = vunpack.c.l.b16 %v568
    %v958 = vunpack.c.h.b16 %v568
    %v959 = vunpack.c.l.b16 %v569
    %v960 = vunpack.c.h.b16 %v569
    %v961 = vunpack.c.l.b16 %v570
    %v962 = vunpack.c.h.b16 %v570
    %v963 = vunpack.c.l.b16 %v571
    %v964 = vunpack.c.h.b16 %v571
    %v965 = vunpack.c.l.b16 %v572
    %v966 = vunpack.c.h.b16 %v572
    %v967 = vunpack.c.l.b16 %v573
    %v968 = vunpack.c.h.b16 %v573
    %v969 = vunpack.c.l.b16 %v574
    %v970 = vunpack.c.h.b16 %v574
    %v971 = vunpack.c.l.b16 %v575
    %v972 = vunpack.c.h.b16 %v575
    %v973 = vunpack.c.l.b16 %v576
    %v974 = vunpack.c.h.b16 %v576
    %v975 = vunpack.c.l.b16 %v577
    %v976 = vunpack.c.h.b16 %v577
    %v977 = vunpack.c.l.b16 %v578
    %v978 = vunpack.c.h.b16 %v578
    %v979 = vunpack.c.l.b16 %v579
    %v980 = vunpack.c.h.b16 %v579
    %v981 = vunpack.c.l.b16 %v580
    %v982 = vunpack.c.h.b16 %v580
    %v983 = vunpack.c.l.b16 %v581
    %v984 = vunpack.c.h.b16 %v581
    %v985 = vunpack.c.l.b16 %v582
    %v986 = vunpack.c.h.b16 %v582
    %v987 = vunpack.c.l.b16 %v583
    %v988 = vunpack.c.h.b16 %v583
    %v989 = vunpack.c.l.b16 %v584
    %v990 = vunpack.c.h.b16 %v584
    %v991 = vunpack.c.l.b16 %v585
    %v992 = vunpack.c.h.b16 %v585
    %v993 = vunpack.c.l.b16 %v586
    %v994 = vunpack.c.h.b16 %v586
    %v995 = vunpack.c.l.b16 %v587
    %v996 = vunpack.c.h.b16 %v587
    %v997 = vunpack.c.l.b16 %v588
    %v998 = vunpack.c.h.b16 %v588
    %v999 = vunpack.c.l.b16 %v589
    %v1000 = vunpack.c.h.b16 %v589
    %v1001 = vunpack.c.l.b16 %v590
    %v1002 = vunpack.c.h.b16 %v590
    %v1003 = vunpack.c.l.b16 %v591
    %v1004 = vunpack.c.h.b16 %v591
    %v1005 = vunpack.c.l.b16 %v592
    %v1006 = vunpack.c.h.b16 %v592
    %v1007 = vunpack.c.l.b16 %v593
    %v1008 = vunpack.c.h.b16 %v593
    %v1009 = vunpack.c.l.b16 %v594
    %v1010 = vunpack.c.h.b16 %v594
    %v1011 = vunpack.c.l.b16 %v595
    %v1012 = vunpack.c.h.b16 %v595
    %v1013 = vunpack.c.l.b16 %v596
    %v1014 = vunpack.c.h.b16 %v596
    %v1015 = vunpack.c.l.b16 %v597
    %v1016 = vunpack.c.h.b16 %v597
    %v1017 = vunpack.c.l.b16 %v598
    %v1018 = vunpack.c.h.b16 %v598
    %v1019 = vunpack.c.l.b16 %v599
    %v1020 = vunpack.c.h.b16 %v599
    %v1021 = vunpack.c.l.b16 %v600
    %v1022 = vunpack.c.h.b16 %v600
    %v1023 = vunpack.c.l.b16 %v601
    %v1024 = vunpack.c.h.b16 %v601
    %v1025 = vunpack.c.l.b16 %v602
    %v1026 = vunpack.c.h.b16 %v602
    %v1027 = vunpack.c.l.b16 %v603
    %v1028 = vunpack.c.h.b16 %v603
    %v1029 = vunpack.c.l.b16 %v604
    %v1030 = vunpack.c.h.b16 %v604
    %v1031 = vunpack.c.l.b16 %v605
    %v1032 = vunpack.c.h.b16 %v605
    %v1033 = vunpack.c.l.b16 %v606
    %v1034 = vunpack.c.h.b16 %v606
    %v1035 = vunpack.c.l.b16 %v607
    %v1036 = vunpack.c.h.b16 %v607
    %v1037 = vunpack.c.l.b16 %v608
    %v1038 = vunpack.c.h.b16 %v608
    %v1039 = vunpack.c.l.b16 %v609
    %v1040 = vunpack.c.h.b16 %v609
    %v1041 = vunpack.c.l.b16 %v610
    %v1042 = vunpack.c.h.b16 %v610
    %v1043 = vunpack.c.l.b16 %v611
    %v1044 = vunpack.c.h.b16 %v611
    %v1045 = vunpack.c.l.b16 %v612
    %v1046 = vunpack.c.h.b16 %v612
    %v1047 = vunpack.c.l.b16 %v613
    %v1048 = vunpack.c.h.b16 %v613
    %v1049 = vunpack.c.l.b16 %v614
    %v1050 = vunpack.c.h.b16 %v614
    %v1051 = vunpack.c.l.b16 %v615
    %v1052 = vunpack.c.h.b16 %v615
    %v1053 = vunpack.c.l.b16 %v616
    %v1054 = vunpack.c.h.b16 %v616
    %v1055 = vunpack.c.l.b16 %v617
    %v1056 = vunpack.c.h.b16 %v617
    %v1057 = vunpack.c.l.b16 %v618
    %v1058 = vunpack.c.h.b16 %v618
    %v1059 = vpack.c.b16 %v811, %v803
    %v1060 = vpack.c.b16 %v812, %v804
    %v1061 = vpack.c.b16 %v813, %v805
    %v1062 = vpack.c.b16 %v814, %v806
    %v1063 = vpack.c.b16 %v815, %v807
    %v1064 = vpack.c.b16 %v816, %v808
    %v1065 = vpack.c.b16 %v817, %v809
    %v1066 = vpack.c.b16 %v818, %v810
    %v1067 = vpack.c.b16 %v827, %v819
    %v1068 = vpack.c.b16 %v828, %v820
    %v1069 = vpack.c.b16 %v829, %v821
    %v1070 = vpack.c.b16 %v830, %v822
    %v1071 = vpack.c.b16 %v831, %v823
    %v1072 = vpack.c.b16 %v832, %v824
    %v1073 = vpack.c.b16 %v833, %v825
    %v1074 = vpack.c.b16 %v834, %v826
    %v1075 = vpack.c.b16 %v843, %v835
    %v1076 = vpack.c.b16 %v844, %v836
    %v1077 = vpack.c.b16 %v845, %v837
    %v1078 = vpack.c.b16 %v846, %v838
    %v1079 = vpack.c.b16 %v847, %v839
    %v1080 = vpack.c.b16 %v848, %v840
    %v1081 = vpack.c.b16 %v849, %v841
    %v1082 = vpack.c.b16 %v850, %v842
    %v1083 = vpack.c.b16 %v859, %v851
    %v1084 = vpack.c.b16 %v860, %v852
    %v1085 = vpack.c.b16 %v861, %v853
    %v1086 = vpack.c.b16 %v862, %v854
    %v1087 = vpack.c.b16 %v863, %v855
    %v1088 = vpack.c.b16 %v864, %v856
    %v1089 = vpack.c.b16 %v865, %v857
    %v1090 = vpack.c.b16 %v866, %v858
    %v1091 = vpack.c.b16 %v875, %v867
    %v1092 = vpack.c.b16 %v876, %v868
    %v1093 = vpack.c.b16 %v877, %v869
    %v1094 = vpack.c.b16 %v878, %v870
    %v1095 = vpack.c.b16 %v879, %v871
    %v1096 = vpack.c.b16 %v880, %v872
    %v1097 = vpack.c.b16 %v881, %v873
    %v1098 = vpack.c.b16 %v882, %v874
    %v1099 = vpack.c.b16 %v891, %v883
    %v1100 = vpack.c.b16 %v892, %v884
    %v1101 = vpack.c.b16 %v893, %v885
    %v1102 = vpack.c.b16 %v894, %v886
    %v1103 = vpack.c.b16 %v895, %v887
    %v1104 = vpack.c.b16 %v896, %v888
    %v1105 = vpack.c.b16 %v897, %v889
    %v1106 = vpack.c.b16 %v898, %v890
    %v1107 = vpack.c.b16 %v907, %v899
    %v1108 = vpack.c.b16 %v908, %v900
    %v1109 = vpack.c.b16 %v909, %v901
    %v1110 = vpack.c.b16 %v910, %v902
    %v1111 = vpack.c.b16 %v911, %v903
    %v1112 = vpack.c.b16 %v912, %v904
    %v1113 = vpack.c.b16 %v913, %v905
    %v1114 = vpack.c.b16 %v914, %v906
    %v1115 = vpack.c.b16 %v923, %v915
    %v1116 = vpack.c.b16 %v924, %v916
    %v1117 = vpack.c.b16 %v925, %v917
    %v1118 = vpack.c.b16 %v926, %v918
    %v1119 = vpack.c.b16 %v927, %v919
    %v1120 = vpack.c.b16 %v928, %v920
    %v1121 = vpack.c.b16 %v929, %v921
    %v1122 = vpack.c.b16 %v930, %v922
    %v1123 = vpack.c.b16 %v939, %v931
    %v1124 = vpack.c.b16 %v940, %v932
    %v1125 = vpack.c.b16 %v941, %v933
    %v1126 = vpack.c.b16 %v942, %v934
    %v1127 = vpack.c.b16 %v943, %v935
    %v1128 = vpack.c.b16 %v944, %v936
    %v1129 = vpack.c.b16 %v945, %v937
    %v1130 = vpack.c.b16 %v946, %v938
    %v1131 = vpack.c.b16 %v955, %v947
    %v1132 = vpack.c.b16 %v956, %v948
    %v1133 = vpack.c.b16 %v957, %v949
    %v1134 = vpack.c.b16 %v958, %v950
    %v1135 = vpack.c.b16 %v959, %v951
    %v1136 = vpack.c.b16 %v960, %v952
    %v1137 = vpack.c.b16 %v961, %v953
    %v1138 = vpack.c.b16 %v962, %v954
    %v1139 = vpack.c.b16 %v971, %v963
    %v1140 = vpack.c.b16 %v972, %v964
    %v1141 = vpack.c.b16 %v973, %v965
    %v1142 = vpack.c.b16 %v974, %v966
    %v1143 = vpack.c.b16 %v975, %v967
    %v1144 = vpack.c.b16 %v976, %v968
    %v1145 = vpack.c.b16 %v977, %v969
    %v1146 = vpack.c.b16 %v978, %v970
    %v1147 = vpack.c.b16 %v987, %v979
    %v1148 = vpack.c.b16 %v988, %v980
    %v1149 = vpack.c.b16 %v989, %v981
    %v1150 = vpack.c.b16 %v990, %v982
    %v1151 = vpack.c.b16 %v991, %v983
    %v1152 = vpack.c.b16 %v992, %v984
    %v1153 = vpack.c.b16 %v993, %v985
    %v1154 = vpack.c.b16 %v994, %v986
    %v1155 = vpack.c.b16 %v1003, %v995
    %v1156 = vpack.c.b16 %v1004, %v996
    %v1157 = vpack.c.b16 %v1005, %v997
    %v1158 = vpack.c.b16 %v1006, %v998
    %v1159 = vpack.c.b16 %v1007, %v999
    %v1160 = vpack.c.b16 %v1008, %v1000
    %v1161 = vpack.c.b16 %v1009, %v1001
    %v1162 = vpack.c.b16 %v1010, %v1002
    %v1163 = vpack.c.b16 %v1019, %v1011
    %v1164 = vpack.c.b16 %v1020, %v1012
    %v1165 = vpack.c.b16 %v1021, %v1013
    %v1166 = vpack.c.b16 %v1022, %v1014
    %v1167 = vpack.c.b16 %v1023, %v1015
    %v1168 = vpack.c.b16 %v1024, %v1016
    %v1169 = vpack.c.b16 %v1025, %v1017
    %v1170 = vpack.c.b16 %v1026, %v1018
    %v1171 = vpack.c.b16 %v1035, %v1027
    %v1172 = vpack.c.b16 %v1036, %v1028
    %v1173 = vpack.c.b16 %v1037, %v1029
    %v1174 = vpack.c.b16 %v1038, %v1030
    %v1175 = vpack.c.b16 %v1039, %v1031
    %v1176 = vpack.c.b16 %v1040, %v1032
    %v1177 = vpack.c.b16 %v1041, %v1033
    %v1178 = vpack.c.b16 %v1042, %v1034
    %v1179 = vpack.c.b16 %v1051, %v1043
    %v1180 = vpack.c.b16 %v1052, %v1044
    %v1181 = vpack.c.b16 %v1053, %v1045
    %v1182 = vpack.c.b16 %v1054, %v1046
    %v1183 = vpack.c.b16 %v1055, %v1047
    %v1184 = vpack.c.b16 %v1056, %v1048
    %v1185 = vpack.c.b16 %v1057, %v1049
    %v1186 = vpack.c.b16 %v1058, %v1050
    %1315 = vmatprep.subr.bf16.mxu0 %v1060
    %1316 = vmatpush1.bf16.msra.mxu0 %v1059
    %1317 = vmatprep.subr.bf16.mxu0 %v1068
    %1318 = vmatpush1.bf16.msra.mxu0 %v1067
    %1319 = vmatprep.subr.bf16.mxu0 %v1076
    %1320 = vmatpush1.bf16.msra.mxu0 %v1075
    %1321 = vmatprep.subr.bf16.mxu0 %v1084
    %1322 = vmatpush1.bf16.msra.mxu0 %v1083
    %1323 = vmatprep.subr.bf16.mxu0 %v1092
    %1324 = vmatpush1.bf16.msra.mxu0 %v1091
    %1325 = vmatprep.subr.bf16.mxu0 %v1100
    %1326 = vmatpush1.bf16.msra.mxu0 %v1099
    %1327 = vmatprep.subr.bf16.mxu0 %v1108
    %1328 = vmatpush1.bf16.msra.mxu0 %v1107
    %1329 = vmatprep.subr.bf16.mxu0 %v1116
    %1330 = vmatpush1.bf16.msra.mxu0 %v1115
    %1331 = vmatprep.subr.bf16.mxu0 %v1124
    %1332 = vmatpush1.bf16.msra.mxu0 %v1123
    %1333 = vmatprep.subr.bf16.mxu0 %v1132
    %1334 = vmatpush1.bf16.msra.mxu0 %v1131
    %1335 = vmatprep.subr.bf16.mxu0 %v1140
    %1336 = vmatpush1.bf16.msra.mxu0 %v1139
    %1337 = vmatprep.subr.bf16.mxu0 %v1148
    %1338 = vmatpush1.bf16.msra.mxu0 %v1147
    %1339 = vmatprep.subr.bf16.mxu0 %v1156
    %1340 = vmatpush1.bf16.msra.mxu0 %v1155
    %1341 = vmatprep.subr.bf16.mxu0 %v1164
    %1342 = vmatpush1.bf16.msra.mxu0 %v1163
    %1343 = vmatprep.subr.bf16.mxu0 %v1172
    %1344 = vmatpush1.bf16.msra.mxu0 %v1171
    %1345 = vmatprep.subr.bf16.mxu0 %v1180
    %1346 = vmatpush1.bf16.msra.mxu0 %v1179
    %1347 = vmatprep.mubr.bf16.mxu0 %v674
    %1348 = vmatmul.mubr.bf16.gmra.mrb[0].mxu0 %v673
    %v1349 = vpop.f32.mrb[0].mxu0
    %v1350 = vadd.f32 0.0, %v1349
    %v1351 = vpop.f32.mrb[0].mxu0
    %v1352 = vadd.f32 0.0, %v1351
    %v1353 = vpop.f32.mrb[0].mxu0
    %v1354 = vpop.f32.mrb[0].mxu0
    %1355 = vdwg.mxu0
    %1356 = vmatprep.subr.bf16.mxu0 %v1062
    %1357 = vmatpush1.bf16.msra.mxu0 %v1061
    %1358 = vmatprep.subr.bf16.mxu0 %v1070
    %1359 = vmatpush1.bf16.msra.mxu0 %v1069
    %1360 = vmatprep.subr.bf16.mxu0 %v1078
    %1361 = vmatpush1.bf16.msra.mxu0 %v1077
    %1362 = vmatprep.subr.bf16.mxu0 %v1086
    %1363 = vmatpush1.bf16.msra.mxu0 %v1085
    %1364 = vmatprep.subr.bf16.mxu0 %v1094
    %1365 = vmatpush1.bf16.msra.mxu0 %v1093
    %1366 = vmatprep.subr.bf16.mxu0 %v1102
    %1367 = vmatpush1.bf16.msra.mxu0 %v1101
    %1368 = vmatprep.subr.bf16.mxu0 %v1110
    %1369 = vmatpush1.bf16.msra.mxu0 %v1109
    %1370 = vmatprep.subr.bf16.mxu0 %v1118
    %1371 = vmatpush1.bf16.msra.mxu0 %v1117
    %1372 = vmatprep.subr.bf16.mxu0 %v1126
    %1373 = vmatpush1.bf16.msra.mxu0 %v1125
    %1374 = vmatprep.subr.bf16.mxu0 %v1134
    %1375 = vmatpush1.bf16.msra.mxu0 %v1133
    %1376 = vmatprep.subr.bf16.mxu0 %v1142
    %1377 = vmatpush1.bf16.msra.mxu0 %v1141
    %1378 = vmatprep.subr.bf16.mxu0 %v1150
    %1379 = vmatpush1.bf16.msra.mxu0 %v1149
    %1380 = vmatprep.subr.bf16.mxu0 %v1158
    %1381 = vmatpush1.bf16.msra.mxu0 %v1157
    %1382 = vmatprep.subr.bf16.mxu0 %v1166
    %1383 = vmatpush1.bf16.msra.mxu0 %v1165
    %1384 = vmatprep.subr.bf16.mxu0 %v1174
    %1385 = vmatpush1.bf16.msra.mxu0 %v1173
    %1386 = vmatprep.subr.bf16.mxu0 %v1182
    %1387 = vmatpush1.bf16.msra.mxu0 %v1181
    %1388 = vmatprep.mubr.bf16.mxu0 %v674
    %1389 = vmatmul.mubr.bf16.gmra.mrb[0].mxu0 %v673
    %v1390 = vpop.f32.mrb[0].mxu0
    %v1391 = vadd.f32 0.0, %v1390
    %v1392 = vpop.f32.mrb[0].mxu0
    %v1393 = vadd.f32 0.0, %v1392
    %v1394 = vpop.f32.mrb[0].mxu0
    %v1395 = vpop.f32.mrb[0].mxu0
    %1396 = vdwg.mxu0
    %1397 = vmatprep.subr.bf16.mxu0 %v1064
    %1398 = vmatpush1.bf16.msra.mxu0 %v1063
    %1399 = vmatprep.subr.bf16.mxu0 %v1072
    %1400 = vmatpush1.bf16.msra.mxu0 %v1071
    %1401 = vmatprep.subr.bf16.mxu0 %v1080
    %1402 = vmatpush1.bf16.msra.mxu0 %v1079
    %1403 = vmatprep.subr.bf16.mxu0 %v1088
    %1404 = vmatpush1.bf16.msra.mxu0 %v1087
    %1405 = vmatprep.subr.bf16.mxu0 %v1096
    %1406 = vmatpush1.bf16.msra.mxu0 %v1095
    %1407 = vmatprep.subr.bf16.mxu0 %v1104
    %1408 = vmatpush1.bf16.msra.mxu0 %v1103
    %1409 = vmatprep.subr.bf16.mxu0 %v1112
    %1410 = vmatpush1.bf16.msra.mxu0 %v1111
    %1411 = vmatprep.subr.bf16.mxu0 %v1120
    %1412 = vmatpush1.bf16.msra.mxu0 %v1119
    %1413 = vmatprep.subr.bf16.mxu0 %v1128
    %1414 = vmatpush1.bf16.msra.mxu0 %v1127
    %1415 = vmatprep.subr.bf16.mxu0 %v1136
    %1416 = vmatpush1.bf16.msra.mxu0 %v1135
    %1417 = vmatprep.subr.bf16.mxu0 %v1144
    %1418 = vmatpush1.bf16.msra.mxu0 %v1143
    %1419 = vmatprep.subr.bf16.mxu0 %v1152
    %1420 = vmatpush1.bf16.msra.mxu0 %v1151
    %1421 = vmatprep.subr.bf16.mxu0 %v1160
    %1422 = vmatpush1.bf16.msra.mxu0 %v1159
    %1423 = vmatprep.subr.bf16.mxu0 %v1168
    %1424 = vmatpush1.bf16.msra.mxu0 %v1167
    %1425 = vmatprep.subr.bf16.mxu0 %v1176
    %1426 = vmatpush1.bf16.msra.mxu0 %v1175
    %1427 = vmatprep.subr.bf16.mxu0 %v1184
    %1428 = vmatpush1.bf16.msra.mxu0 %v1183
    %1429 = vmatprep.mubr.bf16.mxu0 %v674
    %1430 = vmatmul.mubr.bf16.gmra.mrb[0].mxu0 %v673
    %v1431 = vpop.f32.mrb[0].mxu0
    %v1432 = vadd.f32 0.0, %v1431
    %v1433 = vpop.f32.mrb[0].mxu0
    %v1434 = vadd.f32 0.0, %v1433
    %v1435 = vpop.f32.mrb[0].mxu0
    %v1436 = vpop.f32.mrb[0].mxu0
    %1437 = vdwg.mxu0
    %1438 = vmatprep.subr.bf16.mxu0 %v1066
    %1439 = vmatpush1.bf16.msra.mxu0 %v1065
    %1440 = vmatprep.subr.bf16.mxu0 %v1074
    %1441 = vmatpush1.bf16.msra.mxu0 %v1073
    %1442 = vmatprep.subr.bf16.mxu0 %v1082
    %1443 = vmatpush1.bf16.msra.mxu0 %v1081
    %1444 = vmatprep.subr.bf16.mxu0 %v1090
    %1445 = vmatpush1.bf16.msra.mxu0 %v1089
    %1446 = vmatprep.subr.bf16.mxu0 %v1098
    %1447 = vmatpush1.bf16.msra.mxu0 %v1097
    %1448 = vmatprep.subr.bf16.mxu0 %v1106
    %1449 = vmatpush1.bf16.msra.mxu0 %v1105
    %1450 = vmatprep.subr.bf16.mxu0 %v1114
    %1451 = vmatpush1.bf16.msra.mxu0 %v1113
    %1452 = vmatprep.subr.bf16.mxu0 %v1122
    %1453 = vmatpush1.bf16.msra.mxu0 %v1121
    %1454 = vmatprep.subr.bf16.mxu0 %v1130
    %1455 = vmatpush1.bf16.msra.mxu0 %v1129
    %1456 = vmatprep.subr.bf16.mxu0 %v1138
    %1457 = vmatpush1.bf16.msra.mxu0 %v1137
    %1458 = vmatprep.subr.bf16.mxu0 %v1146
    %1459 = vmatpush1.bf16.msra.mxu0 %v1145
    %1460 = vmatprep.subr.bf16.mxu0 %v1154
    %1461 = vmatpush1.bf16.msra.mxu0 %v1153
    %1462 = vmatprep.subr.bf16.mxu0 %v1162
    %1463 = vmatpush1.bf16.msra.mxu0 %v1161
    %1464 = vmatprep.subr.bf16.mxu0 %v1170
    %1465 = vmatpush1.bf16.msra.mxu0 %v1169
    %1466 = vmatprep.subr.bf16.mxu0 %v1178
    %1467 = vmatpush1.bf16.msra.mxu0 %v1177
    %1468 = vmatprep.subr.bf16.mxu0 %v1186
    %1469 = vmatpush1.bf16.msra.mxu0 %v1185
    %1470 = vmatprep.mubr.bf16.mxu0 %v674
    %1471 = vmatmul.mubr.bf16.gmra.mrb[0].mxu0 %v673
    %v1472 = vpop.f32.mrb[0].mxu0
    %v1473 = vadd.f32 0.0, %v1472
    %v1474 = vpop.f32.mrb[0].mxu0
    %v1475 = vadd.f32 0.0, %v1474
    %v1476 = vpop.f32.mrb[0].mxu0
    %v1477 = vpop.f32.mrb[0].mxu0
    %1478 = vdwg.mxu0
    %v1479 = vadd.f32 %v1432, %v624
    %v1480 = vadd.f32 %v1434, %v628
    %v1481 = vadd.f32 %v1473, %v632
    %v1482 = vadd.f32 %v1475, %v636
    %v1483 = vxor.u32 %v1479, 2147483648
    %v1484 = vmul.f32 %v1483, 1.442695
    %v1485 = vpow.pop %v1484
    %v1486 = vadd.f32 %v1485, 1.0
    %v1487 = vrcp.pop %v1486
    %v1488 = vmul.f32 1.0, %v1487
    %v1489 = vxor.u32 %v1480, 2147483648
    %v1490 = vmul.f32 %v1489, 1.442695
    %v1491 = vpow.pop %v1490
    %v1492 = vadd.f32 %v1491, 1.0
    %v1493 = vrcp.pop %v1492
    %v1494 = vmul.f32 1.0, %v1493
    %v1495 = vtanh.pop %v1481
    %v1496 = vxor.u32 %v1482, 2147483648
    %v1497 = vmul.f32 %v1496, 1.442695
    %v1498 = vpow.pop %v1497
    %v1499 = vadd.f32 %v1498, 1.0
    %v1500 = vrcp.pop %v1499
    %v1501 = vmul.f32 1.0, %v1500
    %v1502 = vmul.f32 %v1494, 0.0
    %v1503 = vmul.f32 %v1488, %v1495
    %v1504 = vadd.f32 %v1502, %v1503
    %v1505 = vtanh.pop %v1504
    %v1506 = vmul.f32 %v1501, %v1505
    %1507 = vst [vmem:[#allocation3 + $0x8] sm:$0xff] %v1506
    %v1508 = vld [vmem:[#allocation2 + $0x20] sm:$0xff]
    %v1509 = vld [vmem:[#allocation2 + $0x28] sm:$0xff]
    %v1510 = vld [vmem:[#allocation2 + $0x30] sm:$0xff]
    %v1511 = vld [vmem:[#allocation2 + $0x38] sm:$0xff]
    %v1512 = vadd.f32 %v1508, %v1350
    %v1513 = vadd.f32 %v1509, %v1352
    %v1514 = vadd.f32 %v1510, %v1391
    %v1515 = vadd.f32 %v1511, %v1393
    %v1516 = vxor.u32 %v1512, 2147483648
    %v1517 = vmul.f32 %v1516, 1.442695
    %v1518 = vpow.pop %v1517
    %v1519 = vadd.f32 %v1518, 1.0
    %v1520 = vrcp.pop %v1519
    %v1521 = vmul.f32 1.0, %v1520
    %v1522 = vxor.u32 %v1513, 2147483648
    %v1523 = vmul.f32 %v1522, 1.442695
    %v1524 = vpow.pop %v1523
    %v1525 = vadd.f32 %v1524, 1.0
    %v1526 = vrcp.pop %v1525
    %v1527 = vmul.f32 1.0, %v1526
    %v1528 = vtanh.pop %v1514
    %v1529 = vxor.u32 %v1515, 2147483648
    %v1530 = vmul.f32 %v1529, 1.442695
    %v1531 = vpow.pop %v1530
    %v1532 = vadd.f32 %v1531, 1.0
    %v1533 = vrcp.pop %v1532
    %v1534 = vmul.f32 1.0, %v1533
    %v1535 = vmul.f32 %v1527, %v666
    %v1536 = vmul.f32 %v1521, %v1528
    %v1537 = vadd.f32 %v1535, %v1536
    %v1538 = vtanh.pop %v1537
    %v1539 = vmul.f32 %v1534, %v1538
    %1540 = vst [vmem:[#allocation3] sm:$0xff] %v1539
    %v1541 = vld [vmem:[#allocation3] sm:$0xff]
    %v1542 = vld [vmem:[#allocation3 + $0x8] sm:$0xff]
    %v1543 = vpack.c.bf16 %v1541, %v1541
    %v1544 = vpack.c.bf16 %v1542, %v1542
    %1545 = vmatprep.subr.bf16.mxu0 %v1060
    %1546 = vmatpush1.bf16.msra.mxu0 %v1059
    %1547 = vmatprep.subr.bf16.mxu0 %v1068
    %1548 = vmatpush1.bf16.msra.mxu0 %v1067
    %1549 = vmatprep.subr.bf16.mxu0 %v1076
    %1550 = vmatpush1.bf16.msra.mxu0 %v1075
    %1551 = vmatprep.subr.bf16.mxu0 %v1084
    %1552 = vmatpush1.bf16.msra.mxu0 %v1083
    %1553 = vmatprep.subr.bf16.mxu0 %v1092
    %1554 = vmatpush1.bf16.msra.mxu0 %v1091
    %1555 = vmatprep.subr.bf16.mxu0 %v1100
    %1556 = vmatpush1.bf16.msra.mxu0 %v1099
    %1557 = vmatprep.subr.bf16.mxu0 %v1108
    %1558 = vmatpush1.bf16.msra.mxu0 %v1107
    %1559 = vmatprep.subr.bf16.mxu0 %v1116
    %1560 = vmatpush1.bf16.msra.mxu0 %v1115
    %1561 = vmatprep.subr.bf16.mxu0 %v1124
    %1562 = vmatpush1.bf16.msra.mxu0 %v1123
    %1563 = vmatprep.subr.bf16.mxu0 %v1132
    %1564 = vmatpush1.bf16.msra.mxu0 %v1131
    %1565 = vmatprep.subr.bf16.mxu0 %v1140
    %1566 = vmatpush1.bf16.msra.mxu0 %v1139
    %1567 = vmatprep.subr.bf16.mxu0 %v1148
    %1568 = vmatpush1.bf16.msra.mxu0 %v1147
    %1569 = vmatprep.subr.bf16.mxu0 %v1156
    %1570 = vmatpush1.bf16.msra.mxu0 %v1155
    %1571 = vmatprep.subr.bf16.mxu0 %v1164
    %1572 = vmatpush1.bf16.msra.mxu0 %v1163
    %1573 = vmatprep.subr.bf16.mxu0 %v1172
    %1574 = vmatpush1.bf16.msra.mxu0 %v1171
    %1575 = vmatprep.subr.bf16.mxu0 %v1180
    %1576 = vmatpush1.bf16.msra.mxu0 %v1179
    %1577 = vmatprep.mubr.bf16.mxu0 %v1544
    %1578 = vmatmul.mubr.bf16.gmra.mrb[0].mxu0 %v1543
    %v1579 = vpop.f32.mrb[0].mxu0
    %v1580 = vadd.f32 0.0, %v1579
    %v1581 = vpop.f32.mrb[0].mxu0
    %v1582 = vadd.f32 0.0, %v1581
    %v1583 = vpop.f32.mrb[0].mxu0
    %v1584 = vpop.f32.mrb[0].mxu0
    %1585 = vdwg.mxu0
    %1586 = vmatprep.subr.bf16.mxu0 %v1062
    %1587 = vmatpush1.bf16.msra.mxu0 %v1061
    %1588 = vmatprep.subr.bf16.mxu0 %v1070
    %1589 = vmatpush1.bf16.msra.mxu0 %v1069
    %1590 = vmatprep.subr.bf16.mxu0 %v1078
    %1591 = vmatpush1.bf16.msra.mxu0 %v1077
    %1592 = vmatprep.subr.bf16.mxu0 %v1086
    %1593 = vmatpush1.bf16.msra.mxu0 %v1085
    %1594 = vmatprep.subr.bf16.mxu0 %v1094
    %1595 = vmatpush1.bf16.msra.mxu0 %v1093
    %1596 = vmatprep.subr.bf16.mxu0 %v1102
    %1597 = vmatpush1.bf16.msra.mxu0 %v1101
    %1598 = vmatprep.subr.bf16.mxu0 %v1110
    %1599 = vmatpush1.bf16.msra.mxu0 %v1109
    %1600 = vmatprep.subr.bf16.mxu0 %v1118
    %1601 = vmatpush1.bf16.msra.mxu0 %v1117
    %1602 = vmatprep.subr.bf16.mxu0 %v1126
    %1603 = vmatpush1.bf16.msra.mxu0 %v1125
    %1604 = vmatprep.subr.bf16.mxu0 %v1134
    %1605 = vmatpush1.bf16.msra.mxu0 %v1133
    %1606 = vmatprep.subr.bf16.mxu0 %v1142
    %1607 = vmatpush1.bf16.msra.mxu0 %v1141
    %1608 = vmatprep.subr.bf16.mxu0 %v1150
    %1609 = vmatpush1.bf16.msra.mxu0 %v1149
    %1610 = vmatprep.subr.bf16.mxu0 %v1158
    %1611 = vmatpush1.bf16.msra.mxu0 %v1157
    %1612 = vmatprep.subr.bf16.mxu0 %v1166
    %1613 = vmatpush1.bf16.msra.mxu0 %v1165
    %1614 = vmatprep.subr.bf16.mxu0 %v1174
    %1615 = vmatpush1.bf16.msra.mxu0 %v1173
    %1616 = vmatprep.subr.bf16.mxu0 %v1182
    %1617 = vmatpush1.bf16.msra.mxu0 %v1181
    %1618 = vmatprep.mubr.bf16.mxu0 %v1544
    %1619 = vmatmul.mubr.bf16.gmra.mrb[0].mxu0 %v1543
    %v1620 = vpop.f32.mrb[0].mxu0
    %v1621 = vadd.f32 0.0, %v1620
    %v1622 = vpop.f32.mrb[0].mxu0
    %v1623 = vadd.f32 0.0, %v1622
    %v1624 = vpop.f32.mrb[0].mxu0
    %v1625 = vpop.f32.mrb[0].mxu0
    %1626 = vdwg.mxu0
    %1627 = vmatprep.subr.bf16.mxu0 %v1064
    %1628 = vmatpush1.bf16.msra.mxu0 %v1063
    %1629 = vmatprep.subr.bf16.mxu0 %v1072
    %1630 = vmatpush1.bf16.msra.mxu0 %v1071
    %1631 = vmatprep.subr.bf16.mxu0 %v1080
    %1632 = vmatpush1.bf16.msra.mxu0 %v1079
    %1633 = vmatprep.subr.bf16.mxu0 %v1088
    %1634 = vmatpush1.bf16.msra.mxu0 %v1087
    %1635 = vmatprep.subr.bf16.mxu0 %v1096
    %1636 = vmatpush1.bf16.msra.mxu0 %v1095
    %1637 = vmatprep.subr.bf16.mxu0 %v1104
    %1638 = vmatpush1.bf16.msra.mxu0 %v1103
    %1639 = vmatprep.subr.bf16.mxu0 %v1112
    %1640 = vmatpush1.bf16.msra.mxu0 %v1111
    %1641 = vmatprep.subr.bf16.mxu0 %v1120
    %1642 = vmatpush1.bf16.msra.mxu0 %v1119
    %1643 = vmatprep.subr.bf16.mxu0 %v1128
    %1644 = vmatpush1.bf16.msra.mxu0 %v1127
    %1645 = vmatprep.subr.bf16.mxu0 %v1136
    %1646 = vmatpush1.bf16.msra.mxu0 %v1135
    %1647 = vmatprep.subr.bf16.mxu0 %v1144
    %1648 = vmatpush1.bf16.msra.mxu0 %v1143
    %1649 = vmatprep.subr.bf16.mxu0 %v1152
    %1650 = vmatpush1.bf16.msra.mxu0 %v1151
    %1651 = vmatprep.subr.bf16.mxu0 %v1160
    %1652 = vmatpush1.bf16.msra.mxu0 %v1159
    %1653 = vmatprep.subr.bf16.mxu0 %v1168
    %1654 = vmatpush1.bf16.msra.mxu0 %v1167
    %1655 = vmatprep.subr.bf16.mxu0 %v1176
    %1656 = vmatpush1.bf16.msra.mxu0 %v1175
    %1657 = vmatprep.subr.bf16.mxu0 %v1184
    %1658 = vmatpush1.bf16.msra.mxu0 %v1183
    %1659 = vmatprep.mubr.bf16.mxu0 %v1544
    %1660 = vmatmul.mubr.bf16.gmra.mrb[0].mxu0 %v1543
    %v1661 = vpop.f32.mrb[0].mxu0
    %v1662 = vadd.f32 0.0, %v1661
    %v1663 = vpop.f32.mrb[0].mxu0
    %v1664 = vadd.f32 0.0, %v1663
    %v1665 = vpop.f32.mrb[0].mxu0
    %v1666 = vpop.f32.mrb[0].mxu0
    %1667 = vdwg.mxu0
    %1668 = vmatprep.subr.bf16.mxu0 %v1066
    %1669 = vmatpush1.bf16.msra.mxu0 %v1065
    %1670 = vmatprep.subr.bf16.mxu0 %v1074
    %1671 = vmatpush1.bf16.msra.mxu0 %v1073
    %1672 = vmatprep.subr.bf16.mxu0 %v1082
    %1673 = vmatpush1.bf16.msra.mxu0 %v1081
    %1674 = vmatprep.subr.bf16.mxu0 %v1090
    %1675 = vmatpush1.bf16.msra.mxu0 %v1089
    %1676 = vmatprep.subr.bf16.mxu0 %v1098
    %1677 = vmatpush1.bf16.msra.mxu0 %v1097
    %1678 = vmatprep.subr.bf16.mxu0 %v1106
    %1679 = vmatpush1.bf16.msra.mxu0 %v1105
    %1680 = vmatprep.subr.bf16.mxu0 %v1114
    %1681 = vmatpush1.bf16.msra.mxu0 %v1113
    %1682 = vmatprep.subr.bf16.mxu0 %v1122
    %1683 = vmatpush1.bf16.msra.mxu0 %v1121
    %1684 = vmatprep.subr.bf16.mxu0 %v1130
    %1685 = vmatpush1.bf16.msra.mxu0 %v1129
    %1686 = vmatprep.subr.bf16.mxu0 %v1138
    %1687 = vmatpush1.bf16.msra.mxu0 %v1137
    %1688 = vmatprep.subr.bf16.mxu0 %v1146
    %1689 = vmatpush1.bf16.msra.mxu0 %v1145
    %1690 = vmatprep.subr.bf16.mxu0 %v1154
    %1691 = vmatpush1.bf16.msra.mxu0 %v1153
    %1692 = vmatprep.subr.bf16.mxu0 %v1162
    %1693 = vmatpush1.bf16.msra.mxu0 %v1161
    %1694 = vmatprep.subr.bf16.mxu0 %v1170
    %1695 = vmatpush1.bf16.msra.mxu0 %v1169
    %1696 = vmatprep.subr.bf16.mxu0 %v1178
    %1697 = vmatpush1.bf16.msra.mxu0 %v1177
    %1698 = vmatprep.subr.bf16.mxu0 %v1186
    %1699 = vmatpush1.bf16.msra.mxu0 %v1185
    %1700 = vmatprep.mubr.bf16.mxu0 %v1544
    %1701 = vmatmul.mubr.bf16.gmra.mrb[0].mxu0 %v1543
    %v1702 = vpop.f32.mrb[0].mxu0
    %v1703 = vadd.f32 0.0, %v1702
    %v1704 = vpop.f32.mrb[0].mxu0
    %v1705 = vadd.f32 0.0, %v1704
    %v1706 = vpop.f32.mrb[0].mxu0
    %v1707 = vpop.f32.mrb[0].mxu0
    %1708 = vdwg.mxu0
    %v1709 = vadd.f32 %v1662, %v624
    %v1710 = vadd.f32 %v1664, %v628
    %v1711 = vadd.f32 %v1703, %v632
    %v1712 = vadd.f32 %v1705, %v636
    %v1713 = vxor.u32 %v1709, 2147483648
    %v1714 = vmul.f32 %v1713, 1.442695
    %v1715 = vpow.pop %v1714
    %v1716 = vadd.f32 %v1715, 1.0
    %v1717 = vrcp.pop %v1716
    %v1718 = vmul.f32 1.0, %v1717
    %v1719 = vxor.u32 %v1710, 2147483648
    %v1720 = vmul.f32 %v1719, 1.442695
    %v1721 = vpow.pop %v1720
    %v1722 = vadd.f32 %v1721, 1.0
    %v1723 = vrcp.pop %v1722
    %v1724 = vmul.f32 1.0, %v1723
    %v1725 = vtanh.pop %v1711
    %v1726 = vxor.u32 %v1712, 2147483648
    %v1727 = vmul.f32 %v1726, 1.442695
    %v1728 = vpow.pop %v1727
    %v1729 = vadd.f32 %v1728, 1.0
    %v1730 = vrcp.pop %v1729
    %v1731 = vmul.f32 1.0, %v1730
    %v1732 = vmul.f32 %v1724, %v1504
    %v1733 = vmul.f32 %v1718, %v1725
    %v1734 = vadd.f32 %v1732, %v1733
    %v1735 = vtanh.pop %v1734
    %v1736 = vmul.f32 %v1731, %v1735
    %1737 = vst [vmem:[#allocation3 + $0x8] sm:$0xff] %v1736
    %v1738 = vld [vmem:[#allocation2 + $0x40] sm:$0xff]
    %v1739 = vld [vmem:[#allocation2 + $0x48] sm:$0xff]
    %v1740 = vld [vmem:[#allocation2 + $0x50] sm:$0xff]
    %v1741 = vld [vmem:[#allocation2 + $0x58] sm:$0xff]
    %v1742 = vadd.f32 %v1738, %v1580
    %v1743 = vadd.f32 %v1739, %v1582
    %v1744 = vadd.f32 %v1740, %v1621
    %v1745 = vadd.f32 %v1741, %v1623
    %v1746 = vxor.u32 %v1742, 2147483648
    %v1747 = vmul.f32 %v1746, 1.442695
    %v1748 = vpow.pop %v1747
    %v1749 = vadd.f32 %v1748, 1.0
    %v1750 = vrcp.pop %v1749
    %v1751 = vmul.f32 1.0, %v1750
    %v1752 = vxor.u32 %v1743, 2147483648
    %v1753 = vmul.f32 %v1752, 1.442695
    %v1754 = vpow.pop %v1753
    %v1755 = vadd.f32 %v1754, 1.0
    %v1756 = vrcp.pop %v1755
    %v1757 = vmul.f32 1.0, %v1756
    %v1758 = vtanh.pop %v1744
    %v1759 = vxor.u32 %v1745, 2147483648
    %v1760 = vmul.f32 %v1759, 1.442695
    %v1761 = vpow.pop %v1760
    %v1762 = vadd.f32 %v1761, 1.0
    %v1763 = vrcp.pop %v1762
    %v1764 = vmul.f32 1.0, %v1763
    %v1765 = vmul.f32 %v1757, %v1537
    %v1766 = vmul.f32 %v1751, %v1758
    %v1767 = vadd.f32 %v1765, %v1766
    %v1768 = vtanh.pop %v1767
    %v1769 = vmul.f32 %v1764, %v1768
    %1770 = vst [vmem:[#allocation3] sm:$0xff] %v1769
    %v1771 = vld [vmem:[#allocation3] sm:$0xff]
    %v1772 = vld [vmem:[#allocation3 + $0x8] sm:$0xff]
    %v1773 = vpack.c.bf16 %v1771, %v1771
    %v1774 = vpack.c.bf16 %v1772, %v1772
    %1775 = vmatprep.subr.bf16.mxu0 %v1060
    %1776 = vmatpush1.bf16.msra.mxu0 %v1059
    %1777 = vmatprep.subr.bf16.mxu0 %v1068
    %1778 = vmatpush1.bf16.msra.mxu0 %v1067
    %1779 = vmatprep.subr.bf16.mxu0 %v1076
    %1780 = vmatpush1.bf16.msra.mxu0 %v1075
    %1781 = vmatprep.subr.bf16.mxu0 %v1084
    %1782 = vmatpush1.bf16.msra.mxu0 %v1083
    %1783 = vmatprep.subr.bf16.mxu0 %v1092
    %1784 = vmatpush1.bf16.msra.mxu0 %v1091
    %1785 = vmatprep.subr.bf16.mxu0 %v1100
    %1786 = vmatpush1.bf16.msra.mxu0 %v1099
    %1787 = vmatprep.subr.bf16.mxu0 %v1108
    %1788 = vmatpush1.bf16.msra.mxu0 %v1107
    %1789 = vmatprep.subr.bf16.mxu0 %v1116
    %1790 = vmatpush1.bf16.msra.mxu0 %v1115
    %1791 = vmatprep.subr.bf16.mxu0 %v1124
    %1792 = vmatpush1.bf16.msra.mxu0 %v1123
    %1793 = vmatprep.subr.bf16.mxu0 %v1132
    %1794 = vmatpush1.bf16.msra.mxu0 %v1131
    %1795 = vmatprep.subr.bf16.mxu0 %v1140
    %1796 = vmatpush1.bf16.msra.mxu0 %v1139
    %1797 = vmatprep.subr.bf16.mxu0 %v1148
    %1798 = vmatpush1.bf16.msra.mxu0 %v1147
    %1799 = vmatprep.subr.bf16.mxu0 %v1156
    %1800 = vmatpush1.bf16.msra.mxu0 %v1155
    %1801 = vmatprep.subr.bf16.mxu0 %v1164
    %1802 = vmatpush1.bf16.msra.mxu0 %v1163
    %1803 = vmatprep.subr.bf16.mxu0 %v1172
    %1804 = vmatpush1.bf16.msra.mxu0 %v1171
    %1805 = vmatprep.subr.bf16.mxu0 %v1180
    %1806 = vmatpush1.bf16.msra.mxu0 %v1179
    %1807 = vmatprep.mubr.bf16.mxu0 %v1774
    %1808 = vmatmul.mubr.bf16.gmra.mrb[0].mxu0 %v1773
    %v1809 = vpop.f32.mrb[0].mxu0
    %v1810 = vadd.f32 0.0, %v1809
    %v1811 = vpop.f32.mrb[0].mxu0
    %v1812 = vadd.f32 0.0, %v1811
    %v1813 = vpop.f32.mrb[0].mxu0
    %v1814 = vpop.f32.mrb[0].mxu0
    %1815 = vdwg.mxu0
    %1816 = vmatprep.subr.bf16.mxu0 %v1062
    %1817 = vmatpush1.bf16.msra.mxu0 %v1061
    %1818 = vmatprep.subr.bf16.mxu0 %v1070
    %1819 = vmatpush1.bf16.msra.mxu0 %v1069
    %1820 = vmatprep.subr.bf16.mxu0 %v1078
    %1821 = vmatpush1.bf16.msra.mxu0 %v1077
    %1822 = vmatprep.subr.bf16.mxu0 %v1086
    %1823 = vmatpush1.bf16.msra.mxu0 %v1085
    %1824 = vmatprep.subr.bf16.mxu0 %v1094
    %1825 = vmatpush1.bf16.msra.mxu0 %v1093
    %1826 = vmatprep.subr.bf16.mxu0 %v1102
    %1827 = vmatpush1.bf16.msra.mxu0 %v1101
    %1828 = vmatprep.subr.bf16.mxu0 %v1110
    %1829 = vmatpush1.bf16.msra.mxu0 %v1109
    %1830 = vmatprep.subr.bf16.mxu0 %v1118
    %1831 = vmatpush1.bf16.msra.mxu0 %v1117
    %1832 = vmatprep.subr.bf16.mxu0 %v1126
    %1833 = vmatpush1.bf16.msra.mxu0 %v1125
    %1834 = vmatprep.subr.bf16.mxu0 %v1134
    %1835 = vmatpush1.bf16.msra.mxu0 %v1133
    %1836 = vmatprep.subr.bf16.mxu0 %v1142
    %1837 = vmatpush1.bf16.msra.mxu0 %v1141
    %1838 = vmatprep.subr.bf16.mxu0 %v1150
    %1839 = vmatpush1.bf16.msra.mxu0 %v1149
    %1840 = vmatprep.subr.bf16.mxu0 %v1158
    %1841 = vmatpush1.bf16.msra.mxu0 %v1157
    %1842 = vmatprep.subr.bf16.mxu0 %v1166
    %1843 = vmatpush1.bf16.msra.mxu0 %v1165
    %1844 = vmatprep.subr.bf16.mxu0 %v1174
    %1845 = vmatpush1.bf16.msra.mxu0 %v1173
    %1846 = vmatprep.subr.bf16.mxu0 %v1182
    %1847 = vmatpush1.bf16.msra.mxu0 %v1181
    %1848 = vmatprep.mubr.bf16.mxu0 %v1774
    %1849 = vmatmul.mubr.bf16.gmra.mrb[0].mxu0 %v1773
    %v1850 = vpop.f32.mrb[0].mxu0
    %v1851 = vadd.f32 0.0, %v1850
    %v1852 = vpop.f32.mrb[0].mxu0
    %v1853 = vadd.f32 0.0, %v1852
    %v1854 = vpop.f32.mrb[0].mxu0
    %v1855 = vpop.f32.mrb[0].mxu0
    %1856 = vdwg.mxu0
    %1857 = vmatprep.subr.bf16.mxu0 %v1064
    %1858 = vmatpush1.bf16.msra.mxu0 %v1063
    %1859 = vmatprep.subr.bf16.mxu0 %v1072
    %1860 = vmatpush1.bf16.msra.mxu0 %v1071
    %1861 = vmatprep.subr.bf16.mxu0 %v1080
    %1862 = vmatpush1.bf16.msra.mxu0 %v1079
    %1863 = vmatprep.subr.bf16.mxu0 %v1088
    %1864 = vmatpush1.bf16.msra.mxu0 %v1087
    %1865 = vmatprep.subr.bf16.mxu0 %v1096
    %1866 = vmatpush1.bf16.msra.mxu0 %v1095
    %1867 = vmatprep.subr.bf16.mxu0 %v1104
    %1868 = vmatpush1.bf16.msra.mxu0 %v1103
    %1869 = vmatprep.subr.bf16.mxu0 %v1112
    %1870 = vmatpush1.bf16.msra.mxu0 %v1111
    %1871 = vmatprep.subr.bf16.mxu0 %v1120
    %1872 = vmatpush1.bf16.msra.mxu0 %v1119
    %1873 = vmatprep.subr.bf16.mxu0 %v1128
    %1874 = vmatpush1.bf16.msra.mxu0 %v1127
    %1875 = vmatprep.subr.bf16.mxu0 %v1136
    %1876 = vmatpush1.bf16.msra.mxu0 %v1135
    %1877 = vmatprep.subr.bf16.mxu0 %v1144
    %1878 = vmatpush1.bf16.msra.mxu0 %v1143
    %1879 = vmatprep.subr.bf16.mxu0 %v1152
    %1880 = vmatpush1.bf16.msra.mxu0 %v1151
    %1881 = vmatprep.subr.bf16.mxu0 %v1160
    %1882 = vmatpush1.bf16.msra.mxu0 %v1159
    %1883 = vmatprep.subr.bf16.mxu0 %v1168
    %1884 = vmatpush1.bf16.msra.mxu0 %v1167
    %1885 = vmatprep.subr.bf16.mxu0 %v1176
    %1886 = vmatpush1.bf16.msra.mxu0 %v1175
    %1887 = vmatprep.subr.bf16.mxu0 %v1184
    %1888 = vmatpush1.bf16.msra.mxu0 %v1183
    %1889 = vmatprep.mubr.bf16.mxu0 %v1774
    %1890 = vmatmul.mubr.bf16.gmra.mrb[0].mxu0 %v1773
    %v1891 = vpop.f32.mrb[0].mxu0
    %v1892 = vadd.f32 0.0, %v1891
    %v1893 = vpop.f32.mrb[0].mxu0
    %v1894 = vadd.f32 0.0, %v1893
    %v1895 = vpop.f32.mrb[0].mxu0
    %v1896 = vpop.f32.mrb[0].mxu0
    %1897 = vdwg.mxu0
    %1898 = vmatprep.subr.bf16.mxu0 %v1066
    %1899 = vmatpush1.bf16.msra.mxu0 %v1065
    %1900 = vmatprep.subr.bf16.mxu0 %v1074
    %1901 = vmatpush1.bf16.msra.mxu0 %v1073
    %1902 = vmatprep.subr.bf16.mxu0 %v1082
    %1903 = vmatpush1.bf16.msra.mxu0 %v1081
    %1904 = vmatprep.subr.bf16.mxu0 %v1090
    %1905 = vmatpush1.bf16.msra.mxu0 %v1089
    %1906 = vmatprep.subr.bf16.mxu0 %v1098
    %1907 = vmatpush1.bf16.msra.mxu0 %v1097
    %1908 = vmatprep.subr.bf16.mxu0 %v1106
    %1909 = vmatpush1.bf16.msra.mxu0 %v1105
    %1910 = vmatprep.subr.bf16.mxu0 %v1114
    %1911 = vmatpush1.bf16.msra.mxu0 %v1113
    %1912 = vmatprep.subr.bf16.mxu0 %v1122
    %1913 = vmatpush1.bf16.msra.mxu0 %v1121
    %1914 = vmatprep.subr.bf16.mxu0 %v1130
    %1915 = vmatpush1.bf16.msra.mxu0 %v1129
    %1916 = vmatprep.subr.bf16.mxu0 %v1138
    %1917 = vmatpush1.bf16.msra.mxu0 %v1137
    %1918 = vmatprep.subr.bf16.mxu0 %v1146
    %1919 = vmatpush1.bf16.msra.mxu0 %v1145
    %1920 = vmatprep.subr.bf16.mxu0 %v1154
    %1921 = vmatpush1.bf16.msra.mxu0 %v1153
    %1922 = vmatprep.subr.bf16.mxu0 %v1162
    %1923 = vmatpush1.bf16.msra.mxu0 %v1161
    %1924 = vmatprep.subr.bf16.mxu0 %v1170
    %1925 = vmatpush1.bf16.msra.mxu0 %v1169
    %1926 = vmatprep.subr.bf16.mxu0 %v1178
    %1927 = vmatpush1.bf16.msra.mxu0 %v1177
    %1928 = vmatprep.subr.bf16.mxu0 %v1186
    %1929 = vmatpush1.bf16.msra.mxu0 %v1185
    %1930 = vmatprep.mubr.bf16.mxu0 %v1774
    %1931 = vmatmul.mubr.bf16.gmra.mrb[0].mxu0 %v1773
    %v1932 = vpop.f32.mrb[0].mxu0
    %v1933 = vadd.f32 0.0, %v1932
    %v1934 = vpop.f32.mrb[0].mxu0
    %v1935 = vadd.f32 0.0, %v1934
    %v1936 = vpop.f32.mrb[0].mxu0
    %v1937 = vpop.f32.mrb[0].mxu0
    %1938 = vdwg.mxu0
    %v1939 = vadd.f32 %v1892, %v624
    %v1940 = vadd.f32 %v1894, %v628
    %v1941 = vadd.f32 %v1933, %v632
    %v1942 = vadd.f32 %v1935, %v636
    %v1943 = vxor.u32 %v1939, 2147483648
    %v1944 = vmul.f32 %v1943, 1.442695
    %v1945 = vpow.pop %v1944
    %v1946 = vadd.f32 %v1945, 1.0
    %v1947 = vrcp.pop %v1946
    %v1948 = vmul.f32 1.0, %v1947
    %v1949 = vxor.u32 %v1940, 2147483648
    %v1950 = vmul.f32 %v1949, 1.442695
    %v1951 = vpow.pop %v1950
    %v1952 = vadd.f32 %v1951, 1.0
    %v1953 = vrcp.pop %v1952
    %v1954 = vmul.f32 1.0, %v1953
    %v1955 = vtanh.pop %v1941
    %v1956 = vxor.u32 %v1942, 2147483648
    %v1957 = vmul.f32 %v1956, 1.442695
    %v1958 = vpow.pop %v1957
    %v1959 = vadd.f32 %v1958, 1.0
    %v1960 = vrcp.pop %v1959
    %v1961 = vmul.f32 1.0, %v1960
    %v1962 = vmul.f32 %v1954, %v1734
    %v1963 = vmul.f32 %v1948, %v1955
    %v1964 = vadd.f32 %v1962, %v1963
    %v1965 = vtanh.pop %v1964
    %v1966 = vmul.f32 %v1961, %v1965
    %1967 = vst [vmem:[#allocation3 + $0x8] sm:$0xff] %v1966
    %v1968 = vld [vmem:[#allocation2 + $0x60] sm:$0xff]
    %v1969 = vld [vmem:[#allocation2 + $0x68] sm:$0xff]
    %v1970 = vld [vmem:[#allocation2 + $0x70] sm:$0xff]
    %v1971 = vld [vmem:[#allocation2 + $0x78] sm:$0xff]
    %v1972 = vadd.f32 %v1968, %v1810
    %v1973 = vadd.f32 %v1969, %v1812
    %v1974 = vadd.f32 %v1970, %v1851
    %v1975 = vadd.f32 %v1971, %v1853
    %v1976 = vxor.u32 %v1972, 2147483648
    %v1977 = vmul.f32 %v1976, 1.442695
    %v1978 = vpow.pop %v1977
    %v1979 = vadd.f32 %v1978, 1.0
    %v1980 = vrcp.pop %v1979
    %v1981 = vmul.f32 1.0, %v1980
    %v1982 = vxor.u32 %v1973, 2147483648
    %v1983 = vmul.f32 %v1982, 1.442695
    %v1984 = vpow.pop %v1983
    %v1985 = vadd.f32 %v1984, 1.0
    %v1986 = vrcp.pop %v1985
    %v1987 = vmul.f32 1.0, %v1986
    %v1988 = vtanh.pop %v1974
    %v1989 = vxor.u32 %v1975, 2147483648
    %v1990 = vmul.f32 %v1989, 1.442695
    %v1991 = vpow.pop %v1990
    %v1992 = vadd.f32 %v1991, 1.0
    %v1993 = vrcp.pop %v1992
    %v1994 = vmul.f32 1.0, %v1993
    %v1995 = vmul.f32 %v1987, %v1767
    %v1996 = vmul.f32 %v1981, %v1988
    %v1997 = vadd.f32 %v1995, %v1996
    %v1998 = vtanh.pop %v1997
    %v1999 = vmul.f32 %v1994, %v1998
    %2000 = vst [vmem:[#allocation3] sm:$0xff] %v1999
    %v2001 = vld [vmem:[#allocation3] sm:$0xff]
    %v2002 = vld [vmem:[#allocation3 + $0x8] sm:$0xff]
    %v2003 = vpack.c.bf16 %v2001, %v2001
    %v2004 = vpack.c.bf16 %v2002, %v2002
    %2005 = vmatprep.subr.bf16.mxu0 %v1060
    %2006 = vmatpush1.bf16.msra.mxu0 %v1059
    %2007 = vmatprep.subr.bf16.mxu0 %v1068
    %2008 = vmatpush1.bf16.msra.mxu0 %v1067
    %2009 = vmatprep.subr.bf16.mxu0 %v1076
    %2010 = vmatpush1.bf16.msra.mxu0 %v1075
    %2011 = vmatprep.subr.bf16.mxu0 %v1084
    %2012 = vmatpush1.bf16.msra.mxu0 %v1083
    %2013 = vmatprep.subr.bf16.mxu0 %v1092
    %2014 = vmatpush1.bf16.msra.mxu0 %v1091
    %2015 = vmatprep.subr.bf16.mxu0 %v1100
    %2016 = vmatpush1.bf16.msra.mxu0 %v1099
    %2017 = vmatprep.subr.bf16.mxu0 %v1108
    %2018 = vmatpush1.bf16.msra.mxu0 %v1107
    %2019 = vmatprep.subr.bf16.mxu0 %v1116
    %2020 = vmatpush1.bf16.msra.mxu0 %v1115
    %2021 = vmatprep.subr.bf16.mxu0 %v1124
    %2022 = vmatpush1.bf16.msra.mxu0 %v1123
    %2023 = vmatprep.subr.bf16.mxu0 %v1132
    %2024 = vmatpush1.bf16.msra.mxu0 %v1131
    %2025 = vmatprep.subr.bf16.mxu0 %v1140
    %2026 = vmatpush1.bf16.msra.mxu0 %v1139
    %2027 = vmatprep.subr.bf16.mxu0 %v1148
    %2028 = vmatpush1.bf16.msra.mxu0 %v1147
    %2029 = vmatprep.subr.bf16.mxu0 %v1156
    %2030 = vmatpush1.bf16.msra.mxu0 %v1155
    %2031 = vmatprep.subr.bf16.mxu0 %v1164
    %2032 = vmatpush1.bf16.msra.mxu0 %v1163
    %2033 = vmatprep.subr.bf16.mxu0 %v1172
    %2034 = vmatpush1.bf16.msra.mxu0 %v1171
    %2035 = vmatprep.subr.bf16.mxu0 %v1180
    %2036 = vmatpush1.bf16.msra.mxu0 %v1179
    %2037 = vmatprep.mubr.bf16.mxu0 %v2004
    %2038 = vmatmul.mubr.bf16.gmra.mrb[0].mxu0 %v2003
    %v2039 = vpop.f32.mrb[0].mxu0
    %v2040 = vadd.f32 0.0, %v2039
    %v2041 = vpop.f32.mrb[0].mxu0
    %v2042 = vadd.f32 0.0, %v2041
    %v2043 = vpop.f32.mrb[0].mxu0
    %v2044 = vpop.f32.mrb[0].mxu0
    %2045 = vdwg.mxu0
    %2046 = vmatprep.subr.bf16.mxu0 %v1062
    %2047 = vmatpush1.bf16.msra.mxu0 %v1061
    %2048 = vmatprep.subr.bf16.mxu0 %v1070
    %2049 = vmatpush1.bf16.msra.mxu0 %v1069
    %2050 = vmatprep.subr.bf16.mxu0 %v1078
    %2051 = vmatpush1.bf16.msra.mxu0 %v1077
    %2052 = vmatprep.subr.bf16.mxu0 %v1086
    %2053 = vmatpush1.bf16.msra.mxu0 %v1085
    %2054 = vmatprep.subr.bf16.mxu0 %v1094
    %2055 = vmatpush1.bf16.msra.mxu0 %v1093
    %2056 = vmatprep.subr.bf16.mxu0 %v1102
    %2057 = vmatpush1.bf16.msra.mxu0 %v1101
    %2058 = vmatprep.subr.bf16.mxu0 %v1110
    %2059 = vmatpush1.bf16.msra.mxu0 %v1109
    %2060 = vmatprep.subr.bf16.mxu0 %v1118
    %2061 = vmatpush1.bf16.msra.mxu0 %v1117
    %2062 = vmatprep.subr.bf16.mxu0 %v1126
    %2063 = vmatpush1.bf16.msra.mxu0 %v1125
    %2064 = vmatprep.subr.bf16.mxu0 %v1134
    %2065 = vmatpush1.bf16.msra.mxu0 %v1133
    %2066 = vmatprep.subr.bf16.mxu0 %v1142
    %2067 = vmatpush1.bf16.msra.mxu0 %v1141
    %2068 = vmatprep.subr.bf16.mxu0 %v1150
    %2069 = vmatpush1.bf16.msra.mxu0 %v1149
    %2070 = vmatprep.subr.bf16.mxu0 %v1158
    %2071 = vmatpush1.bf16.msra.mxu0 %v1157
    %2072 = vmatprep.subr.bf16.mxu0 %v1166
    %2073 = vmatpush1.bf16.msra.mxu0 %v1165
    %2074 = vmatprep.subr.bf16.mxu0 %v1174
    %2075 = vmatpush1.bf16.msra.mxu0 %v1173
    %2076 = vmatprep.subr.bf16.mxu0 %v1182
    %2077 = vmatpush1.bf16.msra.mxu0 %v1181
    %2078 = vmatprep.mubr.bf16.mxu0 %v2004
    %2079 = vmatmul.mubr.bf16.gmra.mrb[0].mxu0 %v2003
    %v2080 = vpop.f32.mrb[0].mxu0
    %v2081 = vadd.f32 0.0, %v2080
    %v2082 = vpop.f32.mrb[0].mxu0
    %v2083 = vadd.f32 0.0, %v2082
    %v2084 = vpop.f32.mrb[0].mxu0
    %v2085 = vpop.f32.mrb[0].mxu0
    %2086 = vdwg.mxu0
    %2087 = vmatprep.subr.bf16.mxu0 %v1064
    %2088 = vmatpush1.bf16.msra.mxu0 %v1063
    %2089 = vmatprep.subr.bf16.mxu0 %v1072
    %2090 = vmatpush1.bf16.msra.mxu0 %v1071
    %2091 = vmatprep.subr.bf16.mxu0 %v1080
    %2092 = vmatpush1.bf16.msra.mxu0 %v1079
    %2093 = vmatprep.subr.bf16.mxu0 %v1088
    %2094 = vmatpush1.bf16.msra.mxu0 %v1087
    %2095 = vmatprep.subr.bf16.mxu0 %v1096
    %2096 = vmatpush1.bf16.msra.mxu0 %v1095
    %2097 = vmatprep.subr.bf16.mxu0 %v1104
    %2098 = vmatpush1.bf16.msra.mxu0 %v1103
    %2099 = vmatprep.subr.bf16.mxu0 %v1112
    %2100 = vmatpush1.bf16.msra.mxu0 %v1111
    %2101 = vmatprep.subr.bf16.mxu0 %v1120
    %2102 = vmatpush1.bf16.msra.mxu0 %v1119
    %2103 = vmatprep.subr.bf16.mxu0 %v1128
    %2104 = vmatpush1.bf16.msra.mxu0 %v1127
    %2105 = vmatprep.subr.bf16.mxu0 %v1136
    %2106 = vmatpush1.bf16.msra.mxu0 %v1135
    %2107 = vmatprep.subr.bf16.mxu0 %v1144
    %2108 = vmatpush1.bf16.msra.mxu0 %v1143
    %2109 = vmatprep.subr.bf16.mxu0 %v1152
    %2110 = vmatpush1.bf16.msra.mxu0 %v1151
    %2111 = vmatprep.subr.bf16.mxu0 %v1160
    %2112 = vmatpush1.bf16.msra.mxu0 %v1159
    %2113 = vmatprep.subr.bf16.mxu0 %v1168
    %2114 = vmatpush1.bf16.msra.mxu0 %v1167
    %2115 = vmatprep.subr.bf16.mxu0 %v1176
    %2116 = vmatpush1.bf16.msra.mxu0 %v1175
    %2117 = vmatprep.subr.bf16.mxu0 %v1184
    %2118 = vmatpush1.bf16.msra.mxu0 %v1183
    %2119 = vmatprep.mubr.bf16.mxu0 %v2004
    %2120 = vmatmul.mubr.bf16.gmra.mrb[0].mxu0 %v2003
    %v2121 = vpop.f32.mrb[0].mxu0
    %v2122 = vadd.f32 0.0, %v2121
    %v2123 = vpop.f32.mrb[0].mxu0
    %v2124 = vadd.f32 0.0, %v2123
    %v2125 = vpop.f32.mrb[0].mxu0
    %v2126 = vpop.f32.mrb[0].mxu0
    %2127 = vdwg.mxu0
    %2128 = vmatprep.subr.bf16.mxu0 %v1066
    %2129 = vmatpush1.bf16.msra.mxu0 %v1065
    %2130 = vmatprep.subr.bf16.mxu0 %v1074
    %2131 = vmatpush1.bf16.msra.mxu0 %v1073
    %2132 = vmatprep.subr.bf16.mxu0 %v1082
    %2133 = vmatpush1.bf16.msra.mxu0 %v1081
    %2134 = vmatprep.subr.bf16.mxu0 %v1090
    %2135 = vmatpush1.bf16.msra.mxu0 %v1089
    %2136 = vmatprep.subr.bf16.mxu0 %v1098
    %2137 = vmatpush1.bf16.msra.mxu0 %v1097
    %2138 = vmatprep.subr.bf16.mxu0 %v1106
    %2139 = vmatpush1.bf16.msra.mxu0 %v1105
    %2140 = vmatprep.subr.bf16.mxu0 %v1114
    %2141 = vmatpush1.bf16.msra.mxu0 %v1113
    %2142 = vmatprep.subr.bf16.mxu0 %v1122
    %2143 = vmatpush1.bf16.msra.mxu0 %v1121
    %2144 = vmatprep.subr.bf16.mxu0 %v1130
    %2145 = vmatpush1.bf16.msra.mxu0 %v1129
    %2146 = vmatprep.subr.bf16.mxu0 %v1138
    %2147 = vmatpush1.bf16.msra.mxu0 %v1137
    %2148 = vmatprep.subr.bf16.mxu0 %v1146
    %2149 = vmatpush1.bf16.msra.mxu0 %v1145
    %2150 = vmatprep.subr.bf16.mxu0 %v1154
    %2151 = vmatpush1.bf16.msra.mxu0 %v1153
    %2152 = vmatprep.subr.bf16.mxu0 %v1162
    %2153 = vmatpush1.bf16.msra.mxu0 %v1161
    %2154 = vmatprep.subr.bf16.mxu0 %v1170
    %2155 = vmatpush1.bf16.msra.mxu0 %v1169
    %2156 = vmatprep.subr.bf16.mxu0 %v1178
    %2157 = vmatpush1.bf16.msra.mxu0 %v1177
    %2158 = vmatprep.subr.bf16.mxu0 %v1186
    %2159 = vmatpush1.bf16.msra.mxu0 %v1185
    %2160 = vmatprep.mubr.bf16.mxu0 %v2004
    %2161 = vmatmul.mubr.bf16.gmra.mrb[0].mxu0 %v2003
    %v2162 = vpop.f32.mrb[0].mxu0
    %v2163 = vadd.f32 0.0, %v2162
    %v2164 = vpop.f32.mrb[0].mxu0
    %v2165 = vadd.f32 0.0, %v2164
    %v2166 = vpop.f32.mrb[0].mxu0
    %v2167 = vpop.f32.mrb[0].mxu0
    %2168 = vdwg.mxu0
    %v2169 = vadd.f32 %v2122, %v624
    %v2170 = vadd.f32 %v2124, %v628
    %v2171 = vadd.f32 %v2163, %v632
    %v2172 = vadd.f32 %v2165, %v636
    %v2173 = vxor.u32 %v2169, 2147483648
    %v2174 = vmul.f32 %v2173, 1.442695
    %v2175 = vpow.pop %v2174
    %v2176 = vadd.f32 %v2175, 1.0
    %v2177 = vrcp.pop %v2176
    %v2178 = vmul.f32 1.0, %v2177
    %v2179 = vxor.u32 %v2170, 2147483648
    %v2180 = vmul.f32 %v2179, 1.442695
    %v2181 = vpow.pop %v2180
    %v2182 = vadd.f32 %v2181, 1.0
    %v2183 = vrcp.pop %v2182
    %v2184 = vmul.f32 1.0, %v2183
    %v2185 = vtanh.pop %v2171
    %v2186 = vxor.u32 %v2172, 2147483648
    %v2187 = vmul.f32 %v2186, 1.442695
    %v2188 = vpow.pop %v2187
    %v2189 = vadd.f32 %v2188, 1.0
    %v2190 = vrcp.pop %v2189
    %v2191 = vmul.f32 1.0, %v2190
    %v2192 = vmul.f32 %v2184, %v1964
    %v2193 = vmul.f32 %v2178, %v2185
    %v2194 = vadd.f32 %v2192, %v2193
    %v2195 = vtanh.pop %v2194
    %v2196 = vmul.f32 %v2191, %v2195
    %2197 = vst [vmem:[#allocation3 + $0x8] sm:$0xff] %v2196
    %v2198 = vld [vmem:[#allocation2 + $0x80] sm:$0xff]
    %v2199 = vld [vmem:[#allocation2 + $0x88] sm:$0xff]
    %v2200 = vld [vmem:[#allocation2 + $0x90] sm:$0xff]
    %v2201 = vld [vmem:[#allocation2 + $0x98] sm:$0xff]
    %v2202 = vadd.f32 %v2198, %v2040
    %v2203 = vadd.f32 %v2199, %v2042
    %v2204 = vadd.f32 %v2200, %v2081
    %v2205 = vadd.f32 %v2201, %v2083
    %v2206 = vxor.u32 %v2202, 2147483648
    %v2207 = vmul.f32 %v2206, 1.442695
    %v2208 = vpow.pop %v2207
    %v2209 = vadd.f32 %v2208, 1.0
    %v2210 = vrcp.pop %v2209
    %v2211 = vmul.f32 1.0, %v2210
    %v2212 = vxor.u32 %v2203, 2147483648
    %v2213 = vmul.f32 %v2212, 1.442695
    %v2214 = vpow.pop %v2213
    %v2215 = vadd.f32 %v2214, 1.0
    %v2216 = vrcp.pop %v2215
    %v2217 = vmul.f32 1.0, %v2216
    %v2218 = vtanh.pop %v2204
    %v2219 = vxor.u32 %v2205, 2147483648
    %v2220 = vmul.f32 %v2219, 1.442695
    %v2221 = vpow.pop %v2220
    %v2222 = vadd.f32 %v2221, 1.0
    %v2223 = vrcp.pop %v2222
    %v2224 = vmul.f32 1.0, %v2223
    %v2225 = vmul.f32 %v2217, %v1997
    %v2226 = vmul.f32 %v2211, %v2218
    %v2227 = vadd.f32 %v2225, %v2226
    %v2228 = vtanh.pop %v2227
    %v2229 = vmul.f32 %v2224, %v2228
    %2230 = vst [vmem:[#allocation3] sm:$0xff] %v2229
    %v2231 = vld [vmem:[#allocation3] sm:$0xff]
    %v2232 = vld [vmem:[#allocation3 + $0x8] sm:$0xff]
    %v2233 = vpack.c.bf16 %v2231, %v2231
    %v2234 = vpack.c.bf16 %v2232, %v2232
    %2235 = vmatprep.subr.bf16.mxu0 %v1060
    %2236 = vmatpush1.bf16.msra.mxu0 %v1059
    %2237 = vmatprep.subr.bf16.mxu0 %v1068
    %2238 = vmatpush1.bf16.msra.mxu0 %v1067
    %2239 = vmatprep.subr.bf16.mxu0 %v1076
    %2240 = vmatpush1.bf16.msra.mxu0 %v1075
    %2241 = vmatprep.subr.bf16.mxu0 %v1084
    %2242 = vmatpush1.bf16.msra.mxu0 %v1083
    %2243 = vmatprep.subr.bf16.mxu0 %v1092
    %2244 = vmatpush1.bf16.msra.mxu0 %v1091
    %2245 = vmatprep.subr.bf16.mxu0 %v1100
    %2246 = vmatpush1.bf16.msra.mxu0 %v1099
    %2247 = vmatprep.subr.bf16.mxu0 %v1108
    %2248 = vmatpush1.bf16.msra.mxu0 %v1107
    %2249 = vmatprep.subr.bf16.mxu0 %v1116
    %2250 = vmatpush1.bf16.msra.mxu0 %v1115
    %2251 = vmatprep.subr.bf16.mxu0 %v1124
    %2252 = vmatpush1.bf16.msra.mxu0 %v1123
    %2253 = vmatprep.subr.bf16.mxu0 %v1132
    %2254 = vmatpush1.bf16.msra.mxu0 %v1131
    %2255 = vmatprep.subr.bf16.mxu0 %v1140
    %2256 = vmatpush1.bf16.msra.mxu0 %v1139
    %2257 = vmatprep.subr.bf16.mxu0 %v1148
    %2258 = vmatpush1.bf16.msra.mxu0 %v1147
    %2259 = vmatprep.subr.bf16.mxu0 %v1156
    %2260 = vmatpush1.bf16.msra.mxu0 %v1155
    %2261 = vmatprep.subr.bf16.mxu0 %v1164
    %2262 = vmatpush1.bf16.msra.mxu0 %v1163
    %2263 = vmatprep.subr.bf16.mxu0 %v1172
    %2264 = vmatpush1.bf16.msra.mxu0 %v1171
    %2265 = vmatprep.subr.bf16.mxu0 %v1180
    %2266 = vmatpush1.bf16.msra.mxu0 %v1179
    %2267 = vmatprep.mubr.bf16.mxu0 %v2234
    %2268 = vmatmul.mubr.bf16.gmra.mrb[0].mxu0 %v2233
    %v2269 = vpop.f32.mrb[0].mxu0
    %v2270 = vadd.f32 0.0, %v2269
    %v2271 = vpop.f32.mrb[0].mxu0
    %v2272 = vadd.f32 0.0, %v2271
    %v2273 = vpop.f32.mrb[0].mxu0
    %v2274 = vpop.f32.mrb[0].mxu0
    %2275 = vdwg.mxu0
    %2276 = vmatprep.subr.bf16.mxu0 %v1062
    %2277 = vmatpush1.bf16.msra.mxu0 %v1061
    %2278 = vmatprep.subr.bf16.mxu0 %v1070
    %2279 = vmatpush1.bf16.msra.mxu0 %v1069
    %2280 = vmatprep.subr.bf16.mxu0 %v1078
    %2281 = vmatpush1.bf16.msra.mxu0 %v1077
    %2282 = vmatprep.subr.bf16.mxu0 %v1086
    %2283 = vmatpush1.bf16.msra.mxu0 %v1085
    %2284 = vmatprep.subr.bf16.mxu0 %v1094
    %2285 = vmatpush1.bf16.msra.mxu0 %v1093
    %2286 = vmatprep.subr.bf16.mxu0 %v1102
    %2287 = vmatpush1.bf16.msra.mxu0 %v1101
    %2288 = vmatprep.subr.bf16.mxu0 %v1110
    %2289 = vmatpush1.bf16.msra.mxu0 %v1109
    %2290 = vmatprep.subr.bf16.mxu0 %v1118
    %2291 = vmatpush1.bf16.msra.mxu0 %v1117
    %2292 = vmatprep.subr.bf16.mxu0 %v1126
    %2293 = vmatpush1.bf16.msra.mxu0 %v1125
    %2294 = vmatprep.subr.bf16.mxu0 %v1134
    %2295 = vmatpush1.bf16.msra.mxu0 %v1133
    %2296 = vmatprep.subr.bf16.mxu0 %v1142
    %2297 = vmatpush1.bf16.msra.mxu0 %v1141
    %2298 = vmatprep.subr.bf16.mxu0 %v1150
    %2299 = vmatpush1.bf16.msra.mxu0 %v1149
    %2300 = vmatprep.subr.bf16.mxu0 %v1158
    %2301 = vmatpush1.bf16.msra.mxu0 %v1157
    %2302 = vmatprep.subr.bf16.mxu0 %v1166
    %2303 = vmatpush1.bf16.msra.mxu0 %v1165
    %2304 = vmatprep.subr.bf16.mxu0 %v1174
    %2305 = vmatpush1.bf16.msra.mxu0 %v1173
    %2306 = vmatprep.subr.bf16.mxu0 %v1182
    %2307 = vmatpush1.bf16.msra.mxu0 %v1181
    %2308 = vmatprep.mubr.bf16.mxu0 %v2234
    %2309 = vmatmul.mubr.bf16.gmra.mrb[0].mxu0 %v2233
    %v2310 = vpop.f32.mrb[0].mxu0
    %v2311 = vadd.f32 0.0, %v2310
    %v2312 = vpop.f32.mrb[0].mxu0
    %v2313 = vadd.f32 0.0, %v2312
    %v2314 = vpop.f32.mrb[0].mxu0
    %v2315 = vpop.f32.mrb[0].mxu0
    %2316 = vdwg.mxu0
    %2317 = vmatprep.subr.bf16.mxu0 %v1064
    %2318 = vmatpush1.bf16.msra.mxu0 %v1063
    %2319 = vmatprep.subr.bf16.mxu0 %v1072
    %2320 = vmatpush1.bf16.msra.mxu0 %v1071
    %2321 = vmatprep.subr.bf16.mxu0 %v1080
    %2322 = vmatpush1.bf16.msra.mxu0 %v1079
    %2323 = vmatprep.subr.bf16.mxu0 %v1088
    %2324 = vmatpush1.bf16.msra.mxu0 %v1087
    %2325 = vmatprep.subr.bf16.mxu0 %v1096
    %2326 = vmatpush1.bf16.msra.mxu0 %v1095
    %2327 = vmatprep.subr.bf16.mxu0 %v1104
    %2328 = vmatpush1.bf16.msra.mxu0 %v1103
    %2329 = vmatprep.subr.bf16.mxu0 %v1112
    %2330 = vmatpush1.bf16.msra.mxu0 %v1111
    %2331 = vmatprep.subr.bf16.mxu0 %v1120
    %2332 = vmatpush1.bf16.msra.mxu0 %v1119
    %2333 = vmatprep.subr.bf16.mxu0 %v1128
    %2334 = vmatpush1.bf16.msra.mxu0 %v1127
    %2335 = vmatprep.subr.bf16.mxu0 %v1136
    %2336 = vmatpush1.bf16.msra.mxu0 %v1135
    %2337 = vmatprep.subr.bf16.mxu0 %v1144
    %2338 = vmatpush1.bf16.msra.mxu0 %v1143
    %2339 = vmatprep.subr.bf16.mxu0 %v1152
    %2340 = vmatpush1.bf16.msra.mxu0 %v1151
    %2341 = vmatprep.subr.bf16.mxu0 %v1160
    %2342 = vmatpush1.bf16.msra.mxu0 %v1159
    %2343 = vmatprep.subr.bf16.mxu0 %v1168
    %2344 = vmatpush1.bf16.msra.mxu0 %v1167
    %2345 = vmatprep.subr.bf16.mxu0 %v1176
    %2346 = vmatpush1.bf16.msra.mxu0 %v1175
    %2347 = vmatprep.subr.bf16.mxu0 %v1184
    %2348 = vmatpush1.bf16.msra.mxu0 %v1183
    %2349 = vmatprep.mubr.bf16.mxu0 %v2234
    %2350 = vmatmul.mubr.bf16.gmra.mrb[0].mxu0 %v2233
    %v2351 = vpop.f32.mrb[0].mxu0
    %v2352 = vadd.f32 0.0, %v2351
    %v2353 = vpop.f32.mrb[0].mxu0
    %v2354 = vadd.f32 0.0, %v2353
    %v2355 = vpop.f32.mrb[0].mxu0
    %v2356 = vpop.f32.mrb[0].mxu0
    %2357 = vdwg.mxu0
    %2358 = vmatprep.subr.bf16.mxu0 %v1066
    %2359 = vmatpush1.bf16.msra.mxu0 %v1065
    %2360 = vmatprep.subr.bf16.mxu0 %v1074
    %2361 = vmatpush1.bf16.msra.mxu0 %v1073
    %2362 = vmatprep.subr.bf16.mxu0 %v1082
    %2363 = vmatpush1.bf16.msra.mxu0 %v1081
    %2364 = vmatprep.subr.bf16.mxu0 %v1090
    %2365 = vmatpush1.bf16.msra.mxu0 %v1089
    %2366 = vmatprep.subr.bf16.mxu0 %v1098
    %2367 = vmatpush1.bf16.msra.mxu0 %v1097
    %2368 = vmatprep.subr.bf16.mxu0 %v1106
    %2369 = vmatpush1.bf16.msra.mxu0 %v1105
    %2370 = vmatprep.subr.bf16.mxu0 %v1114
    %2371 = vmatpush1.bf16.msra.mxu0 %v1113
    %2372 = vmatprep.subr.bf16.mxu0 %v1122
    %2373 = vmatpush1.bf16.msra.mxu0 %v1121
    %2374 = vmatprep.subr.bf16.mxu0 %v1130
    %2375 = vmatpush1.bf16.msra.mxu0 %v1129
    %2376 = vmatprep.subr.bf16.mxu0 %v1138
    %2377 = vmatpush1.bf16.msra.mxu0 %v1137
    %2378 = vmatprep.subr.bf16.mxu0 %v1146
    %2379 = vmatpush1.bf16.msra.mxu0 %v1145
    %2380 = vmatprep.subr.bf16.mxu0 %v1154
    %2381 = vmatpush1.bf16.msra.mxu0 %v1153
    %2382 = vmatprep.subr.bf16.mxu0 %v1162
    %2383 = vmatpush1.bf16.msra.mxu0 %v1161
    %2384 = vmatprep.subr.bf16.mxu0 %v1170
    %2385 = vmatpush1.bf16.msra.mxu0 %v1169
    %2386 = vmatprep.subr.bf16.mxu0 %v1178
    %2387 = vmatpush1.bf16.msra.mxu0 %v1177
    %2388 = vmatprep.subr.bf16.mxu0 %v1186
    %2389 = vmatpush1.bf16.msra.mxu0 %v1185
    %2390 = vmatprep.mubr.bf16.mxu0 %v2234
    %2391 = vmatmul.mubr.bf16.gmra.mrb[0].mxu0 %v2233
    %v2392 = vpop.f32.mrb[0].mxu0
    %v2393 = vadd.f32 0.0, %v2392
    %v2394 = vpop.f32.mrb[0].mxu0
    %v2395 = vadd.f32 0.0, %v2394
    %v2396 = vpop.f32.mrb[0].mxu0
    %v2397 = vpop.f32.mrb[0].mxu0
    %2398 = vdwg.mxu0
    %v2399 = vadd.f32 %v2352, %v624
    %v2400 = vadd.f32 %v2354, %v628
    %v2401 = vadd.f32 %v2393, %v632
    %v2402 = vadd.f32 %v2395, %v636
    %v2403 = vxor.u32 %v2399, 2147483648
    %v2404 = vmul.f32 %v2403, 1.442695
    %v2405 = vpow.pop %v2404
    %v2406 = vadd.f32 %v2405, 1.0
    %v2407 = vrcp.pop %v2406
    %v2408 = vmul.f32 1.0, %v2407
    %v2409 = vxor.u32 %v2400, 2147483648
    %v2410 = vmul.f32 %v2409, 1.442695
    %v2411 = vpow.pop %v2410
    %v2412 = vadd.f32 %v2411, 1.0
    %v2413 = vrcp.pop %v2412
    %v2414 = vmul.f32 1.0, %v2413
    %v2415 = vtanh.pop %v2401
    %v2416 = vxor.u32 %v2402, 2147483648
    %v2417 = vmul.f32 %v2416, 1.442695
    %v2418 = vpow.pop %v2417
    %v2419 = vadd.f32 %v2418, 1.0
    %v2420 = vrcp.pop %v2419
    %v2421 = vmul.f32 1.0, %v2420
    %v2422 = vmul.f32 %v2414, %v2194
    %v2423 = vmul.f32 %v2408, %v2415
    %v2424 = vadd.f32 %v2422, %v2423
    %v2425 = vtanh.pop %v2424
    %v2426 = vmul.f32 %v2421, %v2425
    %2427 = vst [vmem:[#allocation3 + $0x8] sm:$0xff] %v2426
    %v2428 = vld [vmem:[#allocation2 + $0xa0] sm:$0xff]
    %v2429 = vld [vmem:[#allocation2 + $0xa8] sm:$0xff]
    %v2430 = vld [vmem:[#allocation2 + $0xb0] sm:$0xff]
    %v2431 = vld [vmem:[#allocation2 + $0xb8] sm:$0xff]
    %v2432 = vadd.f32 %v2428, %v2270
    %v2433 = vadd.f32 %v2429, %v2272
    %v2434 = vadd.f32 %v2430, %v2311
    %v2435 = vadd.f32 %v2431, %v2313
    %v2436 = vxor.u32 %v2432, 2147483648
    %v2437 = vmul.f32 %v2436, 1.442695
    %v2438 = vpow.pop %v2437
    %v2439 = vadd.f32 %v2438, 1.0
    %v2440 = vrcp.pop %v2439
    %v2441 = vmul.f32 1.0, %v2440
    %v2442 = vxor.u32 %v2433, 2147483648
    %v2443 = vmul.f32 %v2442, 1.442695
    %v2444 = vpow.pop %v2443
    %v2445 = vadd.f32 %v2444, 1.0
    %v2446 = vrcp.pop %v2445
    %v2447 = vmul.f32 1.0, %v2446
    %v2448 = vtanh.pop %v2434
    %v2449 = vxor.u32 %v2435, 2147483648
    %v2450 = vmul.f32 %v2449, 1.442695
    %v2451 = vpow.pop %v2450
    %v2452 = vadd.f32 %v2451, 1.0
    %v2453 = vrcp.pop %v2452
    %v2454 = vmul.f32 1.0, %v2453
    %v2455 = vmul.f32 %v2447, %v2227
    %v2456 = vmul.f32 %v2441, %v2448
    %v2457 = vadd.f32 %v2455, %v2456
    %v2458 = vtanh.pop %v2457
    %v2459 = vmul.f32 %v2454, %v2458
    %2460 = vst [vmem:[#allocation3] sm:$0xff] %v2459
    %v2461 = vld [vmem:[#allocation3] sm:$0xff]
    %v2462 = vld [vmem:[#allocation3 + $0x8] sm:$0xff]
    %v2463 = vpack.c.bf16 %v2461, %v2461
    %v2464 = vpack.c.bf16 %v2462, %v2462
    %2465 = vmatprep.subr.bf16.mxu0 %v1060
    %2466 = vmatpush1.bf16.msra.mxu0 %v1059
    %2467 = vmatprep.subr.bf16.mxu0 %v1068
    %2468 = vmatpush1.bf16.msra.mxu0 %v1067
    %2469 = vmatprep.subr.bf16.mxu0 %v1076
    %2470 = vmatpush1.bf16.msra.mxu0 %v1075
    %2471 = vmatprep.subr.bf16.mxu0 %v1084
    %2472 = vmatpush1.bf16.msra.mxu0 %v1083
    %2473 = vmatprep.subr.bf16.mxu0 %v1092
    %2474 = vmatpush1.bf16.msra.mxu0 %v1091
    %2475 = vmatprep.subr.bf16.mxu0 %v1100
    %2476 = vmatpush1.bf16.msra.mxu0 %v1099
    %2477 = vmatprep.subr.bf16.mxu0 %v1108
    %2478 = vmatpush1.bf16.msra.mxu0 %v1107
    %2479 = vmatprep.subr.bf16.mxu0 %v1116
    %2480 = vmatpush1.bf16.msra.mxu0 %v1115
    %2481 = vmatprep.subr.bf16.mxu0 %v1124
    %2482 = vmatpush1.bf16.msra.mxu0 %v1123
    %2483 = vmatprep.subr.bf16.mxu0 %v1132
    %2484 = vmatpush1.bf16.msra.mxu0 %v1131
    %2485 = vmatprep.subr.bf16.mxu0 %v1140
    %2486 = vmatpush1.bf16.msra.mxu0 %v1139
    %2487 = vmatprep.subr.bf16.mxu0 %v1148
    %2488 = vmatpush1.bf16.msra.mxu0 %v1147
    %2489 = vmatprep.subr.bf16.mxu0 %v1156
    %2490 = vmatpush1.bf16.msra.mxu0 %v1155
    %2491 = vmatprep.subr.bf16.mxu0 %v1164
    %2492 = vmatpush1.bf16.msra.mxu0 %v1163
    %2493 = vmatprep.subr.bf16.mxu0 %v1172
    %2494 = vmatpush1.bf16.msra.mxu0 %v1171
    %2495 = vmatprep.subr.bf16.mxu0 %v1180
    %2496 = vmatpush1.bf16.msra.mxu0 %v1179
    %2497 = vmatprep.mubr.bf16.mxu0 %v2464
    %2498 = vmatmul.mubr.bf16.gmra.mrb[0].mxu0 %v2463
    %v2499 = vpop.f32.mrb[0].mxu0
    %v2500 = vadd.f32 0.0, %v2499
    %v2501 = vpop.f32.mrb[0].mxu0
    %v2502 = vadd.f32 0.0, %v2501
    %v2503 = vpop.f32.mrb[0].mxu0
    %v2504 = vpop.f32.mrb[0].mxu0
    %2505 = vdwg.mxu0
    %2506 = vmatprep.subr.bf16.mxu0 %v1062
    %2507 = vmatpush1.bf16.msra.mxu0 %v1061
    %2508 = vmatprep.subr.bf16.mxu0 %v1070
    %2509 = vmatpush1.bf16.msra.mxu0 %v1069
    %2510 = vmatprep.subr.bf16.mxu0 %v1078
    %2511 = vmatpush1.bf16.msra.mxu0 %v1077
    %2512 = vmatprep.subr.bf16.mxu0 %v1086
    %2513 = vmatpush1.bf16.msra.mxu0 %v1085
    %2514 = vmatprep.subr.bf16.mxu0 %v1094
    %2515 = vmatpush1.bf16.msra.mxu0 %v1093
    %2516 = vmatprep.subr.bf16.mxu0 %v1102
    %2517 = vmatpush1.bf16.msra.mxu0 %v1101
    %2518 = vmatprep.subr.bf16.mxu0 %v1110
    %2519 = vmatpush1.bf16.msra.mxu0 %v1109
    %2520 = vmatprep.subr.bf16.mxu0 %v1118
    %2521 = vmatpush1.bf16.msra.mxu0 %v1117
    %2522 = vmatprep.subr.bf16.mxu0 %v1126
    %2523 = vmatpush1.bf16.msra.mxu0 %v1125
    %2524 = vmatprep.subr.bf16.mxu0 %v1134
    %2525 = vmatpush1.bf16.msra.mxu0 %v1133
    %2526 = vmatprep.subr.bf16.mxu0 %v1142
    %2527 = vmatpush1.bf16.msra.mxu0 %v1141
    %2528 = vmatprep.subr.bf16.mxu0 %v1150
    %2529 = vmatpush1.bf16.msra.mxu0 %v1149
    %2530 = vmatprep.subr.bf16.mxu0 %v1158
    %2531 = vmatpush1.bf16.msra.mxu0 %v1157
    %2532 = vmatprep.subr.bf16.mxu0 %v1166
    %2533 = vmatpush1.bf16.msra.mxu0 %v1165
    %2534 = vmatprep.subr.bf16.mxu0 %v1174
    %2535 = vmatpush1.bf16.msra.mxu0 %v1173
    %2536 = vmatprep.subr.bf16.mxu0 %v1182
    %2537 = vmatpush1.bf16.msra.mxu0 %v1181
    %2538 = vmatprep.mubr.bf16.mxu0 %v2464
    %2539 = vmatmul.mubr.bf16.gmra.mrb[0].mxu0 %v2463
    %v2540 = vpop.f32.mrb[0].mxu0
    %v2541 = vadd.f32 0.0, %v2540
    %v2542 = vpop.f32.mrb[0].mxu0
    %v2543 = vadd.f32 0.0, %v2542
    %v2544 = vpop.f32.mrb[0].mxu0
    %v2545 = vpop.f32.mrb[0].mxu0
    %2546 = vdwg.mxu0
    %2547 = vmatprep.subr.bf16.mxu0 %v1064
    %2548 = vmatpush1.bf16.msra.mxu0 %v1063
    %2549 = vmatprep.subr.bf16.mxu0 %v1072
    %2550 = vmatpush1.bf16.msra.mxu0 %v1071
    %2551 = vmatprep.subr.bf16.mxu0 %v1080
    %2552 = vmatpush1.bf16.msra.mxu0 %v1079
    %2553 = vmatprep.subr.bf16.mxu0 %v1088
    %2554 = vmatpush1.bf16.msra.mxu0 %v1087
    %2555 = vmatprep.subr.bf16.mxu0 %v1096
    %2556 = vmatpush1.bf16.msra.mxu0 %v1095
    %2557 = vmatprep.subr.bf16.mxu0 %v1104
    %2558 = vmatpush1.bf16.msra.mxu0 %v1103
    %2559 = vmatprep.subr.bf16.mxu0 %v1112
    %2560 = vmatpush1.bf16.msra.mxu0 %v1111
    %2561 = vmatprep.subr.bf16.mxu0 %v1120
    %2562 = vmatpush1.bf16.msra.mxu0 %v1119
    %2563 = vmatprep.subr.bf16.mxu0 %v1128
    %2564 = vmatpush1.bf16.msra.mxu0 %v1127
    %2565 = vmatprep.subr.bf16.mxu0 %v1136
    %2566 = vmatpush1.bf16.msra.mxu0 %v1135
    %2567 = vmatprep.subr.bf16.mxu0 %v1144
    %2568 = vmatpush1.bf16.msra.mxu0 %v1143
    %2569 = vmatprep.subr.bf16.mxu0 %v1152
    %2570 = vmatpush1.bf16.msra.mxu0 %v1151
    %2571 = vmatprep.subr.bf16.mxu0 %v1160
    %2572 = vmatpush1.bf16.msra.mxu0 %v1159
    %2573 = vmatprep.subr.bf16.mxu0 %v1168
    %2574 = vmatpush1.bf16.msra.mxu0 %v1167
    %2575 = vmatprep.subr.bf16.mxu0 %v1176
    %2576 = vmatpush1.bf16.msra.mxu0 %v1175
    %2577 = vmatprep.subr.bf16.mxu0 %v1184
    %2578 = vmatpush1.bf16.msra.mxu0 %v1183
    %2579 = vmatprep.mubr.bf16.mxu0 %v2464
    %2580 = vmatmul.mubr.bf16.gmra.mrb[0].mxu0 %v2463
    %v2581 = vpop.f32.mrb[0].mxu0
    %v2582 = vadd.f32 0.0, %v2581
    %v2583 = vpop.f32.mrb[0].mxu0
    %v2584 = vadd.f32 0.0, %v2583
    %v2585 = vpop.f32.mrb[0].mxu0
    %v2586 = vpop.f32.mrb[0].mxu0
    %2587 = vdwg.mxu0
    %2588 = vmatprep.subr.bf16.mxu0 %v1066
    %2589 = vmatpush1.bf16.msra.mxu0 %v1065
    %2590 = vmatprep.subr.bf16.mxu0 %v1074
    %2591 = vmatpush1.bf16.msra.mxu0 %v1073
    %2592 = vmatprep.subr.bf16.mxu0 %v1082
    %2593 = vmatpush1.bf16.msra.mxu0 %v1081
    %2594 = vmatprep.subr.bf16.mxu0 %v1090
    %2595 = vmatpush1.bf16.msra.mxu0 %v1089
    %2596 = vmatprep.subr.bf16.mxu0 %v1098
    %2597 = vmatpush1.bf16.msra.mxu0 %v1097
    %2598 = vmatprep.subr.bf16.mxu0 %v1106
    %2599 = vmatpush1.bf16.msra.mxu0 %v1105
    %2600 = vmatprep.subr.bf16.mxu0 %v1114
    %2601 = vmatpush1.bf16.msra.mxu0 %v1113
    %2602 = vmatprep.subr.bf16.mxu0 %v1122
    %2603 = vmatpush1.bf16.msra.mxu0 %v1121
    %2604 = vmatprep.subr.bf16.mxu0 %v1130
    %2605 = vmatpush1.bf16.msra.mxu0 %v1129
    %2606 = vmatprep.subr.bf16.mxu0 %v1138
    %2607 = vmatpush1.bf16.msra.mxu0 %v1137
    %2608 = vmatprep.subr.bf16.mxu0 %v1146
    %2609 = vmatpush1.bf16.msra.mxu0 %v1145
    %2610 = vmatprep.subr.bf16.mxu0 %v1154
    %2611 = vmatpush1.bf16.msra.mxu0 %v1153
    %2612 = vmatprep.subr.bf16.mxu0 %v1162
    %2613 = vmatpush1.bf16.msra.mxu0 %v1161
    %2614 = vmatprep.subr.bf16.mxu0 %v1170
    %2615 = vmatpush1.bf16.msra.mxu0 %v1169
    %2616 = vmatprep.subr.bf16.mxu0 %v1178
    %2617 = vmatpush1.bf16.msra.mxu0 %v1177
    %2618 = vmatprep.subr.bf16.mxu0 %v1186
    %2619 = vmatpush1.bf16.msra.mxu0 %v1185
    %2620 = vmatprep.mubr.bf16.mxu0 %v2464
    %2621 = vmatmul.mubr.bf16.gmra.mrb[0].mxu0 %v2463
    %v2622 = vpop.f32.mrb[0].mxu0
    %v2623 = vadd.f32 0.0, %v2622
    %v2624 = vpop.f32.mrb[0].mxu0
    %v2625 = vadd.f32 0.0, %v2624
    %v2626 = vpop.f32.mrb[0].mxu0
    %v2627 = vpop.f32.mrb[0].mxu0
    %2628 = vdwg.mxu0
    %v2629 = vadd.f32 %v2582, %v624
    %v2630 = vadd.f32 %v2584, %v628
    %v2631 = vadd.f32 %v2623, %v632
    %v2632 = vadd.f32 %v2625, %v636
    %v2633 = vxor.u32 %v2629, 2147483648
    %v2634 = vmul.f32 %v2633, 1.442695
    %v2635 = vpow.pop %v2634
    %v2636 = vadd.f32 %v2635, 1.0
    %v2637 = vrcp.pop %v2636
    %v2638 = vmul.f32 1.0, %v2637
    %v2639 = vxor.u32 %v2630, 2147483648
    %v2640 = vmul.f32 %v2639, 1.442695
    %v2641 = vpow.pop %v2640
    %v2642 = vadd.f32 %v2641, 1.0
    %v2643 = vrcp.pop %v2642
    %v2644 = vmul.f32 1.0, %v2643
    %v2645 = vtanh.pop %v2631
    %v2646 = vxor.u32 %v2632, 2147483648
    %v2647 = vmul.f32 %v2646, 1.442695
    %v2648 = vpow.pop %v2647
    %v2649 = vadd.f32 %v2648, 1.0
    %v2650 = vrcp.pop %v2649
    %v2651 = vmul.f32 1.0, %v2650
    %v2652 = vmul.f32 %v2644, %v2424
    %v2653 = vmul.f32 %v2638, %v2645
    %v2654 = vadd.f32 %v2652, %v2653
    %v2655 = vtanh.pop %v2654
    %v2656 = vmul.f32 %v2651, %v2655
    %2657 = vst [vmem:[#allocation3 + $0x8] sm:$0xff] %v2656
    %v2658 = vld [vmem:[#allocation2 + $0xc0] sm:$0xff]
    %v2659 = vld [vmem:[#allocation2 + $0xc8] sm:$0xff]
    %v2660 = vld [vmem:[#allocation2 + $0xd0] sm:$0xff]
    %v2661 = vld [vmem:[#allocation2 + $0xd8] sm:$0xff]
    %v2662 = vadd.f32 %v2658, %v2500
    %v2663 = vadd.f32 %v2659, %v2502
    %v2664 = vadd.f32 %v2660, %v2541
    %v2665 = vadd.f32 %v2661, %v2543
    %v2666 = vxor.u32 %v2662, 2147483648
    %v2667 = vmul.f32 %v2666, 1.442695
    %v2668 = vpow.pop %v2667
    %v2669 = vadd.f32 %v2668, 1.0
    %v2670 = vrcp.pop %v2669
    %v2671 = vmul.f32 1.0, %v2670
    %v2672 = vxor.u32 %v2663, 2147483648
    %v2673 = vmul.f32 %v2672, 1.442695
    %v2674 = vpow.pop %v2673
    %v2675 = vadd.f32 %v2674, 1.0
    %v2676 = vrcp.pop %v2675
    %v2677 = vmul.f32 1.0, %v2676
    %v2678 = vtanh.pop %v2664
    %v2679 = vxor.u32 %v2665, 2147483648
    %v2680 = vmul.f32 %v2679, 1.442695
    %v2681 = vpow.pop %v2680
    %v2682 = vadd.f32 %v2681, 1.0
    %v2683 = vrcp.pop %v2682
    %v2684 = vmul.f32 1.0, %v2683
    %v2685 = vmul.f32 %v2677, %v2457
    %v2686 = vmul.f32 %v2671, %v2678
    %v2687 = vadd.f32 %v2685, %v2686
    %v2688 = vtanh.pop %v2687
    %v2689 = vmul.f32 %v2684, %v2688
    %2690 = vst [vmem:[#allocation3] sm:$0xff] %v2689
    %v2691 = vld [vmem:[#allocation3] sm:$0xff]
    %v2692 = vld [vmem:[#allocation3 + $0x8] sm:$0xff]
    %v2693 = vpack.c.bf16 %v2691, %v2691
    %v2694 = vpack.c.bf16 %v2692, %v2692
    %2695 = vmatprep.subr.bf16.mxu0 %v1060
    %2696 = vmatpush1.bf16.msra.mxu0 %v1059
    %2697 = vmatprep.subr.bf16.mxu0 %v1068
    %2698 = vmatpush1.bf16.msra.mxu0 %v1067
    %2699 = vmatprep.subr.bf16.mxu0 %v1076
    %2700 = vmatpush1.bf16.msra.mxu0 %v1075
    %2701 = vmatprep.subr.bf16.mxu0 %v1084
    %2702 = vmatpush1.bf16.msra.mxu0 %v1083
    %2703 = vmatprep.subr.bf16.mxu0 %v1092
    %2704 = vmatpush1.bf16.msra.mxu0 %v1091
    %2705 = vmatprep.subr.bf16.mxu0 %v1100
    %2706 = vmatpush1.bf16.msra.mxu0 %v1099
    %2707 = vmatprep.subr.bf16.mxu0 %v1108
    %2708 = vmatpush1.bf16.msra.mxu0 %v1107
    %2709 = vmatprep.subr.bf16.mxu0 %v1116
    %2710 = vmatpush1.bf16.msra.mxu0 %v1115
    %2711 = vmatprep.subr.bf16.mxu0 %v1124
    %2712 = vmatpush1.bf16.msra.mxu0 %v1123
    %2713 = vmatprep.subr.bf16.mxu0 %v1132
    %2714 = vmatpush1.bf16.msra.mxu0 %v1131
    %2715 = vmatprep.subr.bf16.mxu0 %v1140
    %2716 = vmatpush1.bf16.msra.mxu0 %v1139
    %2717 = vmatprep.subr.bf16.mxu0 %v1148
    %2718 = vmatpush1.bf16.msra.mxu0 %v1147
    %2719 = vmatprep.subr.bf16.mxu0 %v1156
    %2720 = vmatpush1.bf16.msra.mxu0 %v1155
    %2721 = vmatprep.subr.bf16.mxu0 %v1164
    %2722 = vmatpush1.bf16.msra.mxu0 %v1163
    %2723 = vmatprep.subr.bf16.mxu0 %v1172
    %2724 = vmatpush1.bf16.msra.mxu0 %v1171
    %2725 = vmatprep.subr.bf16.mxu0 %v1180
    %2726 = vmatpush1.bf16.msra.mxu0 %v1179
    %2727 = vmatprep.mubr.bf16.mxu0 %v2694
    %2728 = vmatmul.mubr.bf16.gmra.mrb[0].mxu0 %v2693
    %v2729 = vpop.f32.mrb[0].mxu0
    %v2730 = vadd.f32 0.0, %v2729
    %v2731 = vpop.f32.mrb[0].mxu0
    %v2732 = vadd.f32 0.0, %v2731
    %v2733 = vpop.f32.mrb[0].mxu0
    %v2734 = vpop.f32.mrb[0].mxu0
    %2735 = vdwg.mxu0
    %2736 = vmatprep.subr.bf16.mxu0 %v1062
    %2737 = vmatpush1.bf16.msra.mxu0 %v1061
    %2738 = vmatprep.subr.bf16.mxu0 %v1070
    %2739 = vmatpush1.bf16.msra.mxu0 %v1069
    %2740 = vmatprep.subr.bf16.mxu0 %v1078
    %2741 = vmatpush1.bf16.msra.mxu0 %v1077
    %2742 = vmatprep.subr.bf16.mxu0 %v1086
    %2743 = vmatpush1.bf16.msra.mxu0 %v1085
    %2744 = vmatprep.subr.bf16.mxu0 %v1094
    %2745 = vmatpush1.bf16.msra.mxu0 %v1093
    %2746 = vmatprep.subr.bf16.mxu0 %v1102
    %2747 = vmatpush1.bf16.msra.mxu0 %v1101
    %2748 = vmatprep.subr.bf16.mxu0 %v1110
    %2749 = vmatpush1.bf16.msra.mxu0 %v1109
    %2750 = vmatprep.subr.bf16.mxu0 %v1118
    %2751 = vmatpush1.bf16.msra.mxu0 %v1117
    %2752 = vmatprep.subr.bf16.mxu0 %v1126
    %2753 = vmatpush1.bf16.msra.mxu0 %v1125
    %2754 = vmatprep.subr.bf16.mxu0 %v1134
    %2755 = vmatpush1.bf16.msra.mxu0 %v1133
    %2756 = vmatprep.subr.bf16.mxu0 %v1142
    %2757 = vmatpush1.bf16.msra.mxu0 %v1141
    %2758 = vmatprep.subr.bf16.mxu0 %v1150
    %2759 = vmatpush1.bf16.msra.mxu0 %v1149
    %2760 = vmatprep.subr.bf16.mxu0 %v1158
    %2761 = vmatpush1.bf16.msra.mxu0 %v1157
    %2762 = vmatprep.subr.bf16.mxu0 %v1166
    %2763 = vmatpush1.bf16.msra.mxu0 %v1165
    %2764 = vmatprep.subr.bf16.mxu0 %v1174
    %2765 = vmatpush1.bf16.msra.mxu0 %v1173
    %2766 = vmatprep.subr.bf16.mxu0 %v1182
    %2767 = vmatpush1.bf16.msra.mxu0 %v1181
    %2768 = vmatprep.mubr.bf16.mxu0 %v2694
    %2769 = vmatmul.mubr.bf16.gmra.mrb[0].mxu0 %v2693
    %v2770 = vpop.f32.mrb[0].mxu0
    %v2771 = vadd.f32 0.0, %v2770
    %v2772 = vpop.f32.mrb[0].mxu0
    %v2773 = vadd.f32 0.0, %v2772
    %v2774 = vpop.f32.mrb[0].mxu0
    %v2775 = vpop.f32.mrb[0].mxu0
    %2776 = vdwg.mxu0
    %2777 = vmatprep.subr.bf16.mxu0 %v1064
    %2778 = vmatpush1.bf16.msra.mxu0 %v1063
    %2779 = vmatprep.subr.bf16.mxu0 %v1072
    %2780 = vmatpush1.bf16.msra.mxu0 %v1071
    %2781 = vmatprep.subr.bf16.mxu0 %v1080
    %2782 = vmatpush1.bf16.msra.mxu0 %v1079
    %2783 = vmatprep.subr.bf16.mxu0 %v1088
    %2784 = vmatpush1.bf16.msra.mxu0 %v1087
    %2785 = vmatprep.subr.bf16.mxu0 %v1096
    %2786 = vmatpush1.bf16.msra.mxu0 %v1095
    %2787 = vmatprep.subr.bf16.mxu0 %v1104
    %2788 = vmatpush1.bf16.msra.mxu0 %v1103
    %2789 = vmatprep.subr.bf16.mxu0 %v1112
    %2790 = vmatpush1.bf16.msra.mxu0 %v1111
    %2791 = vmatprep.subr.bf16.mxu0 %v1120
    %2792 = vmatpush1.bf16.msra.mxu0 %v1119
    %2793 = vmatprep.subr.bf16.mxu0 %v1128
    %2794 = vmatpush1.bf16.msra.mxu0 %v1127
    %2795 = vmatprep.subr.bf16.mxu0 %v1136
    %2796 = vmatpush1.bf16.msra.mxu0 %v1135
    %2797 = vmatprep.subr.bf16.mxu0 %v1144
    %2798 = vmatpush1.bf16.msra.mxu0 %v1143
    %2799 = vmatprep.subr.bf16.mxu0 %v1152
    %2800 = vmatpush1.bf16.msra.mxu0 %v1151
    %2801 = vmatprep.subr.bf16.mxu0 %v1160
    %2802 = vmatpush1.bf16.msra.mxu0 %v1159
    %2803 = vmatprep.subr.bf16.mxu0 %v1168
    %2804 = vmatpush1.bf16.msra.mxu0 %v1167
    %2805 = vmatprep.subr.bf16.mxu0 %v1176
    %2806 = vmatpush1.bf16.msra.mxu0 %v1175
    %2807 = vmatprep.subr.bf16.mxu0 %v1184
    %2808 = vmatpush1.bf16.msra.mxu0 %v1183
    %2809 = vmatprep.mubr.bf16.mxu0 %v2694
    %2810 = vmatmul.mubr.bf16.gmra.mrb[0].mxu0 %v2693
    %v2811 = vpop.f32.mrb[0].mxu0
    %v2812 = vadd.f32 0.0, %v2811
    %v2813 = vpop.f32.mrb[0].mxu0
    %v2814 = vadd.f32 0.0, %v2813
    %v2815 = vpop.f32.mrb[0].mxu0
    %v2816 = vpop.f32.mrb[0].mxu0
    %2817 = vdwg.mxu0
    %2818 = vmatprep.subr.bf16.mxu0 %v1066
    %2819 = vmatpush1.bf16.msra.mxu0 %v1065
    %2820 = vmatprep.subr.bf16.mxu0 %v1074
    %2821 = vmatpush1.bf16.msra.mxu0 %v1073
    %2822 = vmatprep.subr.bf16.mxu0 %v1082
    %2823 = vmatpush1.bf16.msra.mxu0 %v1081
    %2824 = vmatprep.subr.bf16.mxu0 %v1090
    %2825 = vmatpush1.bf16.msra.mxu0 %v1089
    %2826 = vmatprep.subr.bf16.mxu0 %v1098
    %2827 = vmatpush1.bf16.msra.mxu0 %v1097
    %2828 = vmatprep.subr.bf16.mxu0 %v1106
    %2829 = vmatpush1.bf16.msra.mxu0 %v1105
    %2830 = vmatprep.subr.bf16.mxu0 %v1114
    %2831 = vmatpush1.bf16.msra.mxu0 %v1113
    %2832 = vmatprep.subr.bf16.mxu0 %v1122
    %2833 = vmatpush1.bf16.msra.mxu0 %v1121
    %2834 = vmatprep.subr.bf16.mxu0 %v1130
    %2835 = vmatpush1.bf16.msra.mxu0 %v1129
    %2836 = vmatprep.subr.bf16.mxu0 %v1138
    %2837 = vmatpush1.bf16.msra.mxu0 %v1137
    %2838 = vmatprep.subr.bf16.mxu0 %v1146
    %2839 = vmatpush1.bf16.msra.mxu0 %v1145
    %2840 = vmatprep.subr.bf16.mxu0 %v1154
    %2841 = vmatpush1.bf16.msra.mxu0 %v1153
    %2842 = vmatprep.subr.bf16.mxu0 %v1162
    %2843 = vmatpush1.bf16.msra.mxu0 %v1161
    %2844 = vmatprep.subr.bf16.mxu0 %v1170
    %2845 = vmatpush1.bf16.msra.mxu0 %v1169
    %2846 = vmatprep.subr.bf16.mxu0 %v1178
    %2847 = vmatpush1.bf16.msra.mxu0 %v1177
    %2848 = vmatprep.subr.bf16.mxu0 %v1186
    %2849 = vmatpush1.bf16.msra.mxu0 %v1185
    %2850 = vmatprep.mubr.bf16.mxu0 %v2694
    %2851 = vmatmul.mubr.bf16.gmra.mrb[0].mxu0 %v2693
    %v2852 = vpop.f32.mrb[0].mxu0
    %v2853 = vadd.f32 0.0, %v2852
    %v2854 = vpop.f32.mrb[0].mxu0
    %v2855 = vadd.f32 0.0, %v2854
    %v2856 = vpop.f32.mrb[0].mxu0
    %v2857 = vpop.f32.mrb[0].mxu0
    %2858 = vdwg.mxu0
    %v2859 = vadd.f32 %v2812, %v624
    %v2860 = vadd.f32 %v2814, %v628
    %v2861 = vadd.f32 %v2853, %v632
    %v2862 = vadd.f32 %v2855, %v636
    %v2863 = vxor.u32 %v2859, 2147483648
    %v2864 = vmul.f32 %v2863, 1.442695
    %v2865 = vpow.pop %v2864
    %v2866 = vadd.f32 %v2865, 1.0
    %v2867 = vrcp.pop %v2866
    %v2868 = vmul.f32 1.0, %v2867
    %v2869 = vxor.u32 %v2860, 2147483648
    %v2870 = vmul.f32 %v2869, 1.442695
    %v2871 = vpow.pop %v2870
    %v2872 = vadd.f32 %v2871, 1.0
    %v2873 = vrcp.pop %v2872
    %v2874 = vmul.f32 1.0, %v2873
    %v2875 = vtanh.pop %v2861
    %v2876 = vxor.u32 %v2862, 2147483648
    %v2877 = vmul.f32 %v2876, 1.442695
    %v2878 = vpow.pop %v2877
    %v2879 = vadd.f32 %v2878, 1.0
    %v2880 = vrcp.pop %v2879
    %v2881 = vmul.f32 1.0, %v2880
    %v2882 = vmul.f32 %v2874, %v2654
    %v2883 = vmul.f32 %v2868, %v2875
    %v2884 = vadd.f32 %v2882, %v2883
    %v2885 = vtanh.pop %v2884
    %v2886 = vmul.f32 %v2881, %v2885
    %2887 = vst [vmem:[#allocation3 + $0x8] sm:$0xff] %v2886
    %v2888 = vld [vmem:[#allocation2 + $0xe0] sm:$0xff]
    %v2889 = vld [vmem:[#allocation2 + $0xe8] sm:$0xff]
    %v2890 = vld [vmem:[#allocation2 + $0xf0] sm:$0xff]
    %v2891 = vld [vmem:[#allocation2 + $0xf8] sm:$0xff]
    %v2892 = vadd.f32 %v2888, %v2730
    %v2893 = vadd.f32 %v2889, %v2732
    %v2894 = vadd.f32 %v2890, %v2771
    %v2895 = vadd.f32 %v2891, %v2773
    %v2896 = vxor.u32 %v2892, 2147483648
    %v2897 = vmul.f32 %v2896, 1.442695
    %v2898 = vpow.pop %v2897
    %v2899 = vadd.f32 %v2898, 1.0
    %v2900 = vrcp.pop %v2899
    %v2901 = vmul.f32 1.0, %v2900
    %v2902 = vxor.u32 %v2893, 2147483648
    %v2903 = vmul.f32 %v2902, 1.442695
    %v2904 = vpow.pop %v2903
    %v2905 = vadd.f32 %v2904, 1.0
    %v2906 = vrcp.pop %v2905
    %v2907 = vmul.f32 1.0, %v2906
    %v2908 = vtanh.pop %v2894
    %v2909 = vxor.u32 %v2895, 2147483648
    %v2910 = vmul.f32 %v2909, 1.442695
    %v2911 = vpow.pop %v2910
    %v2912 = vadd.f32 %v2911, 1.0
    %v2913 = vrcp.pop %v2912
    %v2914 = vmul.f32 1.0, %v2913
    %v2915 = vmul.f32 %v2907, %v2687
    %v2916 = vmul.f32 %v2901, %v2908
    %v2917 = vadd.f32 %v2915, %v2916
    %v2918 = vtanh.pop %v2917
    %v2919 = vmul.f32 %v2914, %v2918
    %2920 = vst [vmem:[#allocation3] sm:$0xff] %v2919
    %v2921 = vld [vmem:[#allocation3] sm:$0xff]
    %v2922 = vld [vmem:[#allocation3 + $0x8] sm:$0xff]
    %v2923 = vpack.c.bf16 %v2921, %v2921
    %v2924 = vpack.c.bf16 %v2922, %v2922
    %2925 = vmatprep.subr.bf16.mxu0 %v1064
    %2926 = vmatpush1.bf16.msra.mxu0 %v1063
    %2927 = vmatprep.subr.bf16.mxu0 %v1072
    %2928 = vmatpush1.bf16.msra.mxu0 %v1071
    %2929 = vmatprep.subr.bf16.mxu0 %v1080
    %2930 = vmatpush1.bf16.msra.mxu0 %v1079
    %2931 = vmatprep.subr.bf16.mxu0 %v1088
    %2932 = vmatpush1.bf16.msra.mxu0 %v1087
    %2933 = vmatprep.subr.bf16.mxu0 %v1096
    %2934 = vmatpush1.bf16.msra.mxu0 %v1095
    %2935 = vmatprep.subr.bf16.mxu0 %v1104
    %2936 = vmatpush1.bf16.msra.mxu0 %v1103
    %2937 = vmatprep.subr.bf16.mxu0 %v1112
    %2938 = vmatpush1.bf16.msra.mxu0 %v1111
    %2939 = vmatprep.subr.bf16.mxu0 %v1120
    %2940 = vmatpush1.bf16.msra.mxu0 %v1119
    %2941 = vmatprep.subr.bf16.mxu0 %v1128
    %2942 = vmatpush1.bf16.msra.mxu0 %v1127
    %2943 = vmatprep.subr.bf16.mxu0 %v1136
    %2944 = vmatpush1.bf16.msra.mxu0 %v1135
    %2945 = vmatprep.subr.bf16.mxu0 %v1144
    %2946 = vmatpush1.bf16.msra.mxu0 %v1143
    %2947 = vmatprep.subr.bf16.mxu0 %v1152
    %2948 = vmatpush1.bf16.msra.mxu0 %v1151
    %2949 = vmatprep.subr.bf16.mxu0 %v1160
    %2950 = vmatpush1.bf16.msra.mxu0 %v1159
    %2951 = vmatprep.subr.bf16.mxu0 %v1168
    %2952 = vmatpush1.bf16.msra.mxu0 %v1167
    %2953 = vmatprep.subr.bf16.mxu0 %v1176
    %2954 = vmatpush1.bf16.msra.mxu0 %v1175
    %2955 = vmatprep.subr.bf16.mxu0 %v1184
    %2956 = vmatpush1.bf16.msra.mxu0 %v1183
    %2957 = vmatprep.mubr.bf16.mxu0 %v2924
    %2958 = vmatmul.mubr.bf16.gmra.mrb[0].mxu0 %v2923
    %v2959 = vpop.f32.mrb[0].mxu0
    %v2960 = vadd.f32 %v624, %v2959
    %v2961 = vpop.f32.mrb[0].mxu0
    %v2962 = vadd.f32 %v628, %v2961
    %v2963 = vpop.f32.mrb[0].mxu0
    %v2964 = vpop.f32.mrb[0].mxu0
    %2965 = vdwg.mxu0
    %2966 = vmatprep.subr.bf16.mxu0 %v1066
    %2967 = vmatpush1.bf16.msra.mxu0 %v1065
    %2968 = vmatprep.subr.bf16.mxu0 %v1074
    %2969 = vmatpush1.bf16.msra.mxu0 %v1073
    %2970 = vmatprep.subr.bf16.mxu0 %v1082
    %2971 = vmatpush1.bf16.msra.mxu0 %v1081
    %2972 = vmatprep.subr.bf16.mxu0 %v1090
    %2973 = vmatpush1.bf16.msra.mxu0 %v1089
    %2974 = vmatprep.subr.bf16.mxu0 %v1098
    %2975 = vmatpush1.bf16.msra.mxu0 %v1097
    %2976 = vmatprep.subr.bf16.mxu0 %v1106
    %2977 = vmatpush1.bf16.msra.mxu0 %v1105
    %2978 = vmatprep.subr.bf16.mxu0 %v1114
    %2979 = vmatpush1.bf16.msra.mxu0 %v1113
    %2980 = vmatprep.subr.bf16.mxu0 %v1122
    %2981 = vmatpush1.bf16.msra.mxu0 %v1121
    %2982 = vmatprep.subr.bf16.mxu0 %v1130
    %2983 = vmatpush1.bf16.msra.mxu0 %v1129
    %2984 = vmatprep.subr.bf16.mxu0 %v1138
    %2985 = vmatpush1.bf16.msra.mxu0 %v1137
    %2986 = vmatprep.subr.bf16.mxu0 %v1146
    %2987 = vmatpush1.bf16.msra.mxu0 %v1145
    %2988 = vmatprep.subr.bf16.mxu0 %v1154
    %2989 = vmatpush1.bf16.msra.mxu0 %v1153
    %2990 = vmatprep.subr.bf16.mxu0 %v1162
    %2991 = vmatpush1.bf16.msra.mxu0 %v1161
    %2992 = vmatprep.subr.bf16.mxu0 %v1170
    %2993 = vmatpush1.bf16.msra.mxu0 %v1169
    %2994 = vmatprep.subr.bf16.mxu0 %v1178
    %2995 = vmatpush1.bf16.msra.mxu0 %v1177
    %2996 = vmatprep.subr.bf16.mxu0 %v1186
    %2997 = vmatpush1.bf16.msra.mxu0 %v1185
    %2998 = vmatprep.mubr.bf16.mxu0 %v2924
    %2999 = vmatmul.mubr.bf16.gmra.mrb[0].mxu0 %v2923
    %v3000 = vpop.f32.mrb[0].mxu0
    %v3001 = vadd.f32 %v632, %v3000
    %v3002 = vpop.f32.mrb[0].mxu0
    %v3003 = vadd.f32 %v636, %v3002
    %v3004 = vpop.f32.mrb[0].mxu0
    %v3005 = vpop.f32.mrb[0].mxu0
    %3006 = vdwg.mxu0
    %v3007 = vxor.u32 %v2960, 2147483648
    %v3008 = vmul.f32 %v3007, 1.442695
    %v3009 = vpow.pop %v3008
    %v3010 = vadd.f32 %v3009, 1.0
    %v3011 = vrcp.pop %v3010
    %v3012 = vmul.f32 1.0, %v3011
    %v3013 = vxor.u32 %v2962, 2147483648
    %v3014 = vmul.f32 %v3013, 1.442695
    %v3015 = vpow.pop %v3014
    %v3016 = vadd.f32 %v3015, 1.0
    %v3017 = vrcp.pop %v3016
    %v3018 = vmul.f32 1.0, %v3017
    %v3019 = vtanh.pop %v3001
    %v3020 = vxor.u32 %v3003, 2147483648
    %v3021 = vmul.f32 %v3020, 1.442695
    %v3022 = vpow.pop %v3021
    %v3023 = vadd.f32 %v3022, 1.0
    %v3024 = vrcp.pop %v3023
    %v3025 = vmul.f32 1.0, %v3024
    %v3026 = vmul.f32 %v3018, %v2884
    %v3027 = vmul.f32 %v3012, %v3019
    %v3028 = vadd.f32 %v3026, %v3027
    %v3029 = vtanh.pop %v3028
    %v3030 = vmul.f32 %v3025, %v3029
    %v3031 = vld [vmem:[%s5] sm:$0x1]
    %v3033 = vlaneseq
    %v3034 = vshrl.u32 %v3033, 7
    %v3035 = vsub.s32 0, %v3034
    %v3036 = vrot.slane %v3031, %v3035
    %v3038 = vmul.f32 %v3030, %v3036
    %3039 = vadd.xlane.f32.xlu0 %v3038
    %v3040 = vpop.xlane.xlu0 %3039
    %v3041 = vld [vmem:[#allocation4] sm:$0x1]
    %v3043 = vlaneseq
    %v3044 = vshrl.u32 %v3043, 7
    %v3045 = vsub.s32 0, %v3044
    %v3046 = vrot.slane %v3041, %v3045
    %v3048 = vadd.f32 %v3040, %v3046
    %vm3049 = vcmask 7168
    %3050 = vst.msk [vmem:[%s7] sm:$0xff] %vm3049, %v3048
    // Predicated region
    $region34: #{tpu_custom_call.1} parent=1 // pred_check
      _
    $region35: #{tpu_custom_call.1} parent=1 // pred_check_branch
      %3052 = sbr.rel (0) target = $region37
    $region36: #{tpu_custom_call.1} parent=1 // pred_region
      _
    $region37: #{tpu_custom_call.1} parent=1 // pred_fallthru
      _
    // Predicated region
    $region38: #{tpu_custom_call.1} parent=1 // pred_check
      _
    $region39: #{tpu_custom_call.1} parent=1 // pred_check_branch
      %3054 = sbr.rel (0) target = $region41
    $region40: #{tpu_custom_call.1} parent=1 // pred_region
      _
    $region41: #{tpu_custom_call.1} parent=1 // pred_fallthru
      _
    %3055 = vsyncpa [#allocation6], 1

</llo_original>
